<compile_context>
chip_gen: v7x
topology: tpu7x:2x2x1
jax: 0.10.0
libtpu: 0.0.40
codegen_flags: <defaults>
</compile_context>

<pallas_src>
import numpy as np
import jax
import jax.numpy as jnp
from jax.experimental import pallas as pl
from jax.experimental.pallas import tpu as pltpu

EMBED = 4          # embed_dims
SEQ = 64           # sequence length (must be divisible by 2**5 = 32)
N_BLOCKS = 5       # conv_arch = ((1, 128),) * 5
CCH = 128          # conv channels
PAD = 8            # sublane-aligned base row of the padded conv buffer


# ---------------------------------------------------------------------------
# Fused kernel: conv tower + mean + conv_dense + k-mer FC ladder + output.
# One grid step per batch element.
# ---------------------------------------------------------------------------
def expert_kernel(x_ref, k1_ref, k2_ref, k3_ref, k4_ref,
                  wconv_ref, bconv_ref, wd_ref, bd_ref,
                  w4_ref, b4_ref, w3a_ref, w3b_ref, b3_ref,
                  w2a_ref, w2b_ref, b2_ref,
                  woa_ref, wob_ref, woc_ref, bo_ref,
                  out_ref, buf_ref):
    f32 = jnp.float32
    zrow = jnp.zeros((1, CCH), f32)

    # ---- conv tower: 5 x (Conv1d(k=3, pad=1) + ReLU + MaxPool1d(2, 2)) ----
    x = x_ref[0]                                   # (SEQ, CCH); chans >= EMBED are 0
    L = SEQ
    for blk in range(N_BLOCKS):
        # Stage x with zero pad rows at PAD-1 and PAD+L; the +/-1 shifts are
        # then plain offset loads (no selection-matrix matmuls).
        buf_ref[pl.ds(PAD - 1, 1), :] = zrow
        buf_ref[pl.ds(PAD, L), :] = x
        buf_ref[pl.ds(PAD + L, 1), :] = zrow
        x_prev = buf_ref[pl.ds(PAD - 1, L), :]     # x[l-1], 0 at l=0
        x_next = buf_ref[pl.ds(PAD + 1, L), :]     # x[l+1], 0 at l=L-1
        # Three conv taps fused into a single K = 3*CCH matmul.
        x3 = jnp.concatenate([x_prev, x, x_next], axis=-1)        # (L, 3*CCH)
        y = jnp.dot(x3, wconv_ref[blk], preferred_element_type=f32) \
            + bconv_ref[blk]
        y = jnp.maximum(y, 0.0)
        # MaxPool1d(2, 2): pairwise max of even/odd rows via stride-2 loads.
        buf_ref[pl.ds(PAD, L), :] = y
        even = buf_ref[pl.ds(PAD, L // 2, stride=2), :]
        odd = buf_ref[pl.ds(PAD + 1, L // 2, stride=2), :]
        x = jnp.maximum(even, odd)
        L //= 2

    feat = jnp.mean(x, axis=0, keepdims=True)                     # (1, CCH)
    # conv_dense: Dropout (identity in eval) + Linear(128 -> 8)
    conv8 = jnp.dot(feat, wd_ref[...], preferred_element_type=f32) + bd_ref[...]

    # ---- k-mer FC ladder (concats folded into independent split dots) ----
    h4 = jnp.maximum(
        jnp.dot(k4_ref[0], w4_ref[...], preferred_element_type=f32)
        + b4_ref[...], 0.0)
    h3 = jnp.maximum(
        jnp.dot(h4, w3a_ref[...], preferred_element_type=f32)
        + jnp.dot(k3_ref[0], w3b_ref[...], preferred_element_type=f32)
        + b3_ref[...], 0.0)
    h2 = jnp.maximum(
        jnp.dot(h3, w2a_ref[...], preferred_element_type=f32)
        + jnp.dot(k2_ref[0], w2b_ref[...], preferred_element_type=f32)
        + b2_ref[...], 0.0)
    out = (jnp.dot(conv8, woa_ref[...], preferred_element_type=f32)
           + jnp.dot(h2, wob_ref[...], preferred_element_type=f32)
           + jnp.dot(k1_ref[0], woc_ref[...], preferred_element_type=f32)
           + bo_ref[...])
    out_ref[0] = out.astype(out_ref.dtype)


# ---------------------------------------------------------------------------
# Wrapper
# ---------------------------------------------------------------------------
def expert_forward(X, X_features, p):
    B, L, E = X.shape
    assert L == SEQ and E <= CCH
    f32 = jnp.float32

    # ---- tiny host/XLA-side layout prep ----
    Xp = jnp.pad(X.astype(f32), ((0, 0), (0, 0), (0, CCH - E)))   # (B, SEQ, CCH)
    w0p = jnp.pad(p["w0"], ((0, 0), (0, CCH - E), (0, 0)))        # (3, CCH, CCH)
    wconv = jnp.concatenate([w0p[None], p["wrest"]], axis=0)      # (5, 3, CCH, CCH)
    wconv = wconv.reshape(N_BLOCKS, 3 * CCH, CCH)                 # taps stacked on K
    bconv = jnp.concatenate([p["b0"][None], p["brest"]], axis=0)  # (5, 1, CCH)

    k1 = X_features[:, None, 0:4]
    k2 = X_features[:, None, 4:20]
    k3 = X_features[:, None, 20:84]
    k4 = X_features[:, None, 84:340]

    weights = [wconv, bconv, p["wd"], p["bd"],
               p["w4"], p["b4"], p["w3a"], p["w3b"], p["b3"],
               p["w2a"], p["w2b"], p["b2"],
               p["woa"], p["wob"], p["woc"], p["bo"]]

    def full_spec(a):
        zeros = (0,) * a.ndim
        return pl.BlockSpec(a.shape, lambda b: zeros)

    def batch_spec(a):
        tail = (0,) * (a.ndim - 1)
        return pl.BlockSpec((1,) + a.shape[1:], lambda b: (b,) + tail)

    out = pl.pallas_call(
        expert_kernel,
        out_shape=jax.ShapeDtypeStruct((B, 1, 2), f32),
        grid=(B,),
        in_specs=([batch_spec(Xp), batch_spec(k1), batch_spec(k2),
                   batch_spec(k3), batch_spec(k4)]
                  + [full_spec(w) for w in weights]),
        out_specs=pl.BlockSpec((1, 1, 2), lambda b: (b, 0, 0)),
        scratch_shapes=[pltpu.VMEM((PAD + SEQ + 8, CCH), f32)],
        compiler_params=pltpu.CompilerParams(
            dimension_semantics=("parallel",)),
    )(Xp, k1, k2, k3, k4, *weights)
    return out[:, 0, :]


# ---------------------------------------------------------------------------
# Deterministic parameter init (PyTorch-style uniform(-1/sqrt(fan_in), ...)).
# ---------------------------------------------------------------------------
def init_params(key, embed_dims=EMBED):
    keys = iter(jax.random.split(key, 16))

    def uni(k, fan_in, shape):
        bound = 1.0 / np.sqrt(fan_in)
        return jax.random.uniform(k, shape, jnp.float32, -bound, bound)

    p = {}
    # conv block 0: Conv1d(embed_dims -> 128, k=3); stored as (K, Cin, Cout)
    p["w0"] = uni(next(keys), embed_dims * 3, (3, embed_dims, CCH))
    p["b0"] = uni(next(keys), embed_dims * 3, (1, CCH))
    # conv blocks 1..4: Conv1d(128 -> 128, k=3), stacked
    p["wrest"] = uni(next(keys), CCH * 3, (N_BLOCKS - 1, 3, CCH, CCH))
    p["brest"] = uni(next(keys), CCH * 3, (N_BLOCKS - 1, 1, CCH))
    # conv_dense: Linear(128 -> 8)
    p["wd"] = uni(next(keys), CCH, (CCH, 8))
    p["bd"] = uni(next(keys), CCH, (1, 8))
    # kmer4_fc: Linear(256 -> 64)
    p["w4"] = uni(next(keys), 256, (256, 64))
    p["b4"] = uni(next(keys), 256, (1, 64))
    # kmer3_fc: Linear(128 -> 16); split: first 64 rows act on h4, rest on kmer_3
    w3 = uni(next(keys), 128, (128, 16))
    p["w3a"], p["w3b"] = w3[:64], w3[64:]
    p["b3"] = uni(next(keys), 128, (1, 16))
    # kmer2_fc: Linear(32 -> 4)
    w2 = uni(next(keys), 32, (32, 4))
    p["w2a"], p["w2b"] = w2[:16], w2[16:]
    p["b2"] = uni(next(keys), 32, (1, 4))
    # output_layer: Linear(16 -> 2); split over [conv(8) | h2(4) | kmer_1(4)]
    wo = uni(next(keys), 16, (16, 2))
    p["woa"], p["wob"], p["woc"] = wo[:8], wo[8:12], wo[12:16]
    p["bo"] = uni(next(keys), 16, (1, 2))
    return p


# ---------------------------------------------------------------------------
# Pure-JAX reference (same parameter layout) for correctness checking.
# ---------------------------------------------------------------------------
def reference_forward(X, Xf, p):
    def blk(x, wk, b):
        xp = jnp.pad(x, ((0, 0), (1, 1), (0, 0)))
        y = xp[:, :-2] @ wk[0] + xp[:, 1:-1] @ wk[1] + xp[:, 2:] @ wk[2] + b
        y = jnp.maximum(y, 0.0)
        B, L, C = y.shape
        return jnp.max(y.reshape(B, L // 2, 2, C), axis=2)

    x = blk(X, p["w0"], p["b0"])
    for layer in range(N_BLOCKS - 1):
        x = blk(x, p["wrest"][layer], p["brest"][layer])
    feat = jnp.mean(x, axis=1)
    conv_out = feat @ p["wd"] + p["bd"]
    k1, k2, k3, k4 = Xf[:, :4], Xf[:, 4:20], Xf[:, 20:84], Xf[:, 84:340]
    h4 = jax.nn.relu(k4 @ p["w4"] + p["b4"])
    h3 = jax.nn.relu(h4 @ p["w3a"] + k3 @ p["w3b"] + p["b3"])
    h2 = jax.nn.relu(h3 @ p["w2a"] + k2 @ p["w2b"] + p["b2"])
    return conv_out @ p["woa"] + h2 @ p["wob"] + k1 @ p["woc"] + p["bo"]


if __name__ == "__main__":
    key = jax.random.PRNGKey(0)
    kp, kx, kf = jax.random.split(key, 3)
    params = init_params(kp)

    B = 2
    X = jax.random.normal(kx, (B, SEQ, EMBED), jnp.float32)        # (2, 64, 4)
    X_features = jax.random.normal(kf, (B, 340), jnp.float32)      # (2, 340)

    out = expert_forward(X, X_features, params)
    out = jax.block_until_ready(out)
    assert out.shape == (B, 2)

    ref = reference_forward(X, X_features, params)
    np.testing.assert_allclose(np.asarray(out), np.asarray(ref),
                               rtol=1e-2, atol=1e-2)
    print("KERNEL_OK")
</pallas_src>

<mosaic_0001>
module attributes {stable_mosaic.version = 11 : i64} {
  func.func @expert_kernel(%arg0: i32, %arg1: memref<1x64x128xf32, #tpu.memory_space<vmem>>, %arg2: memref<1x1x4xf32, #tpu.memory_space<vmem>>, %arg3: memref<1x1x16xf32, #tpu.memory_space<vmem>>, %arg4: memref<1x1x64xf32, #tpu.memory_space<vmem>>, %arg5: memref<1x1x256xf32, #tpu.memory_space<vmem>>, %arg6: memref<5x384x128xf32, #tpu.memory_space<vmem>>, %arg7: memref<5x1x128xf32, #tpu.memory_space<vmem>>, %arg8: memref<128x8xf32, #tpu.memory_space<vmem>>, %arg9: memref<1x8xf32, #tpu.memory_space<vmem>>, %arg10: memref<256x64xf32, #tpu.memory_space<vmem>>, %arg11: memref<1x64xf32, #tpu.memory_space<vmem>>, %arg12: memref<64x16xf32, #tpu.memory_space<vmem>>, %arg13: memref<64x16xf32, #tpu.memory_space<vmem>>, %arg14: memref<1x16xf32, #tpu.memory_space<vmem>>, %arg15: memref<16x4xf32, #tpu.memory_space<vmem>>, %arg16: memref<16x4xf32, #tpu.memory_space<vmem>>, %arg17: memref<1x4xf32, #tpu.memory_space<vmem>>, %arg18: memref<8x2xf32, #tpu.memory_space<vmem>>, %arg19: memref<4x2xf32, #tpu.memory_space<vmem>>, %arg20: memref<4x2xf32, #tpu.memory_space<vmem>>, %arg21: memref<1x2xf32, #tpu.memory_space<vmem>>, %arg22: memref<1x1x2xf32, #tpu.memory_space<vmem>>, %arg23: memref<80x128xf32, #tpu.memory_space<vmem>>) attributes {dimension_semantics = [#tpu.dimension_semantics<parallel>], iteration_bounds = array<i64: 2>, scalar_prefetch = 0 : i64, scratch_operands = 1 : i64, tpu.core_type = #tpu.core_type<tc>, window_params = [{transform_indices = @transform_0, window_bounds = array<i64: 1, 64, 128>}, {transform_indices = @transform_1, window_bounds = array<i64: 1, 1, 4>}, {transform_indices = @transform_2, window_bounds = array<i64: 1, 1, 16>}, {transform_indices = @transform_3, window_bounds = array<i64: 1, 1, 64>}, {transform_indices = @transform_4, window_bounds = array<i64: 1, 1, 256>}, {pipeline_mode = #tpu.pipeline_mode<synchronous>, transform_indices = @transform_5, window_bounds = array<i64: 5, 384, 128>}, {pipeline_mode = #tpu.pipeline_mode<synchronous>, transform_indices = @transform_6, window_bounds = array<i64: 5, 1, 128>}, {pipeline_mode = #tpu.pipeline_mode<synchronous>, transform_indices = @transform_7, window_bounds = array<i64: 128, 8>}, {pipeline_mode = #tpu.pipeline_mode<synchronous>, transform_indices = @transform_8, window_bounds = array<i64: 1, 8>}, {pipeline_mode = #tpu.pipeline_mode<synchronous>, transform_indices = @transform_9, window_bounds = array<i64: 256, 64>}, {pipeline_mode = #tpu.pipeline_mode<synchronous>, transform_indices = @transform_10, window_bounds = array<i64: 1, 64>}, {pipeline_mode = #tpu.pipeline_mode<synchronous>, transform_indices = @transform_11, window_bounds = array<i64: 64, 16>}, {pipeline_mode = #tpu.pipeline_mode<synchronous>, transform_indices = @transform_12, window_bounds = array<i64: 64, 16>}, {pipeline_mode = #tpu.pipeline_mode<synchronous>, transform_indices = @transform_13, window_bounds = array<i64: 1, 16>}, {pipeline_mode = #tpu.pipeline_mode<synchronous>, transform_indices = @transform_14, window_bounds = array<i64: 16, 4>}, {pipeline_mode = #tpu.pipeline_mode<synchronous>, transform_indices = @transform_15, window_bounds = array<i64: 16, 4>}, {pipeline_mode = #tpu.pipeline_mode<synchronous>, transform_indices = @transform_16, window_bounds = array<i64: 1, 4>}, {pipeline_mode = #tpu.pipeline_mode<synchronous>, transform_indices = @transform_17, window_bounds = array<i64: 8, 2>}, {pipeline_mode = #tpu.pipeline_mode<synchronous>, transform_indices = @transform_18, window_bounds = array<i64: 4, 2>}, {pipeline_mode = #tpu.pipeline_mode<synchronous>, transform_indices = @transform_19, window_bounds = array<i64: 4, 2>}, {pipeline_mode = #tpu.pipeline_mode<synchronous>, transform_indices = @transform_20, window_bounds = array<i64: 1, 2>}, {transform_indices = @transform_21, window_bounds = array<i64: 1, 1, 2>}]} {
    %cst = arith.constant 0.000000e+00 : f32
    %0 = vector.broadcast %cst : f32 to vector<1x128xf32>
    %c0 = arith.constant 0 : index
    %c0_0 = arith.constant 0 : index
    %c0_1 = arith.constant 0 : index
    %1 = vector.load %arg1[%c0, %c0_0, %c0_1] : memref<1x64x128xf32, #tpu.memory_space<vmem>>, vector<1x64x128xf32>
    %2 = vector.shape_cast %1 : vector<1x64x128xf32> to vector<64x128xf32>
    %c7 = arith.constant 7 : index
    %c0_2 = arith.constant 0 : index
    %3 = vector.load %arg23[%c7, %c0_2] : memref<80x128xf32, #tpu.memory_space<vmem>>, vector<1x128xf32>
    tpu.vector_store %arg23[%c7, %c0_2], %0 {strides = array<i32>} : memref<80x128xf32, #tpu.memory_space<vmem>>, vector<1x128xf32>,
    %c8 = arith.constant 8 : index
    %c0_3 = arith.constant 0 : index
    %4 = vector.load %arg23[%c8, %c0_3] : memref<80x128xf32, #tpu.memory_space<vmem>>, vector<64x128xf32>
    tpu.vector_store %arg23[%c8, %c0_3], %2 {strides = array<i32>} : memref<80x128xf32, #tpu.memory_space<vmem>>, vector<64x128xf32>,
    %c72 = arith.constant 72 : index
    %c0_4 = arith.constant 0 : index
    %5 = vector.load %arg23[%c72, %c0_4] : memref<80x128xf32, #tpu.memory_space<vmem>>, vector<1x128xf32>
    tpu.vector_store %arg23[%c72, %c0_4], %0 {strides = array<i32>} : memref<80x128xf32, #tpu.memory_space<vmem>>, vector<1x128xf32>,
    %c7_5 = arith.constant 7 : index
    %c0_6 = arith.constant 0 : index
    %6 = vector.load %arg23[%c7_5, %c0_6] : memref<80x128xf32, #tpu.memory_space<vmem>>, vector<64x128xf32>
    %c9 = arith.constant 9 : index
    %c0_7 = arith.constant 0 : index
    %7 = vector.load %arg23[%c9, %c0_7] : memref<80x128xf32, #tpu.memory_space<vmem>>, vector<64x128xf32>
    %8 = tpu.concatenate %6, %2, %7 in 1 : vector<64x128xf32>, vector<64x128xf32>, vector<64x128xf32> -> vector<64x384xf32>
    %c0_8 = arith.constant 0 : index
    %c0_9 = arith.constant 0 : index
    %c0_10 = arith.constant 0 : index
    %9 = vector.load %arg6[%c0_8, %c0_9, %c0_10] : memref<5x384x128xf32, #tpu.memory_space<vmem>>, vector<1x384x128xf32>
    %10 = vector.shape_cast %9 : vector<1x384x128xf32> to vector<384x128xf32>
    %cst_11 = arith.constant dense<0.000000e+00> : vector<64x128xf32>
    %11 = tpu.matmul %8, %10, %cst_11 {dimension_numbers = #tpu.dot_dimension_numbers<[1], [0], [0], [1], [0, 0, 1, 1], [], []>} : vector<64x384xf32>, vector<384x128xf32>, vector<64x128xf32> -> vector<64x128xf32>
    %c0_12 = arith.constant 0 : index
    %c0_13 = arith.constant 0 : index
    %c0_14 = arith.constant 0 : index
    %12 = vector.load %arg7[%c0_12, %c0_13, %c0_14] : memref<5x1x128xf32, #tpu.memory_space<vmem>>, vector<1x1x128xf32>
    %13 = vector.shape_cast %12 : vector<1x1x128xf32> to vector<1x128xf32>
    %14 = vector.broadcast %13 : vector<1x128xf32> to vector<64x128xf32>
    %15 = arith.addf %11, %14 : vector<64x128xf32>
    %cst_15 = arith.constant 0.000000e+00 : f32
    %16 = vector.broadcast %cst_15 : f32 to vector<64x128xf32>
    %17 = arith.maximumf %15, %16 : vector<64x128xf32>
    %c8_16 = arith.constant 8 : index
    %c0_17 = arith.constant 0 : index
    %18 = vector.load %arg23[%c8_16, %c0_17] : memref<80x128xf32, #tpu.memory_space<vmem>>, vector<64x128xf32>
    tpu.vector_store %arg23[%c8_16, %c0_17], %17 {strides = array<i32>} : memref<80x128xf32, #tpu.memory_space<vmem>>, vector<64x128xf32>,
    %c8_18 = arith.constant 8 : index
    %c0_19 = arith.constant 0 : index
    %19 = tpu.strided_load %arg23[%c8_18, %c0_19] {strides = array<i32: 2, 1>} : memref<80x128xf32, #tpu.memory_space<vmem>>, vector<32x128xf32>
    %c9_20 = arith.constant 9 : index
    %c0_21 = arith.constant 0 : index
    %20 = tpu.strided_load %arg23[%c9_20, %c0_21] {strides = array<i32: 2, 1>} : memref<80x128xf32, #tpu.memory_space<vmem>>, vector<32x128xf32>
    %21 = arith.maximumf %19, %20 : vector<32x128xf32>
    %c7_22 = arith.constant 7 : index
    %c0_23 = arith.constant 0 : index
    %22 = vector.load %arg23[%c7_22, %c0_23] : memref<80x128xf32, #tpu.memory_space<vmem>>, vector<1x128xf32>
    tpu.vector_store %arg23[%c7_22, %c0_23], %0 {strides = array<i32>} : memref<80x128xf32, #tpu.memory_space<vmem>>, vector<1x128xf32>,
    %c8_24 = arith.constant 8 : index
    %c0_25 = arith.constant 0 : index
    %23 = vector.load %arg23[%c8_24, %c0_25] : memref<80x128xf32, #tpu.memory_space<vmem>>, vector<32x128xf32>
    tpu.vector_store %arg23[%c8_24, %c0_25], %21 {strides = array<i32>} : memref<80x128xf32, #tpu.memory_space<vmem>>, vector<32x128xf32>,
    %c40 = arith.constant 40 : index
    %c0_26 = arith.constant 0 : index
    %24 = vector.load %arg23[%c40, %c0_26] : memref<80x128xf32, #tpu.memory_space<vmem>>, vector<1x128xf32>
    tpu.vector_store %arg23[%c40, %c0_26], %0 {strides = array<i32>} : memref<80x128xf32, #tpu.memory_space<vmem>>, vector<1x128xf32>,
    %c7_27 = arith.constant 7 : index
    %c0_28 = arith.constant 0 : index
    %25 = vector.load %arg23[%c7_27, %c0_28] : memref<80x128xf32, #tpu.memory_space<vmem>>, vector<32x128xf32>
    %c9_29 = arith.constant 9 : index
    %c0_30 = arith.constant 0 : index
    %26 = vector.load %arg23[%c9_29, %c0_30] : memref<80x128xf32, #tpu.memory_space<vmem>>, vector<32x128xf32>
    %27 = tpu.concatenate %25, %21, %26 in 1 : vector<32x128xf32>, vector<32x128xf32>, vector<32x128xf32> -> vector<32x384xf32>
    %c1 = arith.constant 1 : index
    %c0_31 = arith.constant 0 : index
    %c0_32 = arith.constant 0 : index
    %28 = vector.load %arg6[%c1, %c0_31, %c0_32] : memref<5x384x128xf32, #tpu.memory_space<vmem>>, vector<1x384x128xf32>
    %29 = vector.shape_cast %28 : vector<1x384x128xf32> to vector<384x128xf32>
    %cst_33 = arith.constant dense<0.000000e+00> : vector<32x128xf32>
    %30 = tpu.matmul %27, %29, %cst_33 {dimension_numbers = #tpu.dot_dimension_numbers<[1], [0], [0], [1], [0, 0, 1, 1], [], []>} : vector<32x384xf32>, vector<384x128xf32>, vector<32x128xf32> -> vector<32x128xf32>
    %c1_34 = arith.constant 1 : index
    %c0_35 = arith.constant 0 : index
    %c0_36 = arith.constant 0 : index
    %31 = vector.load %arg7[%c1_34, %c0_35, %c0_36] : memref<5x1x128xf32, #tpu.memory_space<vmem>>, vector<1x1x128xf32>
    %32 = vector.shape_cast %31 : vector<1x1x128xf32> to vector<1x128xf32>
    %33 = vector.broadcast %32 : vector<1x128xf32> to vector<32x128xf32>
    %34 = arith.addf %30, %33 : vector<32x128xf32>
    %cst_37 = arith.constant 0.000000e+00 : f32
    %35 = vector.broadcast %cst_37 : f32 to vector<32x128xf32>
    %36 = arith.maximumf %34, %35 : vector<32x128xf32>
    %c8_38 = arith.constant 8 : index
    %c0_39 = arith.constant 0 : index
    %37 = vector.load %arg23[%c8_38, %c0_39] : memref<80x128xf32, #tpu.memory_space<vmem>>, vector<32x128xf32>
    tpu.vector_store %arg23[%c8_38, %c0_39], %36 {strides = array<i32>} : memref<80x128xf32, #tpu.memory_space<vmem>>, vector<32x128xf32>,
    %c8_40 = arith.constant 8 : index
    %c0_41 = arith.constant 0 : index
    %38 = tpu.strided_load %arg23[%c8_40, %c0_41] {strides = array<i32: 2, 1>} : memref<80x128xf32, #tpu.memory_space<vmem>>, vector<16x128xf32>
    %c9_42 = arith.constant 9 : index
    %c0_43 = arith.constant 0 : index
    %39 = tpu.strided_load %arg23[%c9_42, %c0_43] {strides = array<i32: 2, 1>} : memref<80x128xf32, #tpu.memory_space<vmem>>, vector<16x128xf32>
    %40 = arith.maximumf %38, %39 : vector<16x128xf32>
    %c7_44 = arith.constant 7 : index
    %c0_45 = arith.constant 0 : index
    %41 = vector.load %arg23[%c7_44, %c0_45] : memref<80x128xf32, #tpu.memory_space<vmem>>, vector<1x128xf32>
    tpu.vector_store %arg23[%c7_44, %c0_45], %0 {strides = array<i32>} : memref<80x128xf32, #tpu.memory_space<vmem>>, vector<1x128xf32>,
    %c8_46 = arith.constant 8 : index
    %c0_47 = arith.constant 0 : index
    %42 = vector.load %arg23[%c8_46, %c0_47] : memref<80x128xf32, #tpu.memory_space<vmem>>, vector<16x128xf32>
    tpu.vector_store %arg23[%c8_46, %c0_47], %40 {strides = array<i32>} : memref<80x128xf32, #tpu.memory_space<vmem>>, vector<16x128xf32>,
    %c24 = arith.constant 24 : index
    %c0_48 = arith.constant 0 : index
    %43 = vector.load %arg23[%c24, %c0_48] : memref<80x128xf32, #tpu.memory_space<vmem>>, vector<1x128xf32>
    tpu.vector_store %arg23[%c24, %c0_48], %0 {strides = array<i32>} : memref<80x128xf32, #tpu.memory_space<vmem>>, vector<1x128xf32>,
    %c7_49 = arith.constant 7 : index
    %c0_50 = arith.constant 0 : index
    %44 = vector.load %arg23[%c7_49, %c0_50] : memref<80x128xf32, #tpu.memory_space<vmem>>, vector<16x128xf32>
    %c9_51 = arith.constant 9 : index
    %c0_52 = arith.constant 0 : index
    %45 = vector.load %arg23[%c9_51, %c0_52] : memref<80x128xf32, #tpu.memory_space<vmem>>, vector<16x128xf32>
    %46 = tpu.concatenate %44, %40, %45 in 1 : vector<16x128xf32>, vector<16x128xf32>, vector<16x128xf32> -> vector<16x384xf32>
    %c2 = arith.constant 2 : index
    %c0_53 = arith.constant 0 : index
    %c0_54 = arith.constant 0 : index
    %47 = vector.load %arg6[%c2, %c0_53, %c0_54] : memref<5x384x128xf32, #tpu.memory_space<vmem>>, vector<1x384x128xf32>
    %48 = vector.shape_cast %47 : vector<1x384x128xf32> to vector<384x128xf32>
    %cst_55 = arith.constant dense<0.000000e+00> : vector<16x128xf32>
    %49 = tpu.matmul %46, %48, %cst_55 {dimension_numbers = #tpu.dot_dimension_numbers<[1], [0], [0], [1], [0, 0, 1, 1], [], []>} : vector<16x384xf32>, vector<384x128xf32>, vector<16x128xf32> -> vector<16x128xf32>
    %c2_56 = arith.constant 2 : index
    %c0_57 = arith.constant 0 : index
    %c0_58 = arith.constant 0 : index
    %50 = vector.load %arg7[%c2_56, %c0_57, %c0_58] : memref<5x1x128xf32, #tpu.memory_space<vmem>>, vector<1x1x128xf32>
    %51 = vector.shape_cast %50 : vector<1x1x128xf32> to vector<1x128xf32>
    %52 = vector.broadcast %51 : vector<1x128xf32> to vector<16x128xf32>
    %53 = arith.addf %49, %52 : vector<16x128xf32>
    %cst_59 = arith.constant 0.000000e+00 : f32
    %54 = vector.broadcast %cst_59 : f32 to vector<16x128xf32>
    %55 = arith.maximumf %53, %54 : vector<16x128xf32>
    %c8_60 = arith.constant 8 : index
    %c0_61 = arith.constant 0 : index
    %56 = vector.load %arg23[%c8_60, %c0_61] : memref<80x128xf32, #tpu.memory_space<vmem>>, vector<16x128xf32>
    tpu.vector_store %arg23[%c8_60, %c0_61], %55 {strides = array<i32>} : memref<80x128xf32, #tpu.memory_space<vmem>>, vector<16x128xf32>,
    %c8_62 = arith.constant 8 : index
    %c0_63 = arith.constant 0 : index
    %57 = tpu.strided_load %arg23[%c8_62, %c0_63] {strides = array<i32: 2, 1>} : memref<80x128xf32, #tpu.memory_space<vmem>>, vector<8x128xf32>
    %c9_64 = arith.constant 9 : index
    %c0_65 = arith.constant 0 : index
    %58 = tpu.strided_load %arg23[%c9_64, %c0_65] {strides = array<i32: 2, 1>} : memref<80x128xf32, #tpu.memory_space<vmem>>, vector<8x128xf32>
    %59 = arith.maximumf %57, %58 : vector<8x128xf32>
    %c7_66 = arith.constant 7 : index
    %c0_67 = arith.constant 0 : index
    %60 = vector.load %arg23[%c7_66, %c0_67] : memref<80x128xf32, #tpu.memory_space<vmem>>, vector<1x128xf32>
    tpu.vector_store %arg23[%c7_66, %c0_67], %0 {strides = array<i32>} : memref<80x128xf32, #tpu.memory_space<vmem>>, vector<1x128xf32>,
    %c8_68 = arith.constant 8 : index
    %c0_69 = arith.constant 0 : index
    %61 = vector.load %arg23[%c8_68, %c0_69] : memref<80x128xf32, #tpu.memory_space<vmem>>, vector<8x128xf32>
    tpu.vector_store %arg23[%c8_68, %c0_69], %59 {strides = array<i32>} : memref<80x128xf32, #tpu.memory_space<vmem>>, vector<8x128xf32>,
    %c16 = arith.constant 16 : index
    %c0_70 = arith.constant 0 : index
    %62 = vector.load %arg23[%c16, %c0_70] : memref<80x128xf32, #tpu.memory_space<vmem>>, vector<1x128xf32>
    tpu.vector_store %arg23[%c16, %c0_70], %0 {strides = array<i32>} : memref<80x128xf32, #tpu.memory_space<vmem>>, vector<1x128xf32>,
    %c7_71 = arith.constant 7 : index
    %c0_72 = arith.constant 0 : index
    %63 = vector.load %arg23[%c7_71, %c0_72] : memref<80x128xf32, #tpu.memory_space<vmem>>, vector<8x128xf32>
    %c9_73 = arith.constant 9 : index
    %c0_74 = arith.constant 0 : index
    %64 = vector.load %arg23[%c9_73, %c0_74] : memref<80x128xf32, #tpu.memory_space<vmem>>, vector<8x128xf32>
    %65 = tpu.concatenate %63, %59, %64 in 1 : vector<8x128xf32>, vector<8x128xf32>, vector<8x128xf32> -> vector<8x384xf32>
    %c3 = arith.constant 3 : index
    %c0_75 = arith.constant 0 : index
    %c0_76 = arith.constant 0 : index
    %66 = vector.load %arg6[%c3, %c0_75, %c0_76] : memref<5x384x128xf32, #tpu.memory_space<vmem>>, vector<1x384x128xf32>
    %67 = vector.shape_cast %66 : vector<1x384x128xf32> to vector<384x128xf32>
    %cst_77 = arith.constant dense<0.000000e+00> : vector<8x128xf32>
    %68 = tpu.matmul %65, %67, %cst_77 {dimension_numbers = #tpu.dot_dimension_numbers<[1], [0], [0], [1], [0, 0, 1, 1], [], []>} : vector<8x384xf32>, vector<384x128xf32>, vector<8x128xf32> -> vector<8x128xf32>
    %c3_78 = arith.constant 3 : index
    %c0_79 = arith.constant 0 : index
    %c0_80 = arith.constant 0 : index
    %69 = vector.load %arg7[%c3_78, %c0_79, %c0_80] : memref<5x1x128xf32, #tpu.memory_space<vmem>>, vector<1x1x128xf32>
    %70 = vector.shape_cast %69 : vector<1x1x128xf32> to vector<1x128xf32>
    %71 = vector.broadcast %70 : vector<1x128xf32> to vector<8x128xf32>
    %72 = arith.addf %68, %71 : vector<8x128xf32>
    %cst_81 = arith.constant 0.000000e+00 : f32
    %73 = vector.broadcast %cst_81 : f32 to vector<8x128xf32>
    %74 = arith.maximumf %72, %73 : vector<8x128xf32>
    %c8_82 = arith.constant 8 : index
    %c0_83 = arith.constant 0 : index
    %75 = vector.load %arg23[%c8_82, %c0_83] : memref<80x128xf32, #tpu.memory_space<vmem>>, vector<8x128xf32>
    tpu.vector_store %arg23[%c8_82, %c0_83], %74 {strides = array<i32>} : memref<80x128xf32, #tpu.memory_space<vmem>>, vector<8x128xf32>,
    %c8_84 = arith.constant 8 : index
    %c0_85 = arith.constant 0 : index
    %76 = tpu.strided_load %arg23[%c8_84, %c0_85] {strides = array<i32: 2, 1>} : memref<80x128xf32, #tpu.memory_space<vmem>>, vector<4x128xf32>
    %c9_86 = arith.constant 9 : index
    %c0_87 = arith.constant 0 : index
    %77 = tpu.strided_load %arg23[%c9_86, %c0_87] {strides = array<i32: 2, 1>} : memref<80x128xf32, #tpu.memory_space<vmem>>, vector<4x128xf32>
    %78 = arith.maximumf %76, %77 : vector<4x128xf32>
    %c7_88 = arith.constant 7 : index
    %c0_89 = arith.constant 0 : index
    %79 = vector.load %arg23[%c7_88, %c0_89] : memref<80x128xf32, #tpu.memory_space<vmem>>, vector<1x128xf32>
    tpu.vector_store %arg23[%c7_88, %c0_89], %0 {strides = array<i32>} : memref<80x128xf32, #tpu.memory_space<vmem>>, vector<1x128xf32>,
    %c8_90 = arith.constant 8 : index
    %c0_91 = arith.constant 0 : index
    %80 = vector.load %arg23[%c8_90, %c0_91] : memref<80x128xf32, #tpu.memory_space<vmem>>, vector<4x128xf32>
    tpu.vector_store %arg23[%c8_90, %c0_91], %78 {strides = array<i32>} : memref<80x128xf32, #tpu.memory_space<vmem>>, vector<4x128xf32>,
    %c12 = arith.constant 12 : index
    %c0_92 = arith.constant 0 : index
    %81 = vector.load %arg23[%c12, %c0_92] : memref<80x128xf32, #tpu.memory_space<vmem>>, vector<1x128xf32>
    tpu.vector_store %arg23[%c12, %c0_92], %0 {strides = array<i32>} : memref<80x128xf32, #tpu.memory_space<vmem>>, vector<1x128xf32>,
    %c7_93 = arith.constant 7 : index
    %c0_94 = arith.constant 0 : index
    %82 = vector.load %arg23[%c7_93, %c0_94] : memref<80x128xf32, #tpu.memory_space<vmem>>, vector<4x128xf32>
    %c9_95 = arith.constant 9 : index
    %c0_96 = arith.constant 0 : index
    %83 = vector.load %arg23[%c9_95, %c0_96] : memref<80x128xf32, #tpu.memory_space<vmem>>, vector<4x128xf32>
    %84 = tpu.concatenate %82, %78, %83 in 1 : vector<4x128xf32>, vector<4x128xf32>, vector<4x128xf32> -> vector<4x384xf32>
    %c4 = arith.constant 4 : index
    %c0_97 = arith.constant 0 : index
    %c0_98 = arith.constant 0 : index
    %85 = vector.load %arg6[%c4, %c0_97, %c0_98] : memref<5x384x128xf32, #tpu.memory_space<vmem>>, vector<1x384x128xf32>
    %86 = vector.shape_cast %85 : vector<1x384x128xf32> to vector<384x128xf32>
    %cst_99 = arith.constant dense<0.000000e+00> : vector<4x128xf32>
    %87 = tpu.matmul %84, %86, %cst_99 {dimension_numbers = #tpu.dot_dimension_numbers<[1], [0], [0], [1], [0, 0, 1, 1], [], []>} : vector<4x384xf32>, vector<384x128xf32>, vector<4x128xf32> -> vector<4x128xf32>
    %c4_100 = arith.constant 4 : index
    %c0_101 = arith.constant 0 : index
    %c0_102 = arith.constant 0 : index
    %88 = vector.load %arg7[%c4_100, %c0_101, %c0_102] : memref<5x1x128xf32, #tpu.memory_space<vmem>>, vector<1x1x128xf32>
    %89 = vector.shape_cast %88 : vector<1x1x128xf32> to vector<1x128xf32>
    %90 = vector.broadcast %89 : vector<1x128xf32> to vector<4x128xf32>
    %91 = arith.addf %87, %90 : vector<4x128xf32>
    %cst_103 = arith.constant 0.000000e+00 : f32
    %92 = vector.broadcast %cst_103 : f32 to vector<4x128xf32>
    %93 = arith.maximumf %91, %92 : vector<4x128xf32>
    %c8_104 = arith.constant 8 : index
    %c0_105 = arith.constant 0 : index
    %94 = vector.load %arg23[%c8_104, %c0_105] : memref<80x128xf32, #tpu.memory_space<vmem>>, vector<4x128xf32>
    tpu.vector_store %arg23[%c8_104, %c0_105], %93 {strides = array<i32>} : memref<80x128xf32, #tpu.memory_space<vmem>>, vector<4x128xf32>,
    %c8_106 = arith.constant 8 : index
    %c0_107 = arith.constant 0 : index
    %95 = tpu.strided_load %arg23[%c8_106, %c0_107] {strides = array<i32: 2, 1>} : memref<80x128xf32, #tpu.memory_space<vmem>>, vector<2x128xf32>
    %c9_108 = arith.constant 9 : index
    %c0_109 = arith.constant 0 : index
    %96 = tpu.strided_load %arg23[%c9_108, %c0_109] {strides = array<i32: 2, 1>} : memref<80x128xf32, #tpu.memory_space<vmem>>, vector<2x128xf32>
    %97 = arith.maximumf %95, %96 : vector<2x128xf32>
    %cst_110 = arith.constant dense<0.000000e+00> : vector<128xf32>
    %98 = vector.multi_reduction <add>, %97, %cst_110 [0] : vector<2x128xf32> to vector<128xf32>
    %99 = vector.shape_cast %98 : vector<128xf32> to vector<1x128xf32>
    %cst_111 = arith.constant 2.000000e+00 : f32
    %100 = vector.broadcast %cst_111 : f32 to vector<1x128xf32>
    %101 = arith.divf %99, %100 : vector<1x128xf32>
    %c0_112 = arith.constant 0 : index
    %c0_113 = arith.constant 0 : index
    %102 = vector.load %arg8[%c0_112, %c0_113] : memref<128x8xf32, #tpu.memory_space<vmem>>, vector<128x8xf32>
    %cst_114 = arith.constant dense<0.000000e+00> : vector<1x8xf32>
    %103 = tpu.matmul %101, %102, %cst_114 {dimension_numbers = #tpu.dot_dimension_numbers<[1], [0], [0], [1], [0, 0, 1, 1], [], []>} : vector<1x128xf32>, vector<128x8xf32>, vector<1x8xf32> -> vector<1x8xf32>
    %c0_115 = arith.constant 0 : index
    %c0_116 = arith.constant 0 : index
    %104 = vector.load %arg9[%c0_115, %c0_116] : memref<1x8xf32, #tpu.memory_space<vmem>>, vector<1x8xf32>
    %105 = arith.addf %103, %104 : vector<1x8xf32>
    %c0_117 = arith.constant 0 : index
    %c0_118 = arith.constant 0 : index
    %c0_119 = arith.constant 0 : index
    %106 = vector.load %arg5[%c0_117, %c0_118, %c0_119] : memref<1x1x256xf32, #tpu.memory_space<vmem>>, vector<1x1x256xf32>
    %107 = vector.shape_cast %106 : vector<1x1x256xf32> to vector<1x256xf32>
    %c0_120 = arith.constant 0 : index
    %c0_121 = arith.constant 0 : index
    %108 = vector.load %arg10[%c0_120, %c0_121] : memref<256x64xf32, #tpu.memory_space<vmem>>, vector<256x64xf32>
    %cst_122 = arith.constant dense<0.000000e+00> : vector<1x64xf32>
    %109 = tpu.matmul %107, %108, %cst_122 {dimension_numbers = #tpu.dot_dimension_numbers<[1], [0], [0], [1], [0, 0, 1, 1], [], []>} : vector<1x256xf32>, vector<256x64xf32>, vector<1x64xf32> -> vector<1x64xf32>
    %c0_123 = arith.constant 0 : index
    %c0_124 = arith.constant 0 : index
    %110 = vector.load %arg11[%c0_123, %c0_124] : memref<1x64xf32, #tpu.memory_space<vmem>>, vector<1x64xf32>
    %111 = arith.addf %109, %110 : vector<1x64xf32>
    %cst_125 = arith.constant 0.000000e+00 : f32
    %112 = vector.broadcast %cst_125 : f32 to vector<1x64xf32>
    %113 = arith.maximumf %111, %112 : vector<1x64xf32>
    %c0_126 = arith.constant 0 : index
    %c0_127 = arith.constant 0 : index
    %114 = vector.load %arg12[%c0_126, %c0_127] : memref<64x16xf32, #tpu.memory_space<vmem>>, vector<64x16xf32>
    %cst_128 = arith.constant dense<0.000000e+00> : vector<1x16xf32>
    %115 = tpu.matmul %113, %114, %cst_128 {dimension_numbers = #tpu.dot_dimension_numbers<[1], [0], [0], [1], [0, 0, 1, 1], [], []>} : vector<1x64xf32>, vector<64x16xf32>, vector<1x16xf32> -> vector<1x16xf32>
    %c0_129 = arith.constant 0 : index
    %c0_130 = arith.constant 0 : index
    %c0_131 = arith.constant 0 : index
    %116 = vector.load %arg4[%c0_129, %c0_130, %c0_131] : memref<1x1x64xf32, #tpu.memory_space<vmem>>, vector<1x1x64xf32>
    %117 = vector.shape_cast %116 : vector<1x1x64xf32> to vector<1x64xf32>
    %c0_132 = arith.constant 0 : index
    %c0_133 = arith.constant 0 : index
    %118 = vector.load %arg13[%c0_132, %c0_133] : memref<64x16xf32, #tpu.memory_space<vmem>>, vector<64x16xf32>
    %cst_134 = arith.constant dense<0.000000e+00> : vector<1x16xf32>
    %119 = tpu.matmul %117, %118, %cst_134 {dimension_numbers = #tpu.dot_dimension_numbers<[1], [0], [0], [1], [0, 0, 1, 1], [], []>} : vector<1x64xf32>, vector<64x16xf32>, vector<1x16xf32> -> vector<1x16xf32>
    %120 = arith.addf %115, %119 : vector<1x16xf32>
    %c0_135 = arith.constant 0 : index
    %c0_136 = arith.constant 0 : index
    %121 = vector.load %arg14[%c0_135, %c0_136] : memref<1x16xf32, #tpu.memory_space<vmem>>, vector<1x16xf32>
    %122 = arith.addf %120, %121 : vector<1x16xf32>
    %cst_137 = arith.constant 0.000000e+00 : f32
    %123 = vector.broadcast %cst_137 : f32 to vector<1x16xf32>
    %124 = arith.maximumf %122, %123 : vector<1x16xf32>
    %c0_138 = arith.constant 0 : index
    %c0_139 = arith.constant 0 : index
    %125 = vector.load %arg15[%c0_138, %c0_139] : memref<16x4xf32, #tpu.memory_space<vmem>>, vector<16x4xf32>
    %cst_140 = arith.constant dense<0.000000e+00> : vector<1x4xf32>
    %126 = tpu.matmul %124, %125, %cst_140 {dimension_numbers = #tpu.dot_dimension_numbers<[1], [0], [0], [1], [0, 0, 1, 1], [], []>} : vector<1x16xf32>, vector<16x4xf32>, vector<1x4xf32> -> vector<1x4xf32>
    %c0_141 = arith.constant 0 : index
    %c0_142 = arith.constant 0 : index
    %c0_143 = arith.constant 0 : index
    %127 = vector.load %arg3[%c0_141, %c0_142, %c0_143] : memref<1x1x16xf32, #tpu.memory_space<vmem>>, vector<1x1x16xf32>
    %128 = vector.shape_cast %127 : vector<1x1x16xf32> to vector<1x16xf32>
    %c0_144 = arith.constant 0 : index
    %c0_145 = arith.constant 0 : index
    %129 = vector.load %arg16[%c0_144, %c0_145] : memref<16x4xf32, #tpu.memory_space<vmem>>, vector<16x4xf32>
    %cst_146 = arith.constant dense<0.000000e+00> : vector<1x4xf32>
    %130 = tpu.matmul %128, %129, %cst_146 {dimension_numbers = #tpu.dot_dimension_numbers<[1], [0], [0], [1], [0, 0, 1, 1], [], []>} : vector<1x16xf32>, vector<16x4xf32>, vector<1x4xf32> -> vector<1x4xf32>
    %131 = arith.addf %126, %130 : vector<1x4xf32>
    %c0_147 = arith.constant 0 : index
    %c0_148 = arith.constant 0 : index
    %132 = vector.load %arg17[%c0_147, %c0_148] : memref<1x4xf32, #tpu.memory_space<vmem>>, vector<1x4xf32>
    %133 = arith.addf %131, %132 : vector<1x4xf32>
    %cst_149 = arith.constant 0.000000e+00 : f32
    %134 = vector.broadcast %cst_149 : f32 to vector<1x4xf32>
    %135 = arith.maximumf %133, %134 : vector<1x4xf32>
    %c0_150 = arith.constant 0 : index
    %c0_151 = arith.constant 0 : index
    %136 = vector.load %arg18[%c0_150, %c0_151] : memref<8x2xf32, #tpu.memory_space<vmem>>, vector<8x2xf32>
    %cst_152 = arith.constant dense<0.000000e+00> : vector<1x2xf32>
    %137 = tpu.matmul %105, %136, %cst_152 {dimension_numbers = #tpu.dot_dimension_numbers<[1], [0], [0], [1], [0, 0, 1, 1], [], []>} : vector<1x8xf32>, vector<8x2xf32>, vector<1x2xf32> -> vector<1x2xf32>
    %c0_153 = arith.constant 0 : index
    %c0_154 = arith.constant 0 : index
    %138 = vector.load %arg19[%c0_153, %c0_154] : memref<4x2xf32, #tpu.memory_space<vmem>>, vector<4x2xf32>
    %cst_155 = arith.constant dense<0.000000e+00> : vector<1x2xf32>
    %139 = tpu.matmul %135, %138, %cst_155 {dimension_numbers = #tpu.dot_dimension_numbers<[1], [0], [0], [1], [0, 0, 1, 1], [], []>} : vector<1x4xf32>, vector<4x2xf32>, vector<1x2xf32> -> vector<1x2xf32>
    %140 = arith.addf %137, %139 : vector<1x2xf32>
    %c0_156 = arith.constant 0 : index
    %c0_157 = arith.constant 0 : index
    %c0_158 = arith.constant 0 : index
    %141 = vector.load %arg2[%c0_156, %c0_157, %c0_158] : memref<1x1x4xf32, #tpu.memory_space<vmem>>, vector<1x1x4xf32>
    %142 = vector.shape_cast %141 : vector<1x1x4xf32> to vector<1x4xf32>
    %c0_159 = arith.constant 0 : index
    %c0_160 = arith.constant 0 : index
    %143 = vector.load %arg20[%c0_159, %c0_160] : memref<4x2xf32, #tpu.memory_space<vmem>>, vector<4x2xf32>
    %cst_161 = arith.constant dense<0.000000e+00> : vector<1x2xf32>
    %144 = tpu.matmul %142, %143, %cst_161 {dimension_numbers = #tpu.dot_dimension_numbers<[1], [0], [0], [1], [0, 0, 1, 1], [], []>} : vector<1x4xf32>, vector<4x2xf32>, vector<1x2xf32> -> vector<1x2xf32>
    %145 = arith.addf %140, %144 : vector<1x2xf32>
    %c0_162 = arith.constant 0 : index
    %c0_163 = arith.constant 0 : index
    %146 = vector.load %arg21[%c0_162, %c0_163] : memref<1x2xf32, #tpu.memory_space<vmem>>, vector<1x2xf32>
    %147 = arith.addf %145, %146 : vector<1x2xf32>
    %c0_164 = arith.constant 0 : index
    %c0_165 = arith.constant 0 : index
    %c0_166 = arith.constant 0 : index
    %148 = vector.load %arg22[%c0_164, %c0_165, %c0_166] : memref<1x1x2xf32, #tpu.memory_space<vmem>>, vector<1x1x2xf32>
    %149 = vector.shape_cast %148 : vector<1x1x2xf32> to vector<1x2xf32>
    %150 = vector.shape_cast %147 : vector<1x2xf32> to vector<1x1x2xf32>
    tpu.vector_store %arg22[%c0_164, %c0_165, %c0_166], %150 {strides = array<i32>} : memref<1x1x2xf32, #tpu.memory_space<vmem>>, vector<1x1x2xf32>,
    return
  }
  func.func @transform_0(%arg0: i32) -> (i32, i32, i32) {
    %c0_i32 = arith.constant 0 : i32
    %c0_i32_0 = arith.constant 0 : i32
    %c0_i32_1 = arith.constant 0 : i32
    return %arg0, %c0_i32, %c0_i32_0 : i32, i32, i32
  }
  func.func @transform_1(%arg0: i32) -> (i32, i32, i32) {
    %c0_i32 = arith.constant 0 : i32
    %c0_i32_0 = arith.constant 0 : i32
    %c0_i32_1 = arith.constant 0 : i32
    return %arg0, %c0_i32, %c0_i32_0 : i32, i32, i32
  }
  func.func @transform_2(%arg0: i32) -> (i32, i32, i32) {
    %c0_i32 = arith.constant 0 : i32
    %c0_i32_0 = arith.constant 0 : i32
    %c0_i32_1 = arith.constant 0 : i32
    return %arg0, %c0_i32, %c0_i32_0 : i32, i32, i32
  }
  func.func @transform_3(%arg0: i32) -> (i32, i32, i32) {
    %c0_i32 = arith.constant 0 : i32
    %c0_i32_0 = arith.constant 0 : i32
    %c0_i32_1 = arith.constant 0 : i32
    return %arg0, %c0_i32, %c0_i32_0 : i32, i32, i32
  }
  func.func @transform_4(%arg0: i32) -> (i32, i32, i32) {
    %c0_i32 = arith.constant 0 : i32
    %c0_i32_0 = arith.constant 0 : i32
    %c0_i32_1 = arith.constant 0 : i32
    return %arg0, %c0_i32, %c0_i32_0 : i32, i32, i32
  }
  func.func @transform_5(%arg0: i32) -> (i32, i32, i32) {
    %c0_i32 = arith.constant 0 : i32
    %c0_i32_0 = arith.constant 0 : i32
    %c0_i32_1 = arith.constant 0 : i32
    %c0_i32_2 = arith.constant 0 : i32
    return %c0_i32, %c0_i32_0, %c0_i32_1 : i32, i32, i32
  }
  func.func @transform_6(%arg0: i32) -> (i32, i32, i32) {
    %c0_i32 = arith.constant 0 : i32
    %c0_i32_0 = arith.constant 0 : i32
    %c0_i32_1 = arith.constant 0 : i32
    %c0_i32_2 = arith.constant 0 : i32
    return %c0_i32, %c0_i32_0, %c0_i32_1 : i32, i32, i32
  }
  func.func @transform_7(%arg0: i32) -> (i32, i32) {
    %c0_i32 = arith.constant 0 : i32
    %c0_i32_0 = arith.constant 0 : i32
    %c0_i32_1 = arith.constant 0 : i32
    return %c0_i32, %c0_i32_0 : i32, i32
  }
  func.func @transform_8(%arg0: i32) -> (i32, i32) {
    %c0_i32 = arith.constant 0 : i32
    %c0_i32_0 = arith.constant 0 : i32
    %c0_i32_1 = arith.constant 0 : i32
    return %c0_i32, %c0_i32_0 : i32, i32
  }
  func.func @transform_9(%arg0: i32) -> (i32, i32) {
    %c0_i32 = arith.constant 0 : i32
    %c0_i32_0 = arith.constant 0 : i32
    %c0_i32_1 = arith.constant 0 : i32
    return %c0_i32, %c0_i32_0 : i32, i32
  }
  func.func @transform_10(%arg0: i32) -> (i32, i32) {
    %c0_i32 = arith.constant 0 : i32
    %c0_i32_0 = arith.constant 0 : i32
    %c0_i32_1 = arith.constant 0 : i32
    return %c0_i32, %c0_i32_0 : i32, i32
  }
  func.func @transform_11(%arg0: i32) -> (i32, i32) {
    %c0_i32 = arith.constant 0 : i32
    %c0_i32_0 = arith.constant 0 : i32
    %c0_i32_1 = arith.constant 0 : i32
    return %c0_i32, %c0_i32_0 : i32, i32
  }
  func.func @transform_12(%arg0: i32) -> (i32, i32) {
    %c0_i32 = arith.constant 0 : i32
    %c0_i32_0 = arith.constant 0 : i32
    %c0_i32_1 = arith.constant 0 : i32
    return %c0_i32, %c0_i32_0 : i32, i32
  }
  func.func @transform_13(%arg0: i32) -> (i32, i32) {
    %c0_i32 = arith.constant 0 : i32
    %c0_i32_0 = arith.constant 0 : i32
    %c0_i32_1 = arith.constant 0 : i32
    return %c0_i32, %c0_i32_0 : i32, i32
  }
  func.func @transform_14(%arg0: i32) -> (i32, i32) {
    %c0_i32 = arith.constant 0 : i32
    %c0_i32_0 = arith.constant 0 : i32
    %c0_i32_1 = arith.constant 0 : i32
    return %c0_i32, %c0_i32_0 : i32, i32
  }
  func.func @transform_15(%arg0: i32) -> (i32, i32) {
    %c0_i32 = arith.constant 0 : i32
    %c0_i32_0 = arith.constant 0 : i32
    %c0_i32_1 = arith.constant 0 : i32
    return %c0_i32, %c0_i32_0 : i32, i32
  }
  func.func @transform_16(%arg0: i32) -> (i32, i32) {
    %c0_i32 = arith.constant 0 : i32
    %c0_i32_0 = arith.constant 0 : i32
    %c0_i32_1 = arith.constant 0 : i32
    return %c0_i32, %c0_i32_0 : i32, i32
  }
  func.func @transform_17(%arg0: i32) -> (i32, i32) {
    %c0_i32 = arith.constant 0 : i32
    %c0_i32_0 = arith.constant 0 : i32
    %c0_i32_1 = arith.constant 0 : i32
    return %c0_i32, %c0_i32_0 : i32, i32
  }
  func.func @transform_18(%arg0: i32) -> (i32, i32) {
    %c0_i32 = arith.constant 0 : i32
    %c0_i32_0 = arith.constant 0 : i32
    %c0_i32_1 = arith.constant 0 : i32
    return %c0_i32, %c0_i32_0 : i32, i32
  }
  func.func @transform_19(%arg0: i32) -> (i32, i32) {
    %c0_i32 = arith.constant 0 : i32
    %c0_i32_0 = arith.constant 0 : i32
    %c0_i32_1 = arith.constant 0 : i32
    return %c0_i32, %c0_i32_0 : i32, i32
  }
  func.func @transform_20(%arg0: i32) -> (i32, i32) {
    %c0_i32 = arith.constant 0 : i32
    %c0_i32_0 = arith.constant 0 : i32
    %c0_i32_1 = arith.constant 0 : i32
    return %c0_i32, %c0_i32_0 : i32, i32
  }
  func.func @transform_21(%arg0: i32) -> (i32, i32, i32) {
    %c0_i32 = arith.constant 0 : i32
    %c0_i32_0 = arith.constant 0 : i32
    %c0_i32_1 = arith.constant 0 : i32
    return %arg0, %c0_i32, %c0_i32_0 : i32, i32, i32
  }
}

</mosaic_0001>

<llo_original>
// kernel: tpu_custom_call.1
$region0: #{tpu_custom_call.1}
  #allocation0 [shape = 'u32[]', space=smem, size = 0x4, offset = 0x4, fixed_abs, tag = 'smem constant byte address 0x4 - core index']
  #allocation1 [shape = 'u32[144,128]{1,0:T(1,128)}', space=vmem, size = 0x12000, scoped, tag = 'internal scratch']
  #allocation2 [shape = 'f32[80,128]{1,0:T(8,128)}', space=vmem, size = 0xa000, scoped, tag = 'scratch operand']
  %s0 = inlined_call_operand.vmem [shape: f32[2,64,128], index: 0, kind: input, shape index: {}]
  %s1 = inlined_call_operand.vmem [shape: f32[2,1,4], index: 1, kind: input, shape index: {}]
  %s2 = inlined_call_operand.vmem [shape: f32[2,1,16], index: 2, kind: input, shape index: {}]
  %s3 = inlined_call_operand.vmem [shape: f32[2,1,64], index: 3, kind: input, shape index: {}]
  %s4 = inlined_call_operand.vmem [shape: f32[2,1,256], index: 4, kind: input, shape index: {}]
  %s5 = inlined_call_operand.hbm [shape: f32[5,384,128], index: 5, kind: input, shape index: {}]
  %s6 = inlined_call_operand.vmem [shape: f32[5,1,128], index: 6, kind: input, shape index: {}]
  %s7 = inlined_call_operand.vmem [shape: f32[128,8], index: 7, kind: input, shape index: {}]
  %s8 = inlined_call_operand.vmem [shape: f32[1,8], index: 8, kind: input, shape index: {}]
  %s9 = inlined_call_operand.vmem [shape: f32[256,64], index: 9, kind: input, shape index: {}]
  %s10 = inlined_call_operand.vmem [shape: f32[1,64], index: 10, kind: input, shape index: {}]
  %s11 = inlined_call_operand.vmem [shape: f32[64,16], index: 11, kind: input, shape index: {}]
  %s12 = inlined_call_operand.vmem [shape: f32[64,16], index: 12, kind: input, shape index: {}]
  %s13 = inlined_call_operand.vmem [shape: f32[1,16], index: 13, kind: input, shape index: {}]
  %s14 = inlined_call_operand.vmem [shape: f32[16,4], index: 14, kind: input, shape index: {}]
  %s15 = inlined_call_operand.vmem [shape: f32[16,4], index: 15, kind: input, shape index: {}]
  %s16 = inlined_call_operand.vmem [shape: f32[1,4], index: 16, kind: input, shape index: {}]
  %s17 = inlined_call_operand.vmem [shape: f32[8,2], index: 17, kind: input, shape index: {}]
  %s18 = inlined_call_operand.vmem [shape: f32[4,2], index: 18, kind: input, shape index: {}]
  %s19 = inlined_call_operand.vmem [shape: f32[4,2], index: 19, kind: input, shape index: {}]
  %s20 = inlined_call_operand.vmem [shape: f32[1,2], index: 20, kind: input, shape index: {}]
  %s21 = inlined_call_operand.hbm [shape: f32[2,1,2], index: 21, kind: output, shape index: {}]
  %s22 = sld [smem:[#allocation0]]
  $region121: #{tpu_custom_call.1} parent=0
    _
  %s24 = ssub.s32 1, %s22
  %s25 = scalar_select 0, %s24, %s22
  $region1: #{tpu_custom_call.1} parent=0
    #allocation3 [shape = 'u8[983040]{0}', space=vmem, size = 0xf0000, scoped, tag = 'input window, operand 5, single buffered']
    #allocation4 [shape = 's32[2]{0}', space=sflag, size = 0x8, scoped, tag = 'scoped memory for tpu_custom_call.1']
    #allocation5 [shape = 's32[2]{0}', space=sflag, size = 0x8, scoped, tag = 'scoped memory for tpu_custom_call.1']
    #allocation6 [shape = 'u8[1024]{0}', space=vmem, size = 0x400, scoped, tag = 'output window, operand 0']
    %26 = vsyncpa [#allocation4], 0
    %27 = vsyncpa [#allocation5], 0
    %s28 = scalar_lea.sflag [#allocation5], 1
    %29 = vsyncpa %s28, 0
    loop: start=0, step=1, limit=4
    $region2: #{tpu_custom_call.1} parent=1 // loop_pre_header
      _
    $region3: #{tpu_custom_call.1} parent=1 // loop_header
      %s31 = sphi 0, %s35
      %p32 = scmp.ge.s32.totalorder %s31, 4
      %s41 = sphi 0, %s43
      %s44 = sphi 0, %s41
      %s45 = sphi 0, %s44
      %s61 = sphi 0, %s45
      %s67 = sphi 0, %s69
      %s70 = sphi 0, %s67
      %s71 = sphi 0, %s70
      %s87 = sphi 0, %s71
      %s93 = sphi 0, %s95
      %s96 = sphi 0, %s93
      %s97 = sphi 0, %s96
      %s113 = sphi 0, %s97
      %s119 = sphi 0, %s121
      %s122 = sphi 0, %s119
      %s123 = sphi 0, %s122
      %s139 = sphi 0, %s123
      %s145 = sphi 0, %s147
      %s148 = sphi 0, %s145
      %s149 = sphi 0, %s148
      %s165 = sphi 0, %s149
      %s169 = sphi 0, %s169
      %s171 = sphi 0, %s169
      %s172 = sphi 0, %s171
      %s186 = sphi 0, %s172
      %s190 = sphi 0, %s190
      %s192 = sphi 0, %s190
      %s193 = sphi 0, %s192
      %s207 = sphi 0, %s193
      %s211 = sphi 0, %s211
      %s213 = sphi 0, %s211
      %s214 = sphi 0, %s213
      %s228 = sphi 0, %s214
      %s232 = sphi 0, %s232
      %s234 = sphi 0, %s232
      %s235 = sphi 0, %s234
      %s249 = sphi 0, %s235
      %s253 = sphi 0, %s253
      %s255 = sphi 0, %s253
      %s256 = sphi 0, %s255
      %s270 = sphi 0, %s256
      %s274 = sphi 0, %s274
      %s276 = sphi 0, %s274
      %s277 = sphi 0, %s276
      %s291 = sphi 0, %s277
      %s295 = sphi 0, %s295
      %s297 = sphi 0, %s295
      %s298 = sphi 0, %s297
      %s312 = sphi 0, %s298
      %s316 = sphi 0, %s316
      %s318 = sphi 0, %s316
      %s319 = sphi 0, %s318
      %s333 = sphi 0, %s319
      %s337 = sphi 0, %s337
      %s339 = sphi 0, %s337
      %s340 = sphi 0, %s339
      %s354 = sphi 0, %s340
      %s358 = sphi 0, %s358
      %s360 = sphi 0, %s358
      %s361 = sphi 0, %s360
      %s375 = sphi 0, %s361
      %s379 = sphi 0, %s379
      %s381 = sphi 0, %s379
      %s382 = sphi 0, %s381
      %s396 = sphi 0, %s382
      %s400 = sphi 0, %s400
      %s402 = sphi 0, %s400
      %s403 = sphi 0, %s402
      %s417 = sphi 0, %s403
      %s421 = sphi 0, %s421
      %s423 = sphi 0, %s421
      %s424 = sphi 0, %s423
      %s438 = sphi 0, %s424
      %s442 = sphi 0, %s442
      %s444 = sphi 0, %s442
      %s445 = sphi 0, %s444
      %s459 = sphi 0, %s445
      %s463 = sphi 0, %s463
      %s465 = sphi 0, %s463
      %s466 = sphi 0, %s465
      %s480 = sphi 0, %s466
      %s484 = sphi 0, %s484
      %s486 = sphi 0, %s484
      %s487 = sphi 0, %s486
      %s501 = sphi 0, %s487
      %s507 = sphi 0, %s509
      %s510 = sphi 0, %s507
      %s511 = sphi 0, %s510
      %s527 = sphi 0, %s511
    $region4: #{tpu_custom_call.1} parent=1 // loop_header_branch
      %34 = sbr.rel (%p32) target = $region8
    $region5: #{tpu_custom_call.1} parent=1 // loop_body
      %s36 = ssub.s32 %s31, 1
      %s37 = ssub.s32 %s31, 2
      %s38 = sadd.s32 %s31, 1
      %s39 = ssub.s32 %s31, %s38
      %p40 = scmp.eq.s32.totalorder %s39, 0
      %s42 = sadd.s32 %s41, 1
      %s43 = scalar_select %p40, %s41, %s42
      %p46 = pneg %p40
      %p47 = scmp.eq.s32.totalorder %s31, 1
      %p48 = por %p46, %p47
      %p49 = scmp.ne.s32.totalorder %s41, %s44
      %p50 = scmp.eq.s32.totalorder %s31, 0
      %p51 = por %p49, %p50
      %p52 = scmp.ne.s32.totalorder %s41, %s44
      %p53 = scmp.eq.s32.totalorder %s36, 1
      %p54 = por %p52, %p53
      %p55 = scmp.ne.s32.totalorder %s44, %s45
      %p56 = scmp.eq.s32.totalorder %s36, 0
      %p57 = por %p55, %p56
      %p58 = scmp.ne.s32.totalorder %s44, %s45
      %p59 = scmp.eq.s32.totalorder %s37, 1
      %p60 = por %p58, %p59
      %p62 = scmp.ne.s32.totalorder %s45, %s61
      %p63 = scmp.eq.s32.totalorder %s37, 0
      %p64 = por %p62, %p63
      %s65 = ssub.s32 %s31, %s38
      %p66 = scmp.eq.s32.totalorder %s65, 0
      %s68 = sadd.s32 %s67, 1
      %s69 = scalar_select %p66, %s67, %s68
      %p72 = pneg %p66
      %p73 = scmp.eq.s32.totalorder %s31, 1
      %p74 = por %p72, %p73
      %p75 = scmp.ne.s32.totalorder %s67, %s70
      %p76 = scmp.eq.s32.totalorder %s31, 0
      %p77 = por %p75, %p76
      %p78 = scmp.ne.s32.totalorder %s67, %s70
      %p79 = scmp.eq.s32.totalorder %s36, 1
      %p80 = por %p78, %p79
      %p81 = scmp.ne.s32.totalorder %s70, %s71
      %p82 = scmp.eq.s32.totalorder %s36, 0
      %p83 = por %p81, %p82
      %p84 = scmp.ne.s32.totalorder %s70, %s71
      %p85 = scmp.eq.s32.totalorder %s37, 1
      %p86 = por %p84, %p85
      %p88 = scmp.ne.s32.totalorder %s71, %s87
      %p89 = scmp.eq.s32.totalorder %s37, 0
      %p90 = por %p88, %p89
      %s91 = ssub.s32 %s31, %s38
      %p92 = scmp.eq.s32.totalorder %s91, 0
      %s94 = sadd.s32 %s93, 1
      %s95 = scalar_select %p92, %s93, %s94
      %p98 = pneg %p92
      %p99 = scmp.eq.s32.totalorder %s31, 1
      %p100 = por %p98, %p99
      %p101 = scmp.ne.s32.totalorder %s93, %s96
      %p102 = scmp.eq.s32.totalorder %s31, 0
      %p103 = por %p101, %p102
      %p104 = scmp.ne.s32.totalorder %s93, %s96
      %p105 = scmp.eq.s32.totalorder %s36, 1
      %p106 = por %p104, %p105
      %p107 = scmp.ne.s32.totalorder %s96, %s97
      %p108 = scmp.eq.s32.totalorder %s36, 0
      %p109 = por %p107, %p108
      %p110 = scmp.ne.s32.totalorder %s96, %s97
      %p111 = scmp.eq.s32.totalorder %s37, 1
      %p112 = por %p110, %p111
      %p114 = scmp.ne.s32.totalorder %s97, %s113
      %p115 = scmp.eq.s32.totalorder %s37, 0
      %p116 = por %p114, %p115
      %s117 = ssub.s32 %s31, %s38
      %p118 = scmp.eq.s32.totalorder %s117, 0
      %s120 = sadd.s32 %s119, 1
      %s121 = scalar_select %p118, %s119, %s120
      %p124 = pneg %p118
      %p125 = scmp.eq.s32.totalorder %s31, 1
      %p126 = por %p124, %p125
      %p127 = scmp.ne.s32.totalorder %s119, %s122
      %p128 = scmp.eq.s32.totalorder %s31, 0
      %p129 = por %p127, %p128
      %p130 = scmp.ne.s32.totalorder %s119, %s122
      %p131 = scmp.eq.s32.totalorder %s36, 1
      %p132 = por %p130, %p131
      %p133 = scmp.ne.s32.totalorder %s122, %s123
      %p134 = scmp.eq.s32.totalorder %s36, 0
      %p135 = por %p133, %p134
      %p136 = scmp.ne.s32.totalorder %s122, %s123
      %p137 = scmp.eq.s32.totalorder %s37, 1
      %p138 = por %p136, %p137
      %p140 = scmp.ne.s32.totalorder %s123, %s139
      %p141 = scmp.eq.s32.totalorder %s37, 0
      %p142 = por %p140, %p141
      %s143 = ssub.s32 %s31, %s38
      %p144 = scmp.eq.s32.totalorder %s143, 0
      %s146 = sadd.s32 %s145, 1
      %s147 = scalar_select %p144, %s145, %s146
      %p150 = pneg %p144
      %p151 = scmp.eq.s32.totalorder %s31, 1
      %p152 = por %p150, %p151
      %p153 = scmp.ne.s32.totalorder %s145, %s148
      %p154 = scmp.eq.s32.totalorder %s31, 0
      %p155 = por %p153, %p154
      %p156 = scmp.ne.s32.totalorder %s145, %s148
      %p157 = scmp.eq.s32.totalorder %s36, 1
      %p158 = por %p156, %p157
      %p159 = scmp.ne.s32.totalorder %s148, %s149
      %p160 = scmp.eq.s32.totalorder %s36, 0
      %p161 = por %p159, %p160
      %p162 = scmp.ne.s32.totalorder %s148, %s149
      %p163 = scmp.eq.s32.totalorder %s37, 1
      %p164 = por %p162, %p163
      %p166 = scmp.ne.s32.totalorder %s149, %s165
      %p167 = scmp.eq.s32.totalorder %s37, 0
      %p168 = por %p166, %p167
      %s170 = sadd.s32 %s169, 1
      %p173 = scmp.eq.s32.totalorder %s31, 1
      %p174 = scmp.ne.s32.totalorder %s169, %s171
      %p175 = scmp.eq.s32.totalorder %s31, 0
      %p176 = por %p174, %p175
      %p177 = scmp.ne.s32.totalorder %s169, %s171
      %p178 = scmp.eq.s32.totalorder %s36, 1
      %p179 = por %p177, %p178
      %p180 = scmp.ne.s32.totalorder %s171, %s172
      %p181 = scmp.eq.s32.totalorder %s36, 0
      %p182 = por %p180, %p181
      %p183 = scmp.ne.s32.totalorder %s171, %s172
      %p184 = scmp.eq.s32.totalorder %s37, 1
      %p185 = por %p183, %p184
      %p187 = scmp.ne.s32.totalorder %s172, %s186
      %p188 = scmp.eq.s32.totalorder %s37, 0
      %p189 = por %p187, %p188
      %s191 = sadd.s32 %s190, 1
      %p194 = scmp.eq.s32.totalorder %s31, 1
      %p195 = scmp.ne.s32.totalorder %s190, %s192
      %p196 = scmp.eq.s32.totalorder %s31, 0
      %p197 = por %p195, %p196
      %p198 = scmp.ne.s32.totalorder %s190, %s192
      %p199 = scmp.eq.s32.totalorder %s36, 1
      %p200 = por %p198, %p199
      %p201 = scmp.ne.s32.totalorder %s192, %s193
      %p202 = scmp.eq.s32.totalorder %s36, 0
      %p203 = por %p201, %p202
      %p204 = scmp.ne.s32.totalorder %s192, %s193
      %p205 = scmp.eq.s32.totalorder %s37, 1
      %p206 = por %p204, %p205
      %p208 = scmp.ne.s32.totalorder %s193, %s207
      %p209 = scmp.eq.s32.totalorder %s37, 0
      %p210 = por %p208, %p209
      %s212 = sadd.s32 %s211, 1
      %p215 = scmp.eq.s32.totalorder %s31, 1
      %p216 = scmp.ne.s32.totalorder %s211, %s213
      %p217 = scmp.eq.s32.totalorder %s31, 0
      %p218 = por %p216, %p217
      %p219 = scmp.ne.s32.totalorder %s211, %s213
      %p220 = scmp.eq.s32.totalorder %s36, 1
      %p221 = por %p219, %p220
      %p222 = scmp.ne.s32.totalorder %s213, %s214
      %p223 = scmp.eq.s32.totalorder %s36, 0
      %p224 = por %p222, %p223
      %p225 = scmp.ne.s32.totalorder %s213, %s214
      %p226 = scmp.eq.s32.totalorder %s37, 1
      %p227 = por %p225, %p226
      %p229 = scmp.ne.s32.totalorder %s214, %s228
      %p230 = scmp.eq.s32.totalorder %s37, 0
      %p231 = por %p229, %p230
      %s233 = sadd.s32 %s232, 1
      %p236 = scmp.eq.s32.totalorder %s31, 1
      %p237 = scmp.ne.s32.totalorder %s232, %s234
      %p238 = scmp.eq.s32.totalorder %s31, 0
      %p239 = por %p237, %p238
      %p240 = scmp.ne.s32.totalorder %s232, %s234
      %p241 = scmp.eq.s32.totalorder %s36, 1
      %p242 = por %p240, %p241
      %p243 = scmp.ne.s32.totalorder %s234, %s235
      %p244 = scmp.eq.s32.totalorder %s36, 0
      %p245 = por %p243, %p244
      %p246 = scmp.ne.s32.totalorder %s234, %s235
      %p247 = scmp.eq.s32.totalorder %s37, 1
      %p248 = por %p246, %p247
      %p250 = scmp.ne.s32.totalorder %s235, %s249
      %p251 = scmp.eq.s32.totalorder %s37, 0
      %p252 = por %p250, %p251
      %s254 = sadd.s32 %s253, 1
      %p257 = scmp.eq.s32.totalorder %s31, 1
      %p258 = scmp.ne.s32.totalorder %s253, %s255
      %p259 = scmp.eq.s32.totalorder %s31, 0
      %p260 = por %p258, %p259
      %p261 = scmp.ne.s32.totalorder %s253, %s255
      %p262 = scmp.eq.s32.totalorder %s36, 1
      %p263 = por %p261, %p262
      %p264 = scmp.ne.s32.totalorder %s255, %s256
      %p265 = scmp.eq.s32.totalorder %s36, 0
      %p266 = por %p264, %p265
      %p267 = scmp.ne.s32.totalorder %s255, %s256
      %p268 = scmp.eq.s32.totalorder %s37, 1
      %p269 = por %p267, %p268
      %p271 = scmp.ne.s32.totalorder %s256, %s270
      %p272 = scmp.eq.s32.totalorder %s37, 0
      %p273 = por %p271, %p272
      %s275 = sadd.s32 %s274, 1
      %p278 = scmp.eq.s32.totalorder %s31, 1
      %p279 = scmp.ne.s32.totalorder %s274, %s276
      %p280 = scmp.eq.s32.totalorder %s31, 0
      %p281 = por %p279, %p280
      %p282 = scmp.ne.s32.totalorder %s274, %s276
      %p283 = scmp.eq.s32.totalorder %s36, 1
      %p284 = por %p282, %p283
      %p285 = scmp.ne.s32.totalorder %s276, %s277
      %p286 = scmp.eq.s32.totalorder %s36, 0
      %p287 = por %p285, %p286
      %p288 = scmp.ne.s32.totalorder %s276, %s277
      %p289 = scmp.eq.s32.totalorder %s37, 1
      %p290 = por %p288, %p289
      %p292 = scmp.ne.s32.totalorder %s277, %s291
      %p293 = scmp.eq.s32.totalorder %s37, 0
      %p294 = por %p292, %p293
      %s296 = sadd.s32 %s295, 1
      %p299 = scmp.eq.s32.totalorder %s31, 1
      %p300 = scmp.ne.s32.totalorder %s295, %s297
      %p301 = scmp.eq.s32.totalorder %s31, 0
      %p302 = por %p300, %p301
      %p303 = scmp.ne.s32.totalorder %s295, %s297
      %p304 = scmp.eq.s32.totalorder %s36, 1
      %p305 = por %p303, %p304
      %p306 = scmp.ne.s32.totalorder %s297, %s298
      %p307 = scmp.eq.s32.totalorder %s36, 0
      %p308 = por %p306, %p307
      %p309 = scmp.ne.s32.totalorder %s297, %s298
      %p310 = scmp.eq.s32.totalorder %s37, 1
      %p311 = por %p309, %p310
      %p313 = scmp.ne.s32.totalorder %s298, %s312
      %p314 = scmp.eq.s32.totalorder %s37, 0
      %p315 = por %p313, %p314
      %s317 = sadd.s32 %s316, 1
      %p320 = scmp.eq.s32.totalorder %s31, 1
      %p321 = scmp.ne.s32.totalorder %s316, %s318
      %p322 = scmp.eq.s32.totalorder %s31, 0
      %p323 = por %p321, %p322
      %p324 = scmp.ne.s32.totalorder %s316, %s318
      %p325 = scmp.eq.s32.totalorder %s36, 1
      %p326 = por %p324, %p325
      %p327 = scmp.ne.s32.totalorder %s318, %s319
      %p328 = scmp.eq.s32.totalorder %s36, 0
      %p329 = por %p327, %p328
      %p330 = scmp.ne.s32.totalorder %s318, %s319
      %p331 = scmp.eq.s32.totalorder %s37, 1
      %p332 = por %p330, %p331
      %p334 = scmp.ne.s32.totalorder %s319, %s333
      %p335 = scmp.eq.s32.totalorder %s37, 0
      %p336 = por %p334, %p335
      %s338 = sadd.s32 %s337, 1
      %p341 = scmp.eq.s32.totalorder %s31, 1
      %p342 = scmp.ne.s32.totalorder %s337, %s339
      %p343 = scmp.eq.s32.totalorder %s31, 0
      %p344 = por %p342, %p343
      %p345 = scmp.ne.s32.totalorder %s337, %s339
      %p346 = scmp.eq.s32.totalorder %s36, 1
      %p347 = por %p345, %p346
      %p348 = scmp.ne.s32.totalorder %s339, %s340
      %p349 = scmp.eq.s32.totalorder %s36, 0
      %p350 = por %p348, %p349
      %p351 = scmp.ne.s32.totalorder %s339, %s340
      %p352 = scmp.eq.s32.totalorder %s37, 1
      %p353 = por %p351, %p352
      %p355 = scmp.ne.s32.totalorder %s340, %s354
      %p356 = scmp.eq.s32.totalorder %s37, 0
      %p357 = por %p355, %p356
      %s359 = sadd.s32 %s358, 1
      %p362 = scmp.eq.s32.totalorder %s31, 1
      %p363 = scmp.ne.s32.totalorder %s358, %s360
      %p364 = scmp.eq.s32.totalorder %s31, 0
      %p365 = por %p363, %p364
      %p366 = scmp.ne.s32.totalorder %s358, %s360
      %p367 = scmp.eq.s32.totalorder %s36, 1
      %p368 = por %p366, %p367
      %p369 = scmp.ne.s32.totalorder %s360, %s361
      %p370 = scmp.eq.s32.totalorder %s36, 0
      %p371 = por %p369, %p370
      %p372 = scmp.ne.s32.totalorder %s360, %s361
      %p373 = scmp.eq.s32.totalorder %s37, 1
      %p374 = por %p372, %p373
      %p376 = scmp.ne.s32.totalorder %s361, %s375
      %p377 = scmp.eq.s32.totalorder %s37, 0
      %p378 = por %p376, %p377
      %s380 = sadd.s32 %s379, 1
      %p383 = scmp.eq.s32.totalorder %s31, 1
      %p384 = scmp.ne.s32.totalorder %s379, %s381
      %p385 = scmp.eq.s32.totalorder %s31, 0
      %p386 = por %p384, %p385
      %p387 = scmp.ne.s32.totalorder %s379, %s381
      %p388 = scmp.eq.s32.totalorder %s36, 1
      %p389 = por %p387, %p388
      %p390 = scmp.ne.s32.totalorder %s381, %s382
      %p391 = scmp.eq.s32.totalorder %s36, 0
      %p392 = por %p390, %p391
      %p393 = scmp.ne.s32.totalorder %s381, %s382
      %p394 = scmp.eq.s32.totalorder %s37, 1
      %p395 = por %p393, %p394
      %p397 = scmp.ne.s32.totalorder %s382, %s396
      %p398 = scmp.eq.s32.totalorder %s37, 0
      %p399 = por %p397, %p398
      %s401 = sadd.s32 %s400, 1
      %p404 = scmp.eq.s32.totalorder %s31, 1
      %p405 = scmp.ne.s32.totalorder %s400, %s402
      %p406 = scmp.eq.s32.totalorder %s31, 0
      %p407 = por %p405, %p406
      %p408 = scmp.ne.s32.totalorder %s400, %s402
      %p409 = scmp.eq.s32.totalorder %s36, 1
      %p410 = por %p408, %p409
      %p411 = scmp.ne.s32.totalorder %s402, %s403
      %p412 = scmp.eq.s32.totalorder %s36, 0
      %p413 = por %p411, %p412
      %p414 = scmp.ne.s32.totalorder %s402, %s403
      %p415 = scmp.eq.s32.totalorder %s37, 1
      %p416 = por %p414, %p415
      %p418 = scmp.ne.s32.totalorder %s403, %s417
      %p419 = scmp.eq.s32.totalorder %s37, 0
      %p420 = por %p418, %p419
      %s422 = sadd.s32 %s421, 1
      %p425 = scmp.eq.s32.totalorder %s31, 1
      %p426 = scmp.ne.s32.totalorder %s421, %s423
      %p427 = scmp.eq.s32.totalorder %s31, 0
      %p428 = por %p426, %p427
      %p429 = scmp.ne.s32.totalorder %s421, %s423
      %p430 = scmp.eq.s32.totalorder %s36, 1
      %p431 = por %p429, %p430
      %p432 = scmp.ne.s32.totalorder %s423, %s424
      %p433 = scmp.eq.s32.totalorder %s36, 0
      %p434 = por %p432, %p433
      %p435 = scmp.ne.s32.totalorder %s423, %s424
      %p436 = scmp.eq.s32.totalorder %s37, 1
      %p437 = por %p435, %p436
      %p439 = scmp.ne.s32.totalorder %s424, %s438
      %p440 = scmp.eq.s32.totalorder %s37, 0
      %p441 = por %p439, %p440
      %s443 = sadd.s32 %s442, 1
      %p446 = scmp.eq.s32.totalorder %s31, 1
      %p447 = scmp.ne.s32.totalorder %s442, %s444
      %p448 = scmp.eq.s32.totalorder %s31, 0
      %p449 = por %p447, %p448
      %p450 = scmp.ne.s32.totalorder %s442, %s444
      %p451 = scmp.eq.s32.totalorder %s36, 1
      %p452 = por %p450, %p451
      %p453 = scmp.ne.s32.totalorder %s444, %s445
      %p454 = scmp.eq.s32.totalorder %s36, 0
      %p455 = por %p453, %p454
      %p456 = scmp.ne.s32.totalorder %s444, %s445
      %p457 = scmp.eq.s32.totalorder %s37, 1
      %p458 = por %p456, %p457
      %p460 = scmp.ne.s32.totalorder %s445, %s459
      %p461 = scmp.eq.s32.totalorder %s37, 0
      %p462 = por %p460, %p461
      %s464 = sadd.s32 %s463, 1
      %p467 = scmp.eq.s32.totalorder %s31, 1
      %p468 = scmp.ne.s32.totalorder %s463, %s465
      %p469 = scmp.eq.s32.totalorder %s31, 0
      %p470 = por %p468, %p469
      %p471 = scmp.ne.s32.totalorder %s463, %s465
      %p472 = scmp.eq.s32.totalorder %s36, 1
      %p473 = por %p471, %p472
      %p474 = scmp.ne.s32.totalorder %s465, %s466
      %p475 = scmp.eq.s32.totalorder %s36, 0
      %p476 = por %p474, %p475
      %p477 = scmp.ne.s32.totalorder %s465, %s466
      %p478 = scmp.eq.s32.totalorder %s37, 1
      %p479 = por %p477, %p478
      %p481 = scmp.ne.s32.totalorder %s466, %s480
      %p482 = scmp.eq.s32.totalorder %s37, 0
      %p483 = por %p481, %p482
      %s485 = sadd.s32 %s484, 1
      %p488 = scmp.eq.s32.totalorder %s31, 1
      %p489 = scmp.ne.s32.totalorder %s484, %s486
      %p490 = scmp.eq.s32.totalorder %s31, 0
      %p491 = por %p489, %p490
      %p492 = scmp.ne.s32.totalorder %s484, %s486
      %p493 = scmp.eq.s32.totalorder %s36, 1
      %p494 = por %p492, %p493
      %p495 = scmp.ne.s32.totalorder %s486, %s487
      %p496 = scmp.eq.s32.totalorder %s36, 0
      %p497 = por %p495, %p496
      %p498 = scmp.ne.s32.totalorder %s486, %s487
      %p499 = scmp.eq.s32.totalorder %s37, 1
      %p500 = por %p498, %p499
      %p502 = scmp.ne.s32.totalorder %s487, %s501
      %p503 = scmp.eq.s32.totalorder %s37, 0
      %p504 = por %p502, %p503
      %s505 = ssub.s32 %s31, %s38
      %p506 = scmp.eq.s32.totalorder %s505, 0
      %s508 = sadd.s32 %s507, 1
      %s509 = scalar_select %p506, %s507, %s508
      %p512 = pneg %p506
      %p513 = scmp.eq.s32.totalorder %s31, 1
      %p514 = por %p512, %p513
      %p515 = scmp.ne.s32.totalorder %s507, %s510
      %p516 = scmp.eq.s32.totalorder %s31, 0
      %p517 = por %p515, %p516
      %p518 = scmp.ne.s32.totalorder %s507, %s510
      %p519 = scmp.eq.s32.totalorder %s36, 1
      %p520 = por %p518, %p519
      %p521 = scmp.ne.s32.totalorder %s510, %s511
      %p522 = scmp.eq.s32.totalorder %s36, 0
      %p523 = por %p521, %p522
      %p524 = scmp.ne.s32.totalorder %s510, %s511
      %p525 = scmp.eq.s32.totalorder %s37, 1
      %p526 = por %p524, %p525
      %p528 = scmp.ne.s32.totalorder %s511, %s527
      %p529 = scmp.eq.s32.totalorder %s37, 0
      %p530 = por %p528, %p529
      %p531 = scmp.le.s32.totalorder 1, %s31
      %p532 = scmp.lt.s32.totalorder %s31, 3
      %p533 = pnand %p531, %p532
      %p534 = pneg %p533
      // Predicated region
      $region9: #{tpu_custom_call.1} parent=5 // pred_check
        _
      $region10: #{tpu_custom_call.1} parent=5 // pred_check_branch
        %536 = sbr.rel (%p533) target = $region12
      $region11: #{tpu_custom_call.1} parent=5 // pred_region
        %s537 = ssub.s32 %s31, 1
        // Predicated region
        $region13: #{tpu_custom_call.1} parent=11 // pred_check
          %p538 = pneg %p182
        $region14: #{tpu_custom_call.1} parent=11 // pred_check_branch
          %540 = sbr.rel (%p538) target = $region16
        $region15: #{tpu_custom_call.1} parent=11 // pred_region
          %s542 = ssub.s32 30720, 30720
          %543 = vsyncadd [#allocation4], %s542
          %s544 = sshll.u32 [#allocation3], 4
          %s545 = int_to_ptr.vmem [resolvable:$true] %s544
          %550 = dma.hbm_to_vmem [thread:$0]  %s5, 30720, %s545, [#allocation4], 128, 128, 8
        $region16: #{tpu_custom_call.1} parent=11 // pred_fallthru
          _
        // Predicated region
        $region17: #{tpu_custom_call.1} parent=11 // pred_check
          %p551 = pneg %p203
        $region18: #{tpu_custom_call.1} parent=11 // pred_check_branch
          %553 = sbr.rel (%p551) target = $region20
        $region19: #{tpu_custom_call.1} parent=11 // pred_region
          _
        $region20: #{tpu_custom_call.1} parent=11 // pred_fallthru
          _
        // Predicated region
        $region21: #{tpu_custom_call.1} parent=11 // pred_check
          %p554 = pneg %p224
        $region22: #{tpu_custom_call.1} parent=11 // pred_check_branch
          %556 = sbr.rel (%p554) target = $region24
        $region23: #{tpu_custom_call.1} parent=11 // pred_region
          _
        $region24: #{tpu_custom_call.1} parent=11 // pred_fallthru
          _
        // Predicated region
        $region25: #{tpu_custom_call.1} parent=11 // pred_check
          %p557 = pneg %p245
        $region26: #{tpu_custom_call.1} parent=11 // pred_check_branch
          %559 = sbr.rel (%p557) target = $region28
        $region27: #{tpu_custom_call.1} parent=11 // pred_region
          _
        $region28: #{tpu_custom_call.1} parent=11 // pred_fallthru
          _
        // Predicated region
        $region29: #{tpu_custom_call.1} parent=11 // pred_check
          %p560 = pneg %p266
        $region30: #{tpu_custom_call.1} parent=11 // pred_check_branch
          %562 = sbr.rel (%p560) target = $region32
        $region31: #{tpu_custom_call.1} parent=11 // pred_region
          _
        $region32: #{tpu_custom_call.1} parent=11 // pred_fallthru
          _
        // Predicated region
        $region33: #{tpu_custom_call.1} parent=11 // pred_check
          %p563 = pneg %p287
        $region34: #{tpu_custom_call.1} parent=11 // pred_check_branch
          %565 = sbr.rel (%p563) target = $region36
        $region35: #{tpu_custom_call.1} parent=11 // pred_region
          _
        $region36: #{tpu_custom_call.1} parent=11 // pred_fallthru
          _
        // Predicated region
        $region37: #{tpu_custom_call.1} parent=11 // pred_check
          %p566 = pneg %p308
        $region38: #{tpu_custom_call.1} parent=11 // pred_check_branch
          %568 = sbr.rel (%p566) target = $region40
        $region39: #{tpu_custom_call.1} parent=11 // pred_region
          _
        $region40: #{tpu_custom_call.1} parent=11 // pred_fallthru
          _
        // Predicated region
        $region41: #{tpu_custom_call.1} parent=11 // pred_check
          %p569 = pneg %p329
        $region42: #{tpu_custom_call.1} parent=11 // pred_check_branch
          %571 = sbr.rel (%p569) target = $region44
        $region43: #{tpu_custom_call.1} parent=11 // pred_region
          _
        $region44: #{tpu_custom_call.1} parent=11 // pred_fallthru
          _
        // Predicated region
        $region45: #{tpu_custom_call.1} parent=11 // pred_check
          %p572 = pneg %p350
        $region46: #{tpu_custom_call.1} parent=11 // pred_check_branch
          %574 = sbr.rel (%p572) target = $region48
        $region47: #{tpu_custom_call.1} parent=11 // pred_region
          _
        $region48: #{tpu_custom_call.1} parent=11 // pred_fallthru
          _
        // Predicated region
        $region49: #{tpu_custom_call.1} parent=11 // pred_check
          %p575 = pneg %p371
        $region50: #{tpu_custom_call.1} parent=11 // pred_check_branch
          %577 = sbr.rel (%p575) target = $region52
        $region51: #{tpu_custom_call.1} parent=11 // pred_region
          _
        $region52: #{tpu_custom_call.1} parent=11 // pred_fallthru
          _
        // Predicated region
        $region53: #{tpu_custom_call.1} parent=11 // pred_check
          %p578 = pneg %p392
        $region54: #{tpu_custom_call.1} parent=11 // pred_check_branch
          %580 = sbr.rel (%p578) target = $region56
        $region55: #{tpu_custom_call.1} parent=11 // pred_region
          _
        $region56: #{tpu_custom_call.1} parent=11 // pred_fallthru
          _
        // Predicated region
        $region57: #{tpu_custom_call.1} parent=11 // pred_check
          %p581 = pneg %p413
        $region58: #{tpu_custom_call.1} parent=11 // pred_check_branch
          %583 = sbr.rel (%p581) target = $region60
        $region59: #{tpu_custom_call.1} parent=11 // pred_region
          _
        $region60: #{tpu_custom_call.1} parent=11 // pred_fallthru
          _
        // Predicated region
        $region61: #{tpu_custom_call.1} parent=11 // pred_check
          %p584 = pneg %p434
        $region62: #{tpu_custom_call.1} parent=11 // pred_check_branch
          %586 = sbr.rel (%p584) target = $region64
        $region63: #{tpu_custom_call.1} parent=11 // pred_region
          _
        $region64: #{tpu_custom_call.1} parent=11 // pred_fallthru
          _
        // Predicated region
        $region65: #{tpu_custom_call.1} parent=11 // pred_check
          %p587 = pneg %p455
        $region66: #{tpu_custom_call.1} parent=11 // pred_check_branch
          %589 = sbr.rel (%p587) target = $region68
        $region67: #{tpu_custom_call.1} parent=11 // pred_region
          _
        $region68: #{tpu_custom_call.1} parent=11 // pred_fallthru
          _
        // Predicated region
        $region69: #{tpu_custom_call.1} parent=11 // pred_check
          %p590 = pneg %p476
        $region70: #{tpu_custom_call.1} parent=11 // pred_check_branch
          %592 = sbr.rel (%p590) target = $region72
        $region71: #{tpu_custom_call.1} parent=11 // pred_region
          _
        $region72: #{tpu_custom_call.1} parent=11 // pred_fallthru
          _
        // Predicated region
        $region73: #{tpu_custom_call.1} parent=11 // pred_check
          %p593 = pneg %p497
        $region74: #{tpu_custom_call.1} parent=11 // pred_check_branch
          %595 = sbr.rel (%p593) target = $region76
        $region75: #{tpu_custom_call.1} parent=11 // pred_region
          _
        $region76: #{tpu_custom_call.1} parent=11 // pred_fallthru
          _
      $region12: #{tpu_custom_call.1} parent=5 // pred_fallthru
        _
      %p596 = scmp.lt.s32.totalorder %s31, 2
      // Predicated region
      $region77: #{tpu_custom_call.1} parent=5 // pred_check
        %p597 = pneg %p596
      $region78: #{tpu_custom_call.1} parent=5 // pred_check_branch
        %599 = sbr.rel (%p597) target = $region80
      $region79: #{tpu_custom_call.1} parent=5 // pred_region
        // Predicated region
        $region81: #{tpu_custom_call.1} parent=79 // pred_check
          %p600 = pneg %p51
        $region82: #{tpu_custom_call.1} parent=79 // pred_check_branch
          %602 = sbr.rel (%p600) target = $region84
        $region83: #{tpu_custom_call.1} parent=79 // pred_region
          %p603 = scmp.lt.s32.totalorder %s31, 1
          %s604 = scalar_select %p603, %s31, 1
          %s605 = smul.addr %s604, 8
          %s606 = smul.addr %s605, 8
          %s607 = scalar_lea.vmem %s0, %s606
        $region84: #{tpu_custom_call.1} parent=79 // pred_fallthru
          _
        // Predicated region
        $region85: #{tpu_custom_call.1} parent=79 // pred_check
          %p608 = pneg %p77
        $region86: #{tpu_custom_call.1} parent=79 // pred_check_branch
          %610 = sbr.rel (%p608) target = $region88
        $region87: #{tpu_custom_call.1} parent=79 // pred_region
          %p611 = scmp.lt.s32.totalorder %s31, 1
          %s612 = scalar_select %p611, %s31, 1
          %s613 = scalar_lea.vmem %s1, %s612
        $region88: #{tpu_custom_call.1} parent=79 // pred_fallthru
          _
        // Predicated region
        $region89: #{tpu_custom_call.1} parent=79 // pred_check
          %p614 = pneg %p103
        $region90: #{tpu_custom_call.1} parent=79 // pred_check_branch
          %616 = sbr.rel (%p614) target = $region92
        $region91: #{tpu_custom_call.1} parent=79 // pred_region
          %p617 = scmp.lt.s32.totalorder %s31, 1
          %s618 = scalar_select %p617, %s31, 1
          %s619 = scalar_lea.vmem %s2, %s618
        $region92: #{tpu_custom_call.1} parent=79 // pred_fallthru
          _
        // Predicated region
        $region93: #{tpu_custom_call.1} parent=79 // pred_check
          %p620 = pneg %p129
        $region94: #{tpu_custom_call.1} parent=79 // pred_check_branch
          %622 = sbr.rel (%p620) target = $region96
        $region95: #{tpu_custom_call.1} parent=79 // pred_region
          %p623 = scmp.lt.s32.totalorder %s31, 1
          %s624 = scalar_select %p623, %s31, 1
          %s625 = scalar_lea.vmem %s3, %s624
        $region96: #{tpu_custom_call.1} parent=79 // pred_fallthru
          _
        // Predicated region
        $region97: #{tpu_custom_call.1} parent=79 // pred_check
          %p626 = pneg %p155
        $region98: #{tpu_custom_call.1} parent=79 // pred_check_branch
          %628 = sbr.rel (%p626) target = $region100
        $region99: #{tpu_custom_call.1} parent=79 // pred_region
          %p629 = scmp.lt.s32.totalorder %s31, 1
          %s630 = scalar_select %p629, %s31, 1
          %s631 = smul.addr %s630, 2
          %s632 = scalar_lea.vmem %s4, %s631
        $region100: #{tpu_custom_call.1} parent=79 // pred_fallthru
          _
      $region80: #{tpu_custom_call.1} parent=5 // pred_fallthru
        _
      %p633 = scmp.le.s32.totalorder 1, %s31
      %p634 = scmp.lt.s32.totalorder %s31, 3
      %p635 = pnand %p633, %p634
      %p636 = pneg %p635
      // Predicated region
      $region101: #{tpu_custom_call.1} parent=5 // pred_check
        _
      $region102: #{tpu_custom_call.1} parent=5 // pred_check_branch
        %638 = sbr.rel (%p635) target = $region104
      $region103: #{tpu_custom_call.1} parent=5 // pred_region
        %s639 = ssub.s32 %s31, 1
        // Predicated region
        $region105: #{tpu_custom_call.1} parent=103 // pred_check
          %p640 = pneg %p182
        $region106: #{tpu_custom_call.1} parent=103 // pred_check_branch
          %642 = sbr.rel (%p640) target = $region108
        $region107: #{tpu_custom_call.1} parent=103 // pred_region
          %643 = dma.done [#allocation4], 30720
        $region108: #{tpu_custom_call.1} parent=103 // pred_fallthru
          _
        %p644 = scmp.lt.s32.totalorder %s36, 1
        %s645 = scalar_select %p644, %s36, 1
        %s646 = smul.addr %s645, 8
        %s647 = smul.addr %s646, 8
        %s648 = scalar_lea.vmem %s0, %s647
        %p649 = pneg %p57
        %p650 = pneg %p54
        %p651 = scmp.lt.s32.totalorder %s36, 1
        %s652 = scalar_select %p651, %s36, 1
        %s653 = scalar_lea.vmem %s1, %s652
        %p654 = pneg %p83
        %p655 = pneg %p80
        %p656 = scmp.lt.s32.totalorder %s36, 1
        %s657 = scalar_select %p656, %s36, 1
        %s658 = scalar_lea.vmem %s2, %s657
        %p659 = pneg %p109
        %p660 = pneg %p106
        %p661 = scmp.lt.s32.totalorder %s36, 1
        %s662 = scalar_select %p661, %s36, 1
        %s663 = scalar_lea.vmem %s3, %s662
        %p664 = pneg %p135
        %p665 = pneg %p132
        %p666 = scmp.lt.s32.totalorder %s36, 1
        %s667 = scalar_select %p666, %s36, 1
        %s668 = smul.addr %s667, 2
        %s669 = scalar_lea.vmem %s4, %s668
        %p670 = pneg %p161
        %p671 = pneg %p158
        %p672 = pneg %p182
        %p673 = pneg %p179
        %p674 = pneg %p203
        %p675 = pneg %p200
        %p676 = pneg %p224
        %p677 = pneg %p221
        %p678 = pneg %p245
        %p679 = pneg %p242
        %p680 = pneg %p266
        %p681 = pneg %p263
        %p682 = pneg %p287
        %p683 = pneg %p284
        %p684 = pneg %p308
        %p685 = pneg %p305
        %p686 = pneg %p329
        %p687 = pneg %p326
        %p688 = pneg %p350
        %p689 = pneg %p347
        %p690 = pneg %p371
        %p691 = pneg %p368
        %p692 = pneg %p392
        %p693 = pneg %p389
        %p694 = pneg %p413
        %p695 = pneg %p410
        %p696 = pneg %p434
        %p697 = pneg %p431
        %p698 = pneg %p455
        %p699 = pneg %p452
        %p700 = pneg %p476
        %p701 = pneg %p473
        %p702 = pneg %p497
        %p703 = pneg %p494
        %p704 = pneg %p523
        %p705 = pneg %p520
        %s706 = sand.u32 %s510, 1
        %s707 = scalar_lea.sflag [#allocation5], %s706
        %s708 = sand.u32 %s510, 1
        %s709 = scalar_lea.vmem [#allocation6], %s708
        %p710 = scmp.lt.s32.totalorder %s36, 1
        %s711 = scalar_select %p710, %s36, 1
        %s712 = smul.addr %s711, 8
        %s713 = smul.addr %s712, 8
        %s714 = scalar_lea.vmem %s0, %s713
        %p715 = scmp.lt.s32.totalorder %s36, 1
        %s716 = scalar_select %p715, %s36, 1
        %s717 = scalar_lea.vmem %s1, %s716
        %p718 = scmp.lt.s32.totalorder %s36, 1
        %s719 = scalar_select %p718, %s36, 1
        %s720 = scalar_lea.vmem %s2, %s719
        %p721 = scmp.lt.s32.totalorder %s36, 1
        %s722 = scalar_select %p721, %s36, 1
        %s723 = scalar_lea.vmem %s3, %s722
        %p724 = scmp.lt.s32.totalorder %s36, 1
        %s725 = scalar_select %p724, %s36, 1
        %s726 = smul.addr %s725, 2
        %s727 = scalar_lea.vmem %s4, %s726
        %v728 = vld [vmem:[%s714] sm:$0xff]
        %v729 = vld [vmem:[%s714 + $0x8] sm:$0xff]
        %v730 = vld [vmem:[%s714 + $0x10] sm:$0xff]
        %v731 = vld [vmem:[%s714 + $0x18] sm:$0xff]
        %v732 = vld [vmem:[%s714 + $0x20] sm:$0xff]
        %v733 = vld [vmem:[%s714 + $0x28] sm:$0xff]
        %v734 = vld [vmem:[%s714 + $0x30] sm:$0xff]
        %v735 = vld [vmem:[%s714 + $0x38] sm:$0xff]
        %736 = vst [vmem:[#allocation2 + $0x7] sm:$0x1] 0.0
        %737 = vst [vmem:[#allocation2 + $0x8] sm:$0xff] %v728
        %738 = vst [vmem:[#allocation2 + $0x10] sm:$0xff] %v729
        %739 = vst [vmem:[#allocation2 + $0x18] sm:$0xff] %v730
        %740 = vst [vmem:[#allocation2 + $0x20] sm:$0xff] %v731
        %741 = vst [vmem:[#allocation2 + $0x28] sm:$0xff] %v732
        %742 = vst [vmem:[#allocation2 + $0x30] sm:$0xff] %v733
        %743 = vst [vmem:[#allocation2 + $0x38] sm:$0xff] %v734
        %744 = vst [vmem:[#allocation2 + $0x40] sm:$0xff] %v735
        %745 = vst [vmem:[#allocation2 + $0x48] sm:$0x1] 0.0
        %v746 = vld [vmem:[#allocation2 + $0x7] sm:$0xff]
        %v747 = vld [vmem:[#allocation2 + $0xf] sm:$0xff]
        %v748 = vld [vmem:[#allocation2 + $0x17] sm:$0xff]
        %v749 = vld [vmem:[#allocation2 + $0x1f] sm:$0xff]
        %v750 = vld [vmem:[#allocation2 + $0x27] sm:$0xff]
        %v751 = vld [vmem:[#allocation2 + $0x2f] sm:$0xff]
        %v752 = vld [vmem:[#allocation2 + $0x37] sm:$0xff]
        %v753 = vld [vmem:[#allocation2 + $0x3f] sm:$0xff]
        %v754 = vld [vmem:[#allocation2 + $0x9] sm:$0xff]
        %v755 = vld [vmem:[#allocation2 + $0x11] sm:$0xff]
        %v756 = vld [vmem:[#allocation2 + $0x19] sm:$0xff]
        %v757 = vld [vmem:[#allocation2 + $0x21] sm:$0xff]
        %v758 = vld [vmem:[#allocation2 + $0x29] sm:$0xff]
        %v759 = vld [vmem:[#allocation2 + $0x31] sm:$0xff]
        %v760 = vld [vmem:[#allocation2 + $0x39] sm:$0xff]
        %v761 = vld [vmem:[#allocation2 + $0x41] sm:$0xff]
        %v762 = vld [vmem:[#allocation3] sm:$0xff]
        %v763 = vld [vmem:[#allocation3 + $0x8] sm:$0xff]
        %v764 = vld [vmem:[#allocation3 + $0x10] sm:$0xff]
        %v765 = vld [vmem:[#allocation3 + $0x18] sm:$0xff]
        %v766 = vld [vmem:[#allocation3 + $0x20] sm:$0xff]
        %v767 = vld [vmem:[#allocation3 + $0x28] sm:$0xff]
        %v768 = vld [vmem:[#allocation3 + $0x30] sm:$0xff]
        %v769 = vld [vmem:[#allocation3 + $0x38] sm:$0xff]
        %v770 = vld [vmem:[#allocation3 + $0x40] sm:$0xff]
        %v771 = vld [vmem:[#allocation3 + $0x48] sm:$0xff]
        %v772 = vld [vmem:[#allocation3 + $0x50] sm:$0xff]
        %v773 = vld [vmem:[#allocation3 + $0x58] sm:$0xff]
        %v774 = vld [vmem:[#allocation3 + $0x60] sm:$0xff]
        %v775 = vld [vmem:[#allocation3 + $0x68] sm:$0xff]
        %v776 = vld [vmem:[#allocation3 + $0x70] sm:$0xff]
        %v777 = vld [vmem:[#allocation3 + $0x78] sm:$0xff]
        %v778 = vld [vmem:[#allocation3 + $0x80] sm:$0xff]
        %v779 = vld [vmem:[#allocation3 + $0x88] sm:$0xff]
        %v780 = vld [vmem:[#allocation3 + $0x90] sm:$0xff]
        %v781 = vld [vmem:[#allocation3 + $0x98] sm:$0xff]
        %v782 = vld [vmem:[#allocation3 + $0xa0] sm:$0xff]
        %v783 = vld [vmem:[#allocation3 + $0xa8] sm:$0xff]
        %v784 = vld [vmem:[#allocation3 + $0xb0] sm:$0xff]
        %v785 = vld [vmem:[#allocation3 + $0xb8] sm:$0xff]
        %v786 = vld [vmem:[#allocation3 + $0xc0] sm:$0xff]
        %v787 = vld [vmem:[#allocation3 + $0xc8] sm:$0xff]
        %v788 = vld [vmem:[#allocation3 + $0xd0] sm:$0xff]
        %v789 = vld [vmem:[#allocation3 + $0xd8] sm:$0xff]
        %v790 = vld [vmem:[#allocation3 + $0xe0] sm:$0xff]
        %v791 = vld [vmem:[#allocation3 + $0xe8] sm:$0xff]
        %v792 = vld [vmem:[#allocation3 + $0xf0] sm:$0xff]
        %v793 = vld [vmem:[#allocation3 + $0xf8] sm:$0xff]
        %v794 = vld [vmem:[#allocation3 + $0x100] sm:$0xff]
        %v795 = vld [vmem:[#allocation3 + $0x108] sm:$0xff]
        %v796 = vld [vmem:[#allocation3 + $0x110] sm:$0xff]
        %v797 = vld [vmem:[#allocation3 + $0x118] sm:$0xff]
        %v798 = vld [vmem:[#allocation3 + $0x120] sm:$0xff]
        %v799 = vld [vmem:[#allocation3 + $0x128] sm:$0xff]
        %v800 = vld [vmem:[#allocation3 + $0x130] sm:$0xff]
        %v801 = vld [vmem:[#allocation3 + $0x138] sm:$0xff]
        %v802 = vld [vmem:[#allocation3 + $0x140] sm:$0xff]
        %v803 = vld [vmem:[#allocation3 + $0x148] sm:$0xff]
        %v804 = vld [vmem:[#allocation3 + $0x150] sm:$0xff]
        %v805 = vld [vmem:[#allocation3 + $0x158] sm:$0xff]
        %v806 = vld [vmem:[#allocation3 + $0x160] sm:$0xff]
        %v807 = vld [vmem:[#allocation3 + $0x168] sm:$0xff]
        %v808 = vld [vmem:[#allocation3 + $0x170] sm:$0xff]
        %v809 = vld [vmem:[#allocation3 + $0x178] sm:$0xff]
        %v810 = vld [vmem:[%s6] sm:$0x1]
        %v812 = vlaneseq
        %v813 = vshrl.u32 %v812, 7
        %v814 = vsub.s32 0, %v813
        %v815 = vrot.slane %v810, %v814
        %817 = vmatprep.subr.mxu0 0.0
        %818 = vmatpush1.msra.mxu0 %v762
        %819 = vmatprep.subr.mxu0 0.0
        %820 = vmatpush1.msra.mxu0 %v763
        %821 = vmatprep.subr.mxu0 0.0
        %822 = vmatpush1.msra.mxu0 %v764
        %823 = vmatprep.subr.mxu0 0.0
        %824 = vmatpush1.msra.mxu0 %v765
        %825 = vmatprep.subr.mxu0 0.0
        %826 = vmatpush1.msra.mxu0 %v766
        %827 = vmatprep.subr.mxu0 0.0
        %828 = vmatpush1.msra.mxu0 %v767
        %829 = vmatprep.subr.mxu0 0.0
        %830 = vmatpush1.msra.mxu0 %v768
        %831 = vmatprep.subr.mxu0 0.0
        %832 = vmatpush1.msra.mxu0 %v769
        %833 = vmatprep.subr.mxu0 0.0
        %834 = vmatpush1.msra.mxu0 %v770
        %835 = vmatprep.subr.mxu0 0.0
        %836 = vmatpush1.msra.mxu0 %v771
        %837 = vmatprep.subr.mxu0 0.0
        %838 = vmatpush1.msra.mxu0 %v772
        %839 = vmatprep.subr.mxu0 0.0
        %840 = vmatpush1.msra.mxu0 %v773
        %841 = vmatprep.subr.mxu0 0.0
        %842 = vmatpush1.msra.mxu0 %v774
        %843 = vmatprep.subr.mxu0 0.0
        %844 = vmatpush1.msra.mxu0 %v775
        %845 = vmatprep.subr.mxu0 0.0
        %846 = vmatpush1.msra.mxu0 %v776
        %847 = vmatprep.subr.mxu0 0.0
        %848 = vmatpush1.msra.mxu0 %v777
        %849 = vmatprep.subr.mxu0 0.0
        %850 = vmatpush1.msra.mxu0 %v778
        %851 = vmatprep.subr.mxu0 0.0
        %852 = vmatpush1.msra.mxu0 %v779
        %853 = vmatprep.subr.mxu0 0.0
        %854 = vmatpush1.msra.mxu0 %v780
        %855 = vmatprep.subr.mxu0 0.0
        %856 = vmatpush1.msra.mxu0 %v781
        %857 = vmatprep.subr.mxu0 0.0
        %858 = vmatpush1.msra.mxu0 %v782
        %859 = vmatprep.subr.mxu0 0.0
        %860 = vmatpush1.msra.mxu0 %v783
        %861 = vmatprep.subr.mxu0 0.0
        %862 = vmatpush1.msra.mxu0 %v784
        %863 = vmatprep.subr.mxu0 0.0
        %864 = vmatpush1.msra.mxu0 %v785
        %865 = vmatprep.subr.mxu0 0.0
        %866 = vmatpush1.msra.mxu0 %v786
        %867 = vmatprep.subr.mxu0 0.0
        %868 = vmatpush1.msra.mxu0 %v787
        %869 = vmatprep.subr.mxu0 0.0
        %870 = vmatpush1.msra.mxu0 %v788
        %871 = vmatprep.subr.mxu0 0.0
        %872 = vmatpush1.msra.mxu0 %v789
        %873 = vmatprep.subr.mxu0 0.0
        %874 = vmatpush1.msra.mxu0 %v790
        %875 = vmatprep.subr.mxu0 0.0
        %876 = vmatpush1.msra.mxu0 %v791
        %877 = vmatprep.subr.mxu0 0.0
        %878 = vmatpush1.msra.mxu0 %v792
        %879 = vmatprep.subr.mxu0 0.0
        %880 = vmatpush1.msra.mxu0 %v793
        %881 = vmatprep.mubr.f32.mxu0 %v728
        %882 = vmatmul.mubr.f32.gmra.mrb[0].mxu0 %v746
        %v883 = vpop.f32.mrb[0].mxu0
        %v884 = vadd.f32 %v815, %v883
        %v885 = vpop.f32.mrb[0].mxu0
        %886 = vmatprep.mubr.f32.mxu0 %v729
        %887 = vmatmul.mubr.f32.gmra.mrb[0].mxu0 %v747
        %v888 = vpop.f32.mrb[0].mxu0
        %v889 = vadd.f32 %v815, %v888
        %v890 = vpop.f32.mrb[0].mxu0
        %891 = vmatprep.mubr.f32.mxu0 %v730
        %892 = vmatmul.mubr.f32.gmra.mrb[0].mxu0 %v748
        %v893 = vpop.f32.mrb[0].mxu0
        %v894 = vadd.f32 %v815, %v893
        %v895 = vpop.f32.mrb[0].mxu0
        %896 = vmatprep.mubr.f32.mxu0 %v731
        %897 = vmatmul.mubr.f32.gmra.mrb[0].mxu0 %v749
        %v898 = vpop.f32.mrb[0].mxu0
        %v899 = vadd.f32 %v815, %v898
        %v900 = vpop.f32.mrb[0].mxu0
        %901 = vmatprep.mubr.f32.mxu0 %v732
        %902 = vmatmul.mubr.f32.gmra.mrb[0].mxu0 %v750
        %v903 = vpop.f32.mrb[0].mxu0
        %v904 = vadd.f32 %v815, %v903
        %v905 = vpop.f32.mrb[0].mxu0
        %906 = vmatprep.mubr.f32.mxu0 %v733
        %907 = vmatmul.mubr.f32.gmra.mrb[0].mxu0 %v751
        %v908 = vpop.f32.mrb[0].mxu0
        %v909 = vadd.f32 %v815, %v908
        %v910 = vpop.f32.mrb[0].mxu0
        %911 = vmatprep.mubr.f32.mxu0 %v734
        %912 = vmatmul.mubr.f32.gmra.mrb[0].mxu0 %v752
        %v913 = vpop.f32.mrb[0].mxu0
        %v914 = vadd.f32 %v815, %v913
        %v915 = vpop.f32.mrb[0].mxu0
        %916 = vmatprep.mubr.f32.mxu0 %v735
        %917 = vmatmul.mubr.f32.gmra.mrb[0].mxu0 %v753
        %v918 = vpop.f32.mrb[0].mxu0
        %v919 = vadd.f32 %v815, %v918
        %v920 = vpop.f32.mrb[0].mxu0
        %921 = vdwg.mxu0
        %922 = vmatprep.subr.mxu0 0.0
        %923 = vmatpush1.msra.mxu0 %v794
        %924 = vmatprep.subr.mxu0 0.0
        %925 = vmatpush1.msra.mxu0 %v795
        %926 = vmatprep.subr.mxu0 0.0
        %927 = vmatpush1.msra.mxu0 %v796
        %928 = vmatprep.subr.mxu0 0.0
        %929 = vmatpush1.msra.mxu0 %v797
        %930 = vmatprep.subr.mxu0 0.0
        %931 = vmatpush1.msra.mxu0 %v798
        %932 = vmatprep.subr.mxu0 0.0
        %933 = vmatpush1.msra.mxu0 %v799
        %934 = vmatprep.subr.mxu0 0.0
        %935 = vmatpush1.msra.mxu0 %v800
        %936 = vmatprep.subr.mxu0 0.0
        %937 = vmatpush1.msra.mxu0 %v801
        %938 = vmatprep.subr.mxu0 0.0
        %939 = vmatpush1.msra.mxu0 %v802
        %940 = vmatprep.subr.mxu0 0.0
        %941 = vmatpush1.msra.mxu0 %v803
        %942 = vmatprep.subr.mxu0 0.0
        %943 = vmatpush1.msra.mxu0 %v804
        %944 = vmatprep.subr.mxu0 0.0
        %945 = vmatpush1.msra.mxu0 %v805
        %946 = vmatprep.subr.mxu0 0.0
        %947 = vmatpush1.msra.mxu0 %v806
        %948 = vmatprep.subr.mxu0 0.0
        %949 = vmatpush1.msra.mxu0 %v807
        %950 = vmatprep.subr.mxu0 0.0
        %951 = vmatpush1.msra.mxu0 %v808
        %952 = vmatprep.subr.mxu0 0.0
        %953 = vmatpush1.msra.mxu0 %v809
        %954 = vmatprep.subr.mxu0 0.0
        %955 = vmatpush1.msra.mxu0 0.0
        %956 = vmatprep.subr.mxu0 0.0
        %957 = vmatpush1.msra.mxu0 0.0
        %958 = vmatprep.subr.mxu0 0.0
        %959 = vmatpush1.msra.mxu0 0.0
        %960 = vmatprep.subr.mxu0 0.0
        %961 = vmatpush1.msra.mxu0 0.0
        %962 = vmatprep.subr.mxu0 0.0
        %963 = vmatpush1.msra.mxu0 0.0
        %964 = vmatprep.subr.mxu0 0.0
        %965 = vmatpush1.msra.mxu0 0.0
        %966 = vmatprep.subr.mxu0 0.0
        %967 = vmatpush1.msra.mxu0 0.0
        %968 = vmatprep.subr.mxu0 0.0
        %969 = vmatpush1.msra.mxu0 0.0
        %970 = vmatprep.subr.mxu0 0.0
        %971 = vmatpush1.msra.mxu0 0.0
        %972 = vmatprep.subr.mxu0 0.0
        %973 = vmatpush1.msra.mxu0 0.0
        %974 = vmatprep.subr.mxu0 0.0
        %975 = vmatpush1.msra.mxu0 0.0
        %976 = vmatprep.subr.mxu0 0.0
        %977 = vmatpush1.msra.mxu0 0.0
        %978 = vmatprep.subr.mxu0 0.0
        %979 = vmatpush1.msra.mxu0 0.0
        %980 = vmatprep.subr.mxu0 0.0
        %981 = vmatpush1.msra.mxu0 0.0
        %982 = vmatprep.subr.mxu0 0.0
        %983 = vmatpush1.msra.mxu0 0.0
        %984 = vmatprep.subr.mxu0 0.0
        %985 = vmatpush1.msra.mxu0 0.0
        %986 = vmatprep.mubr.f32.mxu0 0.0
        %987 = vmatmul.mubr.f32.gmra.mrb[0].mxu0 %v754
        %v988 = vpop.f32.mrb[0].mxu0
        %v989 = vadd.f32 %v884, %v988
        %v990 = vpop.f32.mrb[0].mxu0
        %991 = vmatprep.mubr.f32.mxu0 0.0
        %992 = vmatmul.mubr.f32.gmra.mrb[0].mxu0 %v755
        %v993 = vpop.f32.mrb[0].mxu0
        %v994 = vadd.f32 %v889, %v993
        %v995 = vpop.f32.mrb[0].mxu0
        %996 = vmatprep.mubr.f32.mxu0 0.0
        %997 = vmatmul.mubr.f32.gmra.mrb[0].mxu0 %v756
        %v998 = vpop.f32.mrb[0].mxu0
        %v999 = vadd.f32 %v894, %v998
        %v1000 = vpop.f32.mrb[0].mxu0
        %1001 = vmatprep.mubr.f32.mxu0 0.0
        %1002 = vmatmul.mubr.f32.gmra.mrb[0].mxu0 %v757
        %v1003 = vpop.f32.mrb[0].mxu0
        %v1004 = vadd.f32 %v899, %v1003
        %v1005 = vpop.f32.mrb[0].mxu0
        %1006 = vmatprep.mubr.f32.mxu0 0.0
        %1007 = vmatmul.mubr.f32.gmra.mrb[0].mxu0 %v758
        %v1008 = vpop.f32.mrb[0].mxu0
        %v1009 = vadd.f32 %v904, %v1008
        %v1010 = vpop.f32.mrb[0].mxu0
        %1011 = vmatprep.mubr.f32.mxu0 0.0
        %1012 = vmatmul.mubr.f32.gmra.mrb[0].mxu0 %v759
        %v1013 = vpop.f32.mrb[0].mxu0
        %v1014 = vadd.f32 %v909, %v1013
        %v1015 = vpop.f32.mrb[0].mxu0
        %1016 = vmatprep.mubr.f32.mxu0 0.0
        %1017 = vmatmul.mubr.f32.gmra.mrb[0].mxu0 %v760
        %v1018 = vpop.f32.mrb[0].mxu0
        %v1019 = vadd.f32 %v914, %v1018
        %v1020 = vpop.f32.mrb[0].mxu0
        %1021 = vmatprep.mubr.f32.mxu0 0.0
        %1022 = vmatmul.mubr.f32.gmra.mrb[0].mxu0 %v761
        %v1023 = vpop.f32.mrb[0].mxu0
        %v1024 = vadd.f32 %v919, %v1023
        %v1025 = vpop.f32.mrb[0].mxu0
        %1026 = vdwg.mxu0
        %v1027 = vmax.f32 %v989, 0.0
        %v1028 = vmax.f32 %v994, 0.0
        %v1029 = vmax.f32 %v999, 0.0
        %v1030 = vmax.f32 %v1004, 0.0
        %v1031 = vmax.f32 %v1009, 0.0
        %v1032 = vmax.f32 %v1014, 0.0
        %v1033 = vmax.f32 %v1019, 0.0
        %v1034 = vmax.f32 %v1024, 0.0
        %1035 = vst [vmem:[#allocation2 + $0x8] sm:$0xff] %v1027
        %1036 = vst [vmem:[#allocation2 + $0x10] sm:$0xff] %v1028
        %1037 = vst [vmem:[#allocation2 + $0x18] sm:$0xff] %v1029
        %1038 = vst [vmem:[#allocation2 + $0x20] sm:$0xff] %v1030
        %1039 = vst [vmem:[#allocation2 + $0x28] sm:$0xff] %v1031
        %1040 = vst [vmem:[#allocation2 + $0x30] sm:$0xff] %v1032
        %1041 = vst [vmem:[#allocation2 + $0x38] sm:$0xff] %v1033
        %1042 = vst [vmem:[#allocation2 + $0x40] sm:$0xff] %v1034
        %s1043 = scalar_lea.vmem [#allocation2], 8
        %v1044 = vld [vmem:[%s1043] ss:$2 sm:$0xff]
        %s1045 = scalar_lea.vmem [#allocation2], 24
        %v1046 = vld [vmem:[%s1045] ss:$2 sm:$0xff]
        %s1047 = scalar_lea.vmem [#allocation2], 40
        %v1048 = vld [vmem:[%s1047] ss:$2 sm:$0xff]
        %s1049 = scalar_lea.vmem [#allocation2], 56
        %v1050 = vld [vmem:[%s1049] ss:$2 sm:$0xff]
        %s1051 = scalar_lea.vmem [#allocation2], 9
        %v1052 = vld [vmem:[%s1051] ss:$2 sm:$0xff]
        %s1053 = scalar_lea.vmem [#allocation2], 25
        %v1054 = vld [vmem:[%s1053] ss:$2 sm:$0xff]
        %s1055 = scalar_lea.vmem [#allocation2], 41
        %v1056 = vld [vmem:[%s1055] ss:$2 sm:$0xff]
        %s1057 = scalar_lea.vmem [#allocation2], 57
        %v1058 = vld [vmem:[%s1057] ss:$2 sm:$0xff]
        %v1059 = vmax.f32 %v1044, %v1052
        %v1060 = vmax.f32 %v1046, %v1054
        %v1061 = vmax.f32 %v1048, %v1056
        %v1062 = vmax.f32 %v1050, %v1058
        %1063 = vst [vmem:[#allocation2 + $0x7] sm:$0x1] 0.0
        %1064 = vst [vmem:[#allocation2 + $0x8] sm:$0xff] %v1059
        %1065 = vst [vmem:[#allocation2 + $0x10] sm:$0xff] %v1060
        %1066 = vst [vmem:[#allocation2 + $0x18] sm:$0xff] %v1061
        %1067 = vst [vmem:[#allocation2 + $0x20] sm:$0xff] %v1062
        %1068 = vst [vmem:[#allocation2 + $0x28] sm:$0x1] 0.0
        %v1069 = vld [vmem:[#allocation2 + $0x7] sm:$0xff]
        %v1070 = vld [vmem:[#allocation2 + $0xf] sm:$0xff]
        %v1071 = vld [vmem:[#allocation2 + $0x17] sm:$0xff]
        %v1072 = vld [vmem:[#allocation2 + $0x1f] sm:$0xff]
        %v1073 = vld [vmem:[#allocation2 + $0x9] sm:$0xff]
        %v1074 = vld [vmem:[#allocation2 + $0x11] sm:$0xff]
        %v1075 = vld [vmem:[#allocation2 + $0x19] sm:$0xff]
        %v1076 = vld [vmem:[#allocation2 + $0x21] sm:$0xff]
        %s1077 = scalar_lea.vmem [#allocation3], 384
        %v1078 = vld [vmem:[%s1077] sm:$0xff]
        %v1079 = vld [vmem:[%s1077 + $0x8] sm:$0xff]
        %v1080 = vld [vmem:[%s1077 + $0x10] sm:$0xff]
        %v1081 = vld [vmem:[%s1077 + $0x18] sm:$0xff]
        %v1082 = vld [vmem:[%s1077 + $0x20] sm:$0xff]
        %v1083 = vld [vmem:[%s1077 + $0x28] sm:$0xff]
        %v1084 = vld [vmem:[%s1077 + $0x30] sm:$0xff]
        %v1085 = vld [vmem:[%s1077 + $0x38] sm:$0xff]
        %v1086 = vld [vmem:[%s1077 + $0x40] sm:$0xff]
        %v1087 = vld [vmem:[%s1077 + $0x48] sm:$0xff]
        %v1088 = vld [vmem:[%s1077 + $0x50] sm:$0xff]
        %v1089 = vld [vmem:[%s1077 + $0x58] sm:$0xff]
        %v1090 = vld [vmem:[%s1077 + $0x60] sm:$0xff]
        %v1091 = vld [vmem:[%s1077 + $0x68] sm:$0xff]
        %v1092 = vld [vmem:[%s1077 + $0x70] sm:$0xff]
        %v1093 = vld [vmem:[%s1077 + $0x78] sm:$0xff]
        %v1094 = vld [vmem:[%s1077 + $0x80] sm:$0xff]
        %v1095 = vld [vmem:[%s1077 + $0x88] sm:$0xff]
        %v1096 = vld [vmem:[%s1077 + $0x90] sm:$0xff]
        %v1097 = vld [vmem:[%s1077 + $0x98] sm:$0xff]
        %v1098 = vld [vmem:[%s1077 + $0xa0] sm:$0xff]
        %v1099 = vld [vmem:[%s1077 + $0xa8] sm:$0xff]
        %v1100 = vld [vmem:[%s1077 + $0xb0] sm:$0xff]
        %v1101 = vld [vmem:[%s1077 + $0xb8] sm:$0xff]
        %v1102 = vld [vmem:[%s1077 + $0xc0] sm:$0xff]
        %v1103 = vld [vmem:[%s1077 + $0xc8] sm:$0xff]
        %v1104 = vld [vmem:[%s1077 + $0xd0] sm:$0xff]
        %v1105 = vld [vmem:[%s1077 + $0xd8] sm:$0xff]
        %v1106 = vld [vmem:[%s1077 + $0xe0] sm:$0xff]
        %v1107 = vld [vmem:[%s1077 + $0xe8] sm:$0xff]
        %v1108 = vld [vmem:[%s1077 + $0xf0] sm:$0xff]
        %v1109 = vld [vmem:[%s1077 + $0xf8] sm:$0xff]
        %v1110 = vld [vmem:[%s1077 + $0x100] sm:$0xff]
        %v1111 = vld [vmem:[%s1077 + $0x108] sm:$0xff]
        %v1112 = vld [vmem:[%s1077 + $0x110] sm:$0xff]
        %v1113 = vld [vmem:[%s1077 + $0x118] sm:$0xff]
        %v1114 = vld [vmem:[%s1077 + $0x120] sm:$0xff]
        %v1115 = vld [vmem:[%s1077 + $0x128] sm:$0xff]
        %v1116 = vld [vmem:[%s1077 + $0x130] sm:$0xff]
        %v1117 = vld [vmem:[%s1077 + $0x138] sm:$0xff]
        %v1118 = vld [vmem:[%s1077 + $0x140] sm:$0xff]
        %v1119 = vld [vmem:[%s1077 + $0x148] sm:$0xff]
        %v1120 = vld [vmem:[%s1077 + $0x150] sm:$0xff]
        %v1121 = vld [vmem:[%s1077 + $0x158] sm:$0xff]
        %v1122 = vld [vmem:[%s1077 + $0x160] sm:$0xff]
        %v1123 = vld [vmem:[%s1077 + $0x168] sm:$0xff]
        %v1124 = vld [vmem:[%s1077 + $0x170] sm:$0xff]
        %v1125 = vld [vmem:[%s1077 + $0x178] sm:$0xff]
        %s1126 = scalar_lea.vmem %s6, 1
        %v1127 = vld [vmem:[%s1126] sm:$0x1]
        %v1129 = vlaneseq
        %v1130 = vshrl.u32 %v1129, 7
        %v1131 = vsub.s32 0, %v1130
        %v1132 = vrot.slane %v1127, %v1131
        %1134 = vmatprep.subr.mxu0 0.0
        %1135 = vmatpush1.msra.mxu0 %v1078
        %1136 = vmatprep.subr.mxu0 0.0
        %1137 = vmatpush1.msra.mxu0 %v1079
        %1138 = vmatprep.subr.mxu0 0.0
        %1139 = vmatpush1.msra.mxu0 %v1080
        %1140 = vmatprep.subr.mxu0 0.0
        %1141 = vmatpush1.msra.mxu0 %v1081
        %1142 = vmatprep.subr.mxu0 0.0
        %1143 = vmatpush1.msra.mxu0 %v1082
        %1144 = vmatprep.subr.mxu0 0.0
        %1145 = vmatpush1.msra.mxu0 %v1083
        %1146 = vmatprep.subr.mxu0 0.0
        %1147 = vmatpush1.msra.mxu0 %v1084
        %1148 = vmatprep.subr.mxu0 0.0
        %1149 = vmatpush1.msra.mxu0 %v1085
        %1150 = vmatprep.subr.mxu0 0.0
        %1151 = vmatpush1.msra.mxu0 %v1086
        %1152 = vmatprep.subr.mxu0 0.0
        %1153 = vmatpush1.msra.mxu0 %v1087
        %1154 = vmatprep.subr.mxu0 0.0
        %1155 = vmatpush1.msra.mxu0 %v1088
        %1156 = vmatprep.subr.mxu0 0.0
        %1157 = vmatpush1.msra.mxu0 %v1089
        %1158 = vmatprep.subr.mxu0 0.0
        %1159 = vmatpush1.msra.mxu0 %v1090
        %1160 = vmatprep.subr.mxu0 0.0
        %1161 = vmatpush1.msra.mxu0 %v1091
        %1162 = vmatprep.subr.mxu0 0.0
        %1163 = vmatpush1.msra.mxu0 %v1092
        %1164 = vmatprep.subr.mxu0 0.0
        %1165 = vmatpush1.msra.mxu0 %v1093
        %1166 = vmatprep.subr.mxu0 0.0
        %1167 = vmatpush1.msra.mxu0 %v1094
        %1168 = vmatprep.subr.mxu0 0.0
        %1169 = vmatpush1.msra.mxu0 %v1095
        %1170 = vmatprep.subr.mxu0 0.0
        %1171 = vmatpush1.msra.mxu0 %v1096
        %1172 = vmatprep.subr.mxu0 0.0
        %1173 = vmatpush1.msra.mxu0 %v1097
        %1174 = vmatprep.subr.mxu0 0.0
        %1175 = vmatpush1.msra.mxu0 %v1098
        %1176 = vmatprep.subr.mxu0 0.0
        %1177 = vmatpush1.msra.mxu0 %v1099
        %1178 = vmatprep.subr.mxu0 0.0
        %1179 = vmatpush1.msra.mxu0 %v1100
        %1180 = vmatprep.subr.mxu0 0.0
        %1181 = vmatpush1.msra.mxu0 %v1101
        %1182 = vmatprep.subr.mxu0 0.0
        %1183 = vmatpush1.msra.mxu0 %v1102
        %1184 = vmatprep.subr.mxu0 0.0
        %1185 = vmatpush1.msra.mxu0 %v1103
        %1186 = vmatprep.subr.mxu0 0.0
        %1187 = vmatpush1.msra.mxu0 %v1104
        %1188 = vmatprep.subr.mxu0 0.0
        %1189 = vmatpush1.msra.mxu0 %v1105
        %1190 = vmatprep.subr.mxu0 0.0
        %1191 = vmatpush1.msra.mxu0 %v1106
        %1192 = vmatprep.subr.mxu0 0.0
        %1193 = vmatpush1.msra.mxu0 %v1107
        %1194 = vmatprep.subr.mxu0 0.0
        %1195 = vmatpush1.msra.mxu0 %v1108
        %1196 = vmatprep.subr.mxu0 0.0
        %1197 = vmatpush1.msra.mxu0 %v1109
        %1198 = vmatprep.mubr.f32.mxu0 %v1059
        %1199 = vmatmul.mubr.f32.gmra.mrb[0].mxu0 %v1069
        %v1200 = vpop.f32.mrb[0].mxu0
        %v1201 = vadd.f32 %v1132, %v1200
        %v1202 = vpop.f32.mrb[0].mxu0
        %1203 = vmatprep.mubr.f32.mxu0 %v1060
        %1204 = vmatmul.mubr.f32.gmra.mrb[0].mxu0 %v1070
        %v1205 = vpop.f32.mrb[0].mxu0
        %v1206 = vadd.f32 %v1132, %v1205
        %v1207 = vpop.f32.mrb[0].mxu0
        %1208 = vmatprep.mubr.f32.mxu0 %v1061
        %1209 = vmatmul.mubr.f32.gmra.mrb[0].mxu0 %v1071
        %v1210 = vpop.f32.mrb[0].mxu0
        %v1211 = vadd.f32 %v1132, %v1210
        %v1212 = vpop.f32.mrb[0].mxu0
        %1213 = vmatprep.mubr.f32.mxu0 %v1062
        %1214 = vmatmul.mubr.f32.gmra.mrb[0].mxu0 %v1072
        %v1215 = vpop.f32.mrb[0].mxu0
        %v1216 = vadd.f32 %v1132, %v1215
        %v1217 = vpop.f32.mrb[0].mxu0
        %1218 = vdwg.mxu0
        %1219 = vmatprep.subr.mxu0 0.0
        %1220 = vmatpush1.msra.mxu0 %v1110
        %1221 = vmatprep.subr.mxu0 0.0
        %1222 = vmatpush1.msra.mxu0 %v1111
        %1223 = vmatprep.subr.mxu0 0.0
        %1224 = vmatpush1.msra.mxu0 %v1112
        %1225 = vmatprep.subr.mxu0 0.0
        %1226 = vmatpush1.msra.mxu0 %v1113
        %1227 = vmatprep.subr.mxu0 0.0
        %1228 = vmatpush1.msra.mxu0 %v1114
        %1229 = vmatprep.subr.mxu0 0.0
        %1230 = vmatpush1.msra.mxu0 %v1115
        %1231 = vmatprep.subr.mxu0 0.0
        %1232 = vmatpush1.msra.mxu0 %v1116
        %1233 = vmatprep.subr.mxu0 0.0
        %1234 = vmatpush1.msra.mxu0 %v1117
        %1235 = vmatprep.subr.mxu0 0.0
        %1236 = vmatpush1.msra.mxu0 %v1118
        %1237 = vmatprep.subr.mxu0 0.0
        %1238 = vmatpush1.msra.mxu0 %v1119
        %1239 = vmatprep.subr.mxu0 0.0
        %1240 = vmatpush1.msra.mxu0 %v1120
        %1241 = vmatprep.subr.mxu0 0.0
        %1242 = vmatpush1.msra.mxu0 %v1121
        %1243 = vmatprep.subr.mxu0 0.0
        %1244 = vmatpush1.msra.mxu0 %v1122
        %1245 = vmatprep.subr.mxu0 0.0
        %1246 = vmatpush1.msra.mxu0 %v1123
        %1247 = vmatprep.subr.mxu0 0.0
        %1248 = vmatpush1.msra.mxu0 %v1124
        %1249 = vmatprep.subr.mxu0 0.0
        %1250 = vmatpush1.msra.mxu0 %v1125
        %1251 = vmatprep.subr.mxu0 0.0
        %1252 = vmatpush1.msra.mxu0 0.0
        %1253 = vmatprep.subr.mxu0 0.0
        %1254 = vmatpush1.msra.mxu0 0.0
        %1255 = vmatprep.subr.mxu0 0.0
        %1256 = vmatpush1.msra.mxu0 0.0
        %1257 = vmatprep.subr.mxu0 0.0
        %1258 = vmatpush1.msra.mxu0 0.0
        %1259 = vmatprep.subr.mxu0 0.0
        %1260 = vmatpush1.msra.mxu0 0.0
        %1261 = vmatprep.subr.mxu0 0.0
        %1262 = vmatpush1.msra.mxu0 0.0
        %1263 = vmatprep.subr.mxu0 0.0
        %1264 = vmatpush1.msra.mxu0 0.0
        %1265 = vmatprep.subr.mxu0 0.0
        %1266 = vmatpush1.msra.mxu0 0.0
        %1267 = vmatprep.subr.mxu0 0.0
        %1268 = vmatpush1.msra.mxu0 0.0
        %1269 = vmatprep.subr.mxu0 0.0
        %1270 = vmatpush1.msra.mxu0 0.0
        %1271 = vmatprep.subr.mxu0 0.0
        %1272 = vmatpush1.msra.mxu0 0.0
        %1273 = vmatprep.subr.mxu0 0.0
        %1274 = vmatpush1.msra.mxu0 0.0
        %1275 = vmatprep.subr.mxu0 0.0
        %1276 = vmatpush1.msra.mxu0 0.0
        %1277 = vmatprep.subr.mxu0 0.0
        %1278 = vmatpush1.msra.mxu0 0.0
        %1279 = vmatprep.subr.mxu0 0.0
        %1280 = vmatpush1.msra.mxu0 0.0
        %1281 = vmatprep.subr.mxu0 0.0
        %1282 = vmatpush1.msra.mxu0 0.0
        %1283 = vmatprep.mubr.f32.mxu0 0.0
        %1284 = vmatmul.mubr.f32.gmra.mrb[0].mxu0 %v1073
        %v1285 = vpop.f32.mrb[0].mxu0
        %v1286 = vadd.f32 %v1201, %v1285
        %v1287 = vpop.f32.mrb[0].mxu0
        %1288 = vmatprep.mubr.f32.mxu0 0.0
        %1289 = vmatmul.mubr.f32.gmra.mrb[0].mxu0 %v1074
        %v1290 = vpop.f32.mrb[0].mxu0
        %v1291 = vadd.f32 %v1206, %v1290
        %v1292 = vpop.f32.mrb[0].mxu0
        %1293 = vmatprep.mubr.f32.mxu0 0.0
        %1294 = vmatmul.mubr.f32.gmra.mrb[0].mxu0 %v1075
        %v1295 = vpop.f32.mrb[0].mxu0
        %v1296 = vadd.f32 %v1211, %v1295
        %v1297 = vpop.f32.mrb[0].mxu0
        %1298 = vmatprep.mubr.f32.mxu0 0.0
        %1299 = vmatmul.mubr.f32.gmra.mrb[0].mxu0 %v1076
        %v1300 = vpop.f32.mrb[0].mxu0
        %v1301 = vadd.f32 %v1216, %v1300
        %v1302 = vpop.f32.mrb[0].mxu0
        %1303 = vdwg.mxu0
        %v1304 = vmax.f32 %v1286, 0.0
        %v1305 = vmax.f32 %v1291, 0.0
        %v1306 = vmax.f32 %v1296, 0.0
        %v1307 = vmax.f32 %v1301, 0.0
        %1308 = vst [vmem:[#allocation2 + $0x8] sm:$0xff] %v1304
        %1309 = vst [vmem:[#allocation2 + $0x10] sm:$0xff] %v1305
        %1310 = vst [vmem:[#allocation2 + $0x18] sm:$0xff] %v1306
        %1311 = vst [vmem:[#allocation2 + $0x20] sm:$0xff] %v1307
        %v1312 = vld [vmem:[%s1043] ss:$2 sm:$0xff]
        %v1313 = vld [vmem:[%s1045] ss:$2 sm:$0xff]
        %v1314 = vld [vmem:[%s1051] ss:$2 sm:$0xff]
        %v1315 = vld [vmem:[%s1053] ss:$2 sm:$0xff]
        %v1316 = vmax.f32 %v1312, %v1314
        %v1317 = vmax.f32 %v1313, %v1315
        %1318 = vst [vmem:[#allocation2 + $0x7] sm:$0x1] 0.0
        %1319 = vst [vmem:[#allocation2 + $0x8] sm:$0xff] %v1316
        %1320 = vst [vmem:[#allocation2 + $0x10] sm:$0xff] %v1317
        %1321 = vst [vmem:[#allocation2 + $0x18] sm:$0x1] 0.0
        %v1322 = vld [vmem:[#allocation2 + $0x7] sm:$0xff]
        %v1323 = vld [vmem:[#allocation2 + $0xf] sm:$0xff]
        %v1324 = vld [vmem:[#allocation2 + $0x9] sm:$0xff]
        %v1325 = vld [vmem:[#allocation2 + $0x11] sm:$0xff]
        %s1326 = scalar_lea.vmem [#allocation3], 768
        %v1327 = vld [vmem:[%s1326] sm:$0xff]
        %v1328 = vld [vmem:[%s1326 + $0x8] sm:$0xff]
        %v1329 = vld [vmem:[%s1326 + $0x10] sm:$0xff]
        %v1330 = vld [vmem:[%s1326 + $0x18] sm:$0xff]
        %v1331 = vld [vmem:[%s1326 + $0x20] sm:$0xff]
        %v1332 = vld [vmem:[%s1326 + $0x28] sm:$0xff]
        %v1333 = vld [vmem:[%s1326 + $0x30] sm:$0xff]
        %v1334 = vld [vmem:[%s1326 + $0x38] sm:$0xff]
        %v1335 = vld [vmem:[%s1326 + $0x40] sm:$0xff]
        %v1336 = vld [vmem:[%s1326 + $0x48] sm:$0xff]
        %v1337 = vld [vmem:[%s1326 + $0x50] sm:$0xff]
        %v1338 = vld [vmem:[%s1326 + $0x58] sm:$0xff]
        %v1339 = vld [vmem:[%s1326 + $0x60] sm:$0xff]
        %v1340 = vld [vmem:[%s1326 + $0x68] sm:$0xff]
        %v1341 = vld [vmem:[%s1326 + $0x70] sm:$0xff]
        %v1342 = vld [vmem:[%s1326 + $0x78] sm:$0xff]
        %v1343 = vld [vmem:[%s1326 + $0x80] sm:$0xff]
        %v1344 = vld [vmem:[%s1326 + $0x88] sm:$0xff]
        %v1345 = vld [vmem:[%s1326 + $0x90] sm:$0xff]
        %v1346 = vld [vmem:[%s1326 + $0x98] sm:$0xff]
        %v1347 = vld [vmem:[%s1326 + $0xa0] sm:$0xff]
        %v1348 = vld [vmem:[%s1326 + $0xa8] sm:$0xff]
        %v1349 = vld [vmem:[%s1326 + $0xb0] sm:$0xff]
        %v1350 = vld [vmem:[%s1326 + $0xb8] sm:$0xff]
        %v1351 = vld [vmem:[%s1326 + $0xc0] sm:$0xff]
        %v1352 = vld [vmem:[%s1326 + $0xc8] sm:$0xff]
        %v1353 = vld [vmem:[%s1326 + $0xd0] sm:$0xff]
        %v1354 = vld [vmem:[%s1326 + $0xd8] sm:$0xff]
        %v1355 = vld [vmem:[%s1326 + $0xe0] sm:$0xff]
        %v1356 = vld [vmem:[%s1326 + $0xe8] sm:$0xff]
        %v1357 = vld [vmem:[%s1326 + $0xf0] sm:$0xff]
        %v1358 = vld [vmem:[%s1326 + $0xf8] sm:$0xff]
        %v1359 = vld [vmem:[%s1326 + $0x100] sm:$0xff]
        %v1360 = vld [vmem:[%s1326 + $0x108] sm:$0xff]
        %v1361 = vld [vmem:[%s1326 + $0x110] sm:$0xff]
        %v1362 = vld [vmem:[%s1326 + $0x118] sm:$0xff]
        %v1363 = vld [vmem:[%s1326 + $0x120] sm:$0xff]
        %v1364 = vld [vmem:[%s1326 + $0x128] sm:$0xff]
        %v1365 = vld [vmem:[%s1326 + $0x130] sm:$0xff]
        %v1366 = vld [vmem:[%s1326 + $0x138] sm:$0xff]
        %v1367 = vld [vmem:[%s1326 + $0x140] sm:$0xff]
        %v1368 = vld [vmem:[%s1326 + $0x148] sm:$0xff]
        %v1369 = vld [vmem:[%s1326 + $0x150] sm:$0xff]
        %v1370 = vld [vmem:[%s1326 + $0x158] sm:$0xff]
        %v1371 = vld [vmem:[%s1326 + $0x160] sm:$0xff]
        %v1372 = vld [vmem:[%s1326 + $0x168] sm:$0xff]
        %v1373 = vld [vmem:[%s1326 + $0x170] sm:$0xff]
        %v1374 = vld [vmem:[%s1326 + $0x178] sm:$0xff]
        %s1375 = scalar_lea.vmem %s6, 2
        %v1376 = vld [vmem:[%s1375] sm:$0x1]
        %v1378 = vlaneseq
        %v1379 = vshrl.u32 %v1378, 7
        %v1380 = vsub.s32 0, %v1379
        %v1381 = vrot.slane %v1376, %v1380
        %1383 = vmatprep.subr.mxu0 0.0
        %1384 = vmatpush1.msra.mxu0 %v1327
        %1385 = vmatprep.subr.mxu0 0.0
        %1386 = vmatpush1.msra.mxu0 %v1328
        %1387 = vmatprep.subr.mxu0 0.0
        %1388 = vmatpush1.msra.mxu0 %v1329
        %1389 = vmatprep.subr.mxu0 0.0
        %1390 = vmatpush1.msra.mxu0 %v1330
        %1391 = vmatprep.subr.mxu0 0.0
        %1392 = vmatpush1.msra.mxu0 %v1331
        %1393 = vmatprep.subr.mxu0 0.0
        %1394 = vmatpush1.msra.mxu0 %v1332
        %1395 = vmatprep.subr.mxu0 0.0
        %1396 = vmatpush1.msra.mxu0 %v1333
        %1397 = vmatprep.subr.mxu0 0.0
        %1398 = vmatpush1.msra.mxu0 %v1334
        %1399 = vmatprep.subr.mxu0 0.0
        %1400 = vmatpush1.msra.mxu0 %v1335
        %1401 = vmatprep.subr.mxu0 0.0
        %1402 = vmatpush1.msra.mxu0 %v1336
        %1403 = vmatprep.subr.mxu0 0.0
        %1404 = vmatpush1.msra.mxu0 %v1337
        %1405 = vmatprep.subr.mxu0 0.0
        %1406 = vmatpush1.msra.mxu0 %v1338
        %1407 = vmatprep.subr.mxu0 0.0
        %1408 = vmatpush1.msra.mxu0 %v1339
        %1409 = vmatprep.subr.mxu0 0.0
        %1410 = vmatpush1.msra.mxu0 %v1340
        %1411 = vmatprep.subr.mxu0 0.0
        %1412 = vmatpush1.msra.mxu0 %v1341
        %1413 = vmatprep.subr.mxu0 0.0
        %1414 = vmatpush1.msra.mxu0 %v1342
        %1415 = vmatprep.subr.mxu0 0.0
        %1416 = vmatpush1.msra.mxu0 %v1343
        %1417 = vmatprep.subr.mxu0 0.0
        %1418 = vmatpush1.msra.mxu0 %v1344
        %1419 = vmatprep.subr.mxu0 0.0
        %1420 = vmatpush1.msra.mxu0 %v1345
        %1421 = vmatprep.subr.mxu0 0.0
        %1422 = vmatpush1.msra.mxu0 %v1346
        %1423 = vmatprep.subr.mxu0 0.0
        %1424 = vmatpush1.msra.mxu0 %v1347
        %1425 = vmatprep.subr.mxu0 0.0
        %1426 = vmatpush1.msra.mxu0 %v1348
        %1427 = vmatprep.subr.mxu0 0.0
        %1428 = vmatpush1.msra.mxu0 %v1349
        %1429 = vmatprep.subr.mxu0 0.0
        %1430 = vmatpush1.msra.mxu0 %v1350
        %1431 = vmatprep.subr.mxu0 0.0
        %1432 = vmatpush1.msra.mxu0 %v1351
        %1433 = vmatprep.subr.mxu0 0.0
        %1434 = vmatpush1.msra.mxu0 %v1352
        %1435 = vmatprep.subr.mxu0 0.0
        %1436 = vmatpush1.msra.mxu0 %v1353
        %1437 = vmatprep.subr.mxu0 0.0
        %1438 = vmatpush1.msra.mxu0 %v1354
        %1439 = vmatprep.subr.mxu0 0.0
        %1440 = vmatpush1.msra.mxu0 %v1355
        %1441 = vmatprep.subr.mxu0 0.0
        %1442 = vmatpush1.msra.mxu0 %v1356
        %1443 = vmatprep.subr.mxu0 0.0
        %1444 = vmatpush1.msra.mxu0 %v1357
        %1445 = vmatprep.subr.mxu0 0.0
        %1446 = vmatpush1.msra.mxu0 %v1358
        %1447 = vmatprep.mubr.f32.mxu0 %v1316
        %1448 = vmatmul.mubr.f32.gmra.mrb[0].mxu0 %v1322
        %v1449 = vpop.f32.mrb[0].mxu0
        %v1450 = vadd.f32 %v1381, %v1449
        %v1451 = vpop.f32.mrb[0].mxu0
        %1452 = vmatprep.mubr.f32.mxu0 %v1317
        %1453 = vmatmul.mubr.f32.gmra.mrb[0].mxu0 %v1323
        %v1454 = vpop.f32.mrb[0].mxu0
        %v1455 = vadd.f32 %v1381, %v1454
        %v1456 = vpop.f32.mrb[0].mxu0
        %1457 = vdwg.mxu0
        %1458 = vmatprep.subr.mxu0 0.0
        %1459 = vmatpush1.msra.mxu0 %v1359
        %1460 = vmatprep.subr.mxu0 0.0
        %1461 = vmatpush1.msra.mxu0 %v1360
        %1462 = vmatprep.subr.mxu0 0.0
        %1463 = vmatpush1.msra.mxu0 %v1361
        %1464 = vmatprep.subr.mxu0 0.0
        %1465 = vmatpush1.msra.mxu0 %v1362
        %1466 = vmatprep.subr.mxu0 0.0
        %1467 = vmatpush1.msra.mxu0 %v1363
        %1468 = vmatprep.subr.mxu0 0.0
        %1469 = vmatpush1.msra.mxu0 %v1364
        %1470 = vmatprep.subr.mxu0 0.0
        %1471 = vmatpush1.msra.mxu0 %v1365
        %1472 = vmatprep.subr.mxu0 0.0
        %1473 = vmatpush1.msra.mxu0 %v1366
        %1474 = vmatprep.subr.mxu0 0.0
        %1475 = vmatpush1.msra.mxu0 %v1367
        %1476 = vmatprep.subr.mxu0 0.0
        %1477 = vmatpush1.msra.mxu0 %v1368
        %1478 = vmatprep.subr.mxu0 0.0
        %1479 = vmatpush1.msra.mxu0 %v1369
        %1480 = vmatprep.subr.mxu0 0.0
        %1481 = vmatpush1.msra.mxu0 %v1370
        %1482 = vmatprep.subr.mxu0 0.0
        %1483 = vmatpush1.msra.mxu0 %v1371
        %1484 = vmatprep.subr.mxu0 0.0
        %1485 = vmatpush1.msra.mxu0 %v1372
        %1486 = vmatprep.subr.mxu0 0.0
        %1487 = vmatpush1.msra.mxu0 %v1373
        %1488 = vmatprep.subr.mxu0 0.0
        %1489 = vmatpush1.msra.mxu0 %v1374
        %1490 = vmatprep.subr.mxu0 0.0
        %1491 = vmatpush1.msra.mxu0 0.0
        %1492 = vmatprep.subr.mxu0 0.0
        %1493 = vmatpush1.msra.mxu0 0.0
        %1494 = vmatprep.subr.mxu0 0.0
        %1495 = vmatpush1.msra.mxu0 0.0
        %1496 = vmatprep.subr.mxu0 0.0
        %1497 = vmatpush1.msra.mxu0 0.0
        %1498 = vmatprep.subr.mxu0 0.0
        %1499 = vmatpush1.msra.mxu0 0.0
        %1500 = vmatprep.subr.mxu0 0.0
        %1501 = vmatpush1.msra.mxu0 0.0
        %1502 = vmatprep.subr.mxu0 0.0
        %1503 = vmatpush1.msra.mxu0 0.0
        %1504 = vmatprep.subr.mxu0 0.0
        %1505 = vmatpush1.msra.mxu0 0.0
        %1506 = vmatprep.subr.mxu0 0.0
        %1507 = vmatpush1.msra.mxu0 0.0
        %1508 = vmatprep.subr.mxu0 0.0
        %1509 = vmatpush1.msra.mxu0 0.0
        %1510 = vmatprep.subr.mxu0 0.0
        %1511 = vmatpush1.msra.mxu0 0.0
        %1512 = vmatprep.subr.mxu0 0.0
        %1513 = vmatpush1.msra.mxu0 0.0
        %1514 = vmatprep.subr.mxu0 0.0
        %1515 = vmatpush1.msra.mxu0 0.0
        %1516 = vmatprep.subr.mxu0 0.0
        %1517 = vmatpush1.msra.mxu0 0.0
        %1518 = vmatprep.subr.mxu0 0.0
        %1519 = vmatpush1.msra.mxu0 0.0
        %1520 = vmatprep.subr.mxu0 0.0
        %1521 = vmatpush1.msra.mxu0 0.0
        %1522 = vmatprep.mubr.f32.mxu0 0.0
        %1523 = vmatmul.mubr.f32.gmra.mrb[0].mxu0 %v1324
        %v1524 = vpop.f32.mrb[0].mxu0
        %v1525 = vadd.f32 %v1450, %v1524
        %v1526 = vpop.f32.mrb[0].mxu0
        %1527 = vmatprep.mubr.f32.mxu0 0.0
        %1528 = vmatmul.mubr.f32.gmra.mrb[0].mxu0 %v1325
        %v1529 = vpop.f32.mrb[0].mxu0
        %v1530 = vadd.f32 %v1455, %v1529
        %v1531 = vpop.f32.mrb[0].mxu0
        %1532 = vdwg.mxu0
        %v1533 = vmax.f32 %v1525, 0.0
        %v1534 = vmax.f32 %v1530, 0.0
        %1535 = vst [vmem:[#allocation2 + $0x8] sm:$0xff] %v1533
        %1536 = vst [vmem:[#allocation2 + $0x10] sm:$0xff] %v1534
        %v1537 = vld [vmem:[%s1043] ss:$2 sm:$0xff]
        %v1538 = vld [vmem:[%s1051] ss:$2 sm:$0xff]
        %v1539 = vmax.f32 %v1537, %v1538
        %1540 = vst [vmem:[#allocation2 + $0x7] sm:$0x1] 0.0
        %1541 = vst [vmem:[#allocation2 + $0x8] sm:$0xff] %v1539
        %1542 = vst [vmem:[#allocation2 + $0x10] sm:$0x1] 0.0
        %v1543 = vld [vmem:[#allocation2 + $0x7] sm:$0xff]
        %v1544 = vld [vmem:[#allocation2 + $0x9] sm:$0xff]
        %s1545 = scalar_lea.vmem [#allocation3], 1152
        %v1546 = vld [vmem:[%s1545] sm:$0xff]
        %v1547 = vld [vmem:[%s1545 + $0x8] sm:$0xff]
        %v1548 = vld [vmem:[%s1545 + $0x10] sm:$0xff]
        %v1549 = vld [vmem:[%s1545 + $0x18] sm:$0xff]
        %v1550 = vld [vmem:[%s1545 + $0x20] sm:$0xff]
        %v1551 = vld [vmem:[%s1545 + $0x28] sm:$0xff]
        %v1552 = vld [vmem:[%s1545 + $0x30] sm:$0xff]
        %v1553 = vld [vmem:[%s1545 + $0x38] sm:$0xff]
        %v1554 = vld [vmem:[%s1545 + $0x40] sm:$0xff]
        %v1555 = vld [vmem:[%s1545 + $0x48] sm:$0xff]
        %v1556 = vld [vmem:[%s1545 + $0x50] sm:$0xff]
        %v1557 = vld [vmem:[%s1545 + $0x58] sm:$0xff]
        %v1558 = vld [vmem:[%s1545 + $0x60] sm:$0xff]
        %v1559 = vld [vmem:[%s1545 + $0x68] sm:$0xff]
        %v1560 = vld [vmem:[%s1545 + $0x70] sm:$0xff]
        %v1561 = vld [vmem:[%s1545 + $0x78] sm:$0xff]
        %v1562 = vld [vmem:[%s1545 + $0x80] sm:$0xff]
        %v1563 = vld [vmem:[%s1545 + $0x88] sm:$0xff]
        %v1564 = vld [vmem:[%s1545 + $0x90] sm:$0xff]
        %v1565 = vld [vmem:[%s1545 + $0x98] sm:$0xff]
        %v1566 = vld [vmem:[%s1545 + $0xa0] sm:$0xff]
        %v1567 = vld [vmem:[%s1545 + $0xa8] sm:$0xff]
        %v1568 = vld [vmem:[%s1545 + $0xb0] sm:$0xff]
        %v1569 = vld [vmem:[%s1545 + $0xb8] sm:$0xff]
        %v1570 = vld [vmem:[%s1545 + $0xc0] sm:$0xff]
        %v1571 = vld [vmem:[%s1545 + $0xc8] sm:$0xff]
        %v1572 = vld [vmem:[%s1545 + $0xd0] sm:$0xff]
        %v1573 = vld [vmem:[%s1545 + $0xd8] sm:$0xff]
        %v1574 = vld [vmem:[%s1545 + $0xe0] sm:$0xff]
        %v1575 = vld [vmem:[%s1545 + $0xe8] sm:$0xff]
        %v1576 = vld [vmem:[%s1545 + $0xf0] sm:$0xff]
        %v1577 = vld [vmem:[%s1545 + $0xf8] sm:$0xff]
        %v1578 = vld [vmem:[%s1545 + $0x100] sm:$0xff]
        %v1579 = vld [vmem:[%s1545 + $0x108] sm:$0xff]
        %v1580 = vld [vmem:[%s1545 + $0x110] sm:$0xff]
        %v1581 = vld [vmem:[%s1545 + $0x118] sm:$0xff]
        %v1582 = vld [vmem:[%s1545 + $0x120] sm:$0xff]
        %v1583 = vld [vmem:[%s1545 + $0x128] sm:$0xff]
        %v1584 = vld [vmem:[%s1545 + $0x130] sm:$0xff]
        %v1585 = vld [vmem:[%s1545 + $0x138] sm:$0xff]
        %v1586 = vld [vmem:[%s1545 + $0x140] sm:$0xff]
        %v1587 = vld [vmem:[%s1545 + $0x148] sm:$0xff]
        %v1588 = vld [vmem:[%s1545 + $0x150] sm:$0xff]
        %v1589 = vld [vmem:[%s1545 + $0x158] sm:$0xff]
        %v1590 = vld [vmem:[%s1545 + $0x160] sm:$0xff]
        %v1591 = vld [vmem:[%s1545 + $0x168] sm:$0xff]
        %v1592 = vld [vmem:[%s1545 + $0x170] sm:$0xff]
        %v1593 = vld [vmem:[%s1545 + $0x178] sm:$0xff]
        %s1594 = scalar_lea.vmem %s6, 3
        %v1595 = vld [vmem:[%s1594] sm:$0x1]
        %v1597 = vlaneseq
        %v1598 = vshrl.u32 %v1597, 7
        %v1599 = vsub.s32 0, %v1598
        %v1600 = vrot.slane %v1595, %v1599
        %1602 = vmatprep.subr.mxu0 0.0
        %1603 = vmatpush1.msra.mxu0 %v1546
        %1604 = vmatprep.subr.mxu0 0.0
        %1605 = vmatpush1.msra.mxu0 %v1547
        %1606 = vmatprep.subr.mxu0 0.0
        %1607 = vmatpush1.msra.mxu0 %v1548
        %1608 = vmatprep.subr.mxu0 0.0
        %1609 = vmatpush1.msra.mxu0 %v1549
        %1610 = vmatprep.subr.mxu0 0.0
        %1611 = vmatpush1.msra.mxu0 %v1550
        %1612 = vmatprep.subr.mxu0 0.0
        %1613 = vmatpush1.msra.mxu0 %v1551
        %1614 = vmatprep.subr.mxu0 0.0
        %1615 = vmatpush1.msra.mxu0 %v1552
        %1616 = vmatprep.subr.mxu0 0.0
        %1617 = vmatpush1.msra.mxu0 %v1553
        %1618 = vmatprep.subr.mxu0 0.0
        %1619 = vmatpush1.msra.mxu0 %v1554
        %1620 = vmatprep.subr.mxu0 0.0
        %1621 = vmatpush1.msra.mxu0 %v1555
        %1622 = vmatprep.subr.mxu0 0.0
        %1623 = vmatpush1.msra.mxu0 %v1556
        %1624 = vmatprep.subr.mxu0 0.0
        %1625 = vmatpush1.msra.mxu0 %v1557
        %1626 = vmatprep.subr.mxu0 0.0
        %1627 = vmatpush1.msra.mxu0 %v1558
        %1628 = vmatprep.subr.mxu0 0.0
        %1629 = vmatpush1.msra.mxu0 %v1559
        %1630 = vmatprep.subr.mxu0 0.0
        %1631 = vmatpush1.msra.mxu0 %v1560
        %1632 = vmatprep.subr.mxu0 0.0
        %1633 = vmatpush1.msra.mxu0 %v1561
        %1634 = vmatprep.subr.mxu0 0.0
        %1635 = vmatpush1.msra.mxu0 %v1562
        %1636 = vmatprep.subr.mxu0 0.0
        %1637 = vmatpush1.msra.mxu0 %v1563
        %1638 = vmatprep.subr.mxu0 0.0
        %1639 = vmatpush1.msra.mxu0 %v1564
        %1640 = vmatprep.subr.mxu0 0.0
        %1641 = vmatpush1.msra.mxu0 %v1565
        %1642 = vmatprep.subr.mxu0 0.0
        %1643 = vmatpush1.msra.mxu0 %v1566
        %1644 = vmatprep.subr.mxu0 0.0
        %1645 = vmatpush1.msra.mxu0 %v1567
        %1646 = vmatprep.subr.mxu0 0.0
        %1647 = vmatpush1.msra.mxu0 %v1568
        %1648 = vmatprep.subr.mxu0 0.0
        %1649 = vmatpush1.msra.mxu0 %v1569
        %1650 = vmatprep.subr.mxu0 0.0
        %1651 = vmatpush1.msra.mxu0 %v1570
        %1652 = vmatprep.subr.mxu0 0.0
        %1653 = vmatpush1.msra.mxu0 %v1571
        %1654 = vmatprep.subr.mxu0 0.0
        %1655 = vmatpush1.msra.mxu0 %v1572
        %1656 = vmatprep.subr.mxu0 0.0
        %1657 = vmatpush1.msra.mxu0 %v1573
        %1658 = vmatprep.subr.mxu0 0.0
        %1659 = vmatpush1.msra.mxu0 %v1574
        %1660 = vmatprep.subr.mxu0 0.0
        %1661 = vmatpush1.msra.mxu0 %v1575
        %1662 = vmatprep.subr.mxu0 0.0
        %1663 = vmatpush1.msra.mxu0 %v1576
        %1664 = vmatprep.subr.mxu0 0.0
        %1665 = vmatpush1.msra.mxu0 %v1577
        %1666 = vmatprep.mubr.f32.mxu0 %v1539
        %1667 = vmatmul.mubr.f32.gmra.mrb[0].mxu0 %v1543
        %v1668 = vpop.f32.mrb[0].mxu0
        %v1669 = vadd.f32 %v1600, %v1668
        %v1670 = vpop.f32.mrb[0].mxu0
        %1671 = vdwg.mxu0
        %1672 = vmatprep.subr.mxu0 0.0
        %1673 = vmatpush1.msra.mxu0 %v1578
        %1674 = vmatprep.subr.mxu0 0.0
        %1675 = vmatpush1.msra.mxu0 %v1579
        %1676 = vmatprep.subr.mxu0 0.0
        %1677 = vmatpush1.msra.mxu0 %v1580
        %1678 = vmatprep.subr.mxu0 0.0
        %1679 = vmatpush1.msra.mxu0 %v1581
        %1680 = vmatprep.subr.mxu0 0.0
        %1681 = vmatpush1.msra.mxu0 %v1582
        %1682 = vmatprep.subr.mxu0 0.0
        %1683 = vmatpush1.msra.mxu0 %v1583
        %1684 = vmatprep.subr.mxu0 0.0
        %1685 = vmatpush1.msra.mxu0 %v1584
        %1686 = vmatprep.subr.mxu0 0.0
        %1687 = vmatpush1.msra.mxu0 %v1585
        %1688 = vmatprep.subr.mxu0 0.0
        %1689 = vmatpush1.msra.mxu0 %v1586
        %1690 = vmatprep.subr.mxu0 0.0
        %1691 = vmatpush1.msra.mxu0 %v1587
        %1692 = vmatprep.subr.mxu0 0.0
        %1693 = vmatpush1.msra.mxu0 %v1588
        %1694 = vmatprep.subr.mxu0 0.0
        %1695 = vmatpush1.msra.mxu0 %v1589
        %1696 = vmatprep.subr.mxu0 0.0
        %1697 = vmatpush1.msra.mxu0 %v1590
        %1698 = vmatprep.subr.mxu0 0.0
        %1699 = vmatpush1.msra.mxu0 %v1591
        %1700 = vmatprep.subr.mxu0 0.0
        %1701 = vmatpush1.msra.mxu0 %v1592
        %1702 = vmatprep.subr.mxu0 0.0
        %1703 = vmatpush1.msra.mxu0 %v1593
        %1704 = vmatprep.subr.mxu0 0.0
        %1705 = vmatpush1.msra.mxu0 0.0
        %1706 = vmatprep.subr.mxu0 0.0
        %1707 = vmatpush1.msra.mxu0 0.0
        %1708 = vmatprep.subr.mxu0 0.0
        %1709 = vmatpush1.msra.mxu0 0.0
        %1710 = vmatprep.subr.mxu0 0.0
        %1711 = vmatpush1.msra.mxu0 0.0
        %1712 = vmatprep.subr.mxu0 0.0
        %1713 = vmatpush1.msra.mxu0 0.0
        %1714 = vmatprep.subr.mxu0 0.0
        %1715 = vmatpush1.msra.mxu0 0.0
        %1716 = vmatprep.subr.mxu0 0.0
        %1717 = vmatpush1.msra.mxu0 0.0
        %1718 = vmatprep.subr.mxu0 0.0
        %1719 = vmatpush1.msra.mxu0 0.0
        %1720 = vmatprep.subr.mxu0 0.0
        %1721 = vmatpush1.msra.mxu0 0.0
        %1722 = vmatprep.subr.mxu0 0.0
        %1723 = vmatpush1.msra.mxu0 0.0
        %1724 = vmatprep.subr.mxu0 0.0
        %1725 = vmatpush1.msra.mxu0 0.0
        %1726 = vmatprep.subr.mxu0 0.0
        %1727 = vmatpush1.msra.mxu0 0.0
        %1728 = vmatprep.subr.mxu0 0.0
        %1729 = vmatpush1.msra.mxu0 0.0
        %1730 = vmatprep.subr.mxu0 0.0
        %1731 = vmatpush1.msra.mxu0 0.0
        %1732 = vmatprep.subr.mxu0 0.0
        %1733 = vmatpush1.msra.mxu0 0.0
        %1734 = vmatprep.subr.mxu0 0.0
        %1735 = vmatpush1.msra.mxu0 0.0
        %1736 = vmatprep.mubr.f32.mxu0 0.0
        %1737 = vmatmul.mubr.f32.gmra.mrb[0].mxu0 %v1544
        %v1738 = vpop.f32.mrb[0].mxu0
        %v1739 = vadd.f32 %v1669, %v1738
        %v1740 = vpop.f32.mrb[0].mxu0
        %1741 = vdwg.mxu0
        %v1742 = vmax.f32 %v1739, 0.0
        %1743 = vst [vmem:[#allocation2 + $0x8] sm:$0xff] %v1742
        %v1744 = vld [vmem:[%s1043] ss:$2 sm:$0xf]
        %v1745 = vld [vmem:[%s1051] ss:$2 sm:$0xf]
        %v1746 = vmax.f32 %v1744, %v1745
        %1747 = vst [vmem:[#allocation2 + $0x7] sm:$0x1] 0.0
        %1748 = vst [vmem:[#allocation2 + $0x8] sm:$0xf] %v1746
        %1749 = vst [vmem:[#allocation2 + $0xc] sm:$0x1] 0.0
        %v1750 = vld [vmem:[#allocation2 + $0x7] sm:$0xf]
        %v1751 = vld [vmem:[#allocation2 + $0x9] sm:$0xf]
        %s1752 = scalar_lea.vmem [#allocation3], 1536
        %v1753 = vld [vmem:[%s1752] sm:$0xff]
        %v1754 = vld [vmem:[%s1752 + $0x8] sm:$0xff]
        %v1755 = vld [vmem:[%s1752 + $0x10] sm:$0xff]
        %v1756 = vld [vmem:[%s1752 + $0x18] sm:$0xff]
        %v1757 = vld [vmem:[%s1752 + $0x20] sm:$0xff]
        %v1758 = vld [vmem:[%s1752 + $0x28] sm:$0xff]
        %v1759 = vld [vmem:[%s1752 + $0x30] sm:$0xff]
        %v1760 = vld [vmem:[%s1752 + $0x38] sm:$0xff]
        %v1761 = vld [vmem:[%s1752 + $0x40] sm:$0xff]
        %v1762 = vld [vmem:[%s1752 + $0x48] sm:$0xff]
        %v1763 = vld [vmem:[%s1752 + $0x50] sm:$0xff]
        %v1764 = vld [vmem:[%s1752 + $0x58] sm:$0xff]
        %v1765 = vld [vmem:[%s1752 + $0x60] sm:$0xff]
        %v1766 = vld [vmem:[%s1752 + $0x68] sm:$0xff]
        %v1767 = vld [vmem:[%s1752 + $0x70] sm:$0xff]
        %v1768 = vld [vmem:[%s1752 + $0x78] sm:$0xff]
        %v1769 = vld [vmem:[%s1752 + $0x80] sm:$0xff]
        %v1770 = vld [vmem:[%s1752 + $0x88] sm:$0xff]
        %v1771 = vld [vmem:[%s1752 + $0x90] sm:$0xff]
        %v1772 = vld [vmem:[%s1752 + $0x98] sm:$0xff]
        %v1773 = vld [vmem:[%s1752 + $0xa0] sm:$0xff]
        %v1774 = vld [vmem:[%s1752 + $0xa8] sm:$0xff]
        %v1775 = vld [vmem:[%s1752 + $0xb0] sm:$0xff]
        %v1776 = vld [vmem:[%s1752 + $0xb8] sm:$0xff]
        %v1777 = vld [vmem:[%s1752 + $0xc0] sm:$0xff]
        %v1778 = vld [vmem:[%s1752 + $0xc8] sm:$0xff]
        %v1779 = vld [vmem:[%s1752 + $0xd0] sm:$0xff]
        %v1780 = vld [vmem:[%s1752 + $0xd8] sm:$0xff]
        %v1781 = vld [vmem:[%s1752 + $0xe0] sm:$0xff]
        %v1782 = vld [vmem:[%s1752 + $0xe8] sm:$0xff]
        %v1783 = vld [vmem:[%s1752 + $0xf0] sm:$0xff]
        %v1784 = vld [vmem:[%s1752 + $0xf8] sm:$0xff]
        %v1785 = vld [vmem:[%s1752 + $0x100] sm:$0xff]
        %v1786 = vld [vmem:[%s1752 + $0x108] sm:$0xff]
        %v1787 = vld [vmem:[%s1752 + $0x110] sm:$0xff]
        %v1788 = vld [vmem:[%s1752 + $0x118] sm:$0xff]
        %v1789 = vld [vmem:[%s1752 + $0x120] sm:$0xff]
        %v1790 = vld [vmem:[%s1752 + $0x128] sm:$0xff]
        %v1791 = vld [vmem:[%s1752 + $0x130] sm:$0xff]
        %v1792 = vld [vmem:[%s1752 + $0x138] sm:$0xff]
        %v1793 = vld [vmem:[%s1752 + $0x140] sm:$0xff]
        %v1794 = vld [vmem:[%s1752 + $0x148] sm:$0xff]
        %v1795 = vld [vmem:[%s1752 + $0x150] sm:$0xff]
        %v1796 = vld [vmem:[%s1752 + $0x158] sm:$0xff]
        %v1797 = vld [vmem:[%s1752 + $0x160] sm:$0xff]
        %v1798 = vld [vmem:[%s1752 + $0x168] sm:$0xff]
        %v1799 = vld [vmem:[%s1752 + $0x170] sm:$0xff]
        %v1800 = vld [vmem:[%s1752 + $0x178] sm:$0xff]
        %s1801 = scalar_lea.vmem %s6, 4
        %v1802 = vld [vmem:[%s1801] sm:$0x1]
        %v1804 = vlaneseq
        %v1805 = vshrl.u32 %v1804, 7
        %v1806 = vsub.s32 0, %v1805
        %v1807 = vrot.slane %v1802, %v1806
        %1809 = vmatprep.subr.mxu0 0.0
        %1810 = vmatpush1.msra.mxu0 %v1753
        %1811 = vmatprep.subr.mxu0 0.0
        %1812 = vmatpush1.msra.mxu0 %v1754
        %1813 = vmatprep.subr.mxu0 0.0
        %1814 = vmatpush1.msra.mxu0 %v1755
        %1815 = vmatprep.subr.mxu0 0.0
        %1816 = vmatpush1.msra.mxu0 %v1756
        %1817 = vmatprep.subr.mxu0 0.0
        %1818 = vmatpush1.msra.mxu0 %v1757
        %1819 = vmatprep.subr.mxu0 0.0
        %1820 = vmatpush1.msra.mxu0 %v1758
        %1821 = vmatprep.subr.mxu0 0.0
        %1822 = vmatpush1.msra.mxu0 %v1759
        %1823 = vmatprep.subr.mxu0 0.0
        %1824 = vmatpush1.msra.mxu0 %v1760
        %1825 = vmatprep.subr.mxu0 0.0
        %1826 = vmatpush1.msra.mxu0 %v1761
        %1827 = vmatprep.subr.mxu0 0.0
        %1828 = vmatpush1.msra.mxu0 %v1762
        %1829 = vmatprep.subr.mxu0 0.0
        %1830 = vmatpush1.msra.mxu0 %v1763
        %1831 = vmatprep.subr.mxu0 0.0
        %1832 = vmatpush1.msra.mxu0 %v1764
        %1833 = vmatprep.subr.mxu0 0.0
        %1834 = vmatpush1.msra.mxu0 %v1765
        %1835 = vmatprep.subr.mxu0 0.0
        %1836 = vmatpush1.msra.mxu0 %v1766
        %1837 = vmatprep.subr.mxu0 0.0
        %1838 = vmatpush1.msra.mxu0 %v1767
        %1839 = vmatprep.subr.mxu0 0.0
        %1840 = vmatpush1.msra.mxu0 %v1768
        %1841 = vmatprep.subr.mxu0 0.0
        %1842 = vmatpush1.msra.mxu0 %v1769
        %1843 = vmatprep.subr.mxu0 0.0
        %1844 = vmatpush1.msra.mxu0 %v1770
        %1845 = vmatprep.subr.mxu0 0.0
        %1846 = vmatpush1.msra.mxu0 %v1771
        %1847 = vmatprep.subr.mxu0 0.0
        %1848 = vmatpush1.msra.mxu0 %v1772
        %1849 = vmatprep.subr.mxu0 0.0
        %1850 = vmatpush1.msra.mxu0 %v1773
        %1851 = vmatprep.subr.mxu0 0.0
        %1852 = vmatpush1.msra.mxu0 %v1774
        %1853 = vmatprep.subr.mxu0 0.0
        %1854 = vmatpush1.msra.mxu0 %v1775
        %1855 = vmatprep.subr.mxu0 0.0
        %1856 = vmatpush1.msra.mxu0 %v1776
        %1857 = vmatprep.subr.mxu0 0.0
        %1858 = vmatpush1.msra.mxu0 %v1777
        %1859 = vmatprep.subr.mxu0 0.0
        %1860 = vmatpush1.msra.mxu0 %v1778
        %1861 = vmatprep.subr.mxu0 0.0
        %1862 = vmatpush1.msra.mxu0 %v1779
        %1863 = vmatprep.subr.mxu0 0.0
        %1864 = vmatpush1.msra.mxu0 %v1780
        %1865 = vmatprep.subr.mxu0 0.0
        %1866 = vmatpush1.msra.mxu0 %v1781
        %1867 = vmatprep.subr.mxu0 0.0
        %1868 = vmatpush1.msra.mxu0 %v1782
        %1869 = vmatprep.subr.mxu0 0.0
        %1870 = vmatpush1.msra.mxu0 %v1783
        %1871 = vmatprep.subr.mxu0 0.0
        %1872 = vmatpush1.msra.mxu0 %v1784
        %1873 = vmatprep.mubr.f32.mxu0 %v1746
        %1874 = vmatmul.mubr.f32.gmra.mrb[0].mxu0 %v1750
        %v1875 = vpop.f32.mrb[0].mxu0
        %v1876 = vadd.f32 %v1807, %v1875
        %v1877 = vpop.f32.mrb[0].mxu0
        %1878 = vdwg.mxu0
        %1879 = vmatprep.subr.mxu0 0.0
        %1880 = vmatpush1.msra.mxu0 %v1785
        %1881 = vmatprep.subr.mxu0 0.0
        %1882 = vmatpush1.msra.mxu0 %v1786
        %1883 = vmatprep.subr.mxu0 0.0
        %1884 = vmatpush1.msra.mxu0 %v1787
        %1885 = vmatprep.subr.mxu0 0.0
        %1886 = vmatpush1.msra.mxu0 %v1788
        %1887 = vmatprep.subr.mxu0 0.0
        %1888 = vmatpush1.msra.mxu0 %v1789
        %1889 = vmatprep.subr.mxu0 0.0
        %1890 = vmatpush1.msra.mxu0 %v1790
        %1891 = vmatprep.subr.mxu0 0.0
        %1892 = vmatpush1.msra.mxu0 %v1791
        %1893 = vmatprep.subr.mxu0 0.0
        %1894 = vmatpush1.msra.mxu0 %v1792
        %1895 = vmatprep.subr.mxu0 0.0
        %1896 = vmatpush1.msra.mxu0 %v1793
        %1897 = vmatprep.subr.mxu0 0.0
        %1898 = vmatpush1.msra.mxu0 %v1794
        %1899 = vmatprep.subr.mxu0 0.0
        %1900 = vmatpush1.msra.mxu0 %v1795
        %1901 = vmatprep.subr.mxu0 0.0
        %1902 = vmatpush1.msra.mxu0 %v1796
        %1903 = vmatprep.subr.mxu0 0.0
        %1904 = vmatpush1.msra.mxu0 %v1797
        %1905 = vmatprep.subr.mxu0 0.0
        %1906 = vmatpush1.msra.mxu0 %v1798
        %1907 = vmatprep.subr.mxu0 0.0
        %1908 = vmatpush1.msra.mxu0 %v1799
        %1909 = vmatprep.subr.mxu0 0.0
        %1910 = vmatpush1.msra.mxu0 %v1800
        %1911 = vmatprep.subr.mxu0 0.0
        %1912 = vmatpush1.msra.mxu0 0.0
        %1913 = vmatprep.subr.mxu0 0.0
        %1914 = vmatpush1.msra.mxu0 0.0
        %1915 = vmatprep.subr.mxu0 0.0
        %1916 = vmatpush1.msra.mxu0 0.0
        %1917 = vmatprep.subr.mxu0 0.0
        %1918 = vmatpush1.msra.mxu0 0.0
        %1919 = vmatprep.subr.mxu0 0.0
        %1920 = vmatpush1.msra.mxu0 0.0
        %1921 = vmatprep.subr.mxu0 0.0
        %1922 = vmatpush1.msra.mxu0 0.0
        %1923 = vmatprep.subr.mxu0 0.0
        %1924 = vmatpush1.msra.mxu0 0.0
        %1925 = vmatprep.subr.mxu0 0.0
        %1926 = vmatpush1.msra.mxu0 0.0
        %1927 = vmatprep.subr.mxu0 0.0
        %1928 = vmatpush1.msra.mxu0 0.0
        %1929 = vmatprep.subr.mxu0 0.0
        %1930 = vmatpush1.msra.mxu0 0.0
        %1931 = vmatprep.subr.mxu0 0.0
        %1932 = vmatpush1.msra.mxu0 0.0
        %1933 = vmatprep.subr.mxu0 0.0
        %1934 = vmatpush1.msra.mxu0 0.0
        %1935 = vmatprep.subr.mxu0 0.0
        %1936 = vmatpush1.msra.mxu0 0.0
        %1937 = vmatprep.subr.mxu0 0.0
        %1938 = vmatpush1.msra.mxu0 0.0
        %1939 = vmatprep.subr.mxu0 0.0
        %1940 = vmatpush1.msra.mxu0 0.0
        %1941 = vmatprep.subr.mxu0 0.0
        %1942 = vmatpush1.msra.mxu0 0.0
        %1943 = vmatprep.mubr.f32.mxu0 0.0
        %1944 = vmatmul.mubr.f32.gmra.mrb[0].mxu0 %v1751
        %v1945 = vpop.f32.mrb[0].mxu0
        %v1946 = vadd.f32 %v1876, %v1945
        %v1947 = vpop.f32.mrb[0].mxu0
        %1948 = vdwg.mxu0
        %v1949 = vmax.f32 %v1946, 0.0
        %1950 = vst [vmem:[#allocation2 + $0x8] sm:$0xf] %v1949
        %v1951 = vld [vmem:[%s1043] ss:$2 sm:$0x3]
        %v1952 = vld [vmem:[%s1051] ss:$2 sm:$0x3]
        %v1953 = vmax.f32 %v1951, %v1952
        %vm1954 = vcmask 1041408
        %v1955 = vsel %vm1954, %v1953, 0.0
        %v1956 = vrot.slane %v1955, 4
        %v1957 = vadd.f32 %v1955, %v1956
        %v1958 = vrot.slane %v1957, 2
        %v1959 = vadd.f32 %v1957, %v1958
        %v1960 = vrot.slane %v1959, 1
        %v1961 = vadd.f32 %v1959, %v1960
        %v1962 = vrcp.pop 2.0
        %v1963 = vmul.f32 %v1961, %v1962
        %v1964 = vld [vmem:[%s7] sm:$0xff]
        %v1965 = vld [vmem:[%s7 + $0x8] sm:$0xff]
        %v1966 = vld [vmem:[%s7 + $0x10] sm:$0xff]
        %v1967 = vld [vmem:[%s7 + $0x18] sm:$0xff]
        %v1968 = vld [vmem:[%s7 + $0x20] sm:$0xff]
        %v1969 = vld [vmem:[%s7 + $0x28] sm:$0xff]
        %v1970 = vld [vmem:[%s7 + $0x30] sm:$0xff]
        %v1971 = vld [vmem:[%s7 + $0x38] sm:$0xff]
        %v1972 = vld [vmem:[%s7 + $0x40] sm:$0xff]
        %v1973 = vld [vmem:[%s7 + $0x48] sm:$0xff]
        %v1974 = vld [vmem:[%s7 + $0x50] sm:$0xff]
        %v1975 = vld [vmem:[%s7 + $0x58] sm:$0xff]
        %v1976 = vld [vmem:[%s7 + $0x60] sm:$0xff]
        %v1977 = vld [vmem:[%s7 + $0x68] sm:$0xff]
        %v1978 = vld [vmem:[%s7 + $0x70] sm:$0xff]
        %v1979 = vld [vmem:[%s7 + $0x78] sm:$0xff]
        %v1980 = vld [vmem:[%s8] sm:$0x1]
        %1981 = vmatprep.subr.mxu0 0.0
        %1982 = vmatpush1.msra.mxu0 %v1964
        %1983 = vmatprep.subr.mxu0 0.0
        %1984 = vmatpush1.msra.mxu0 %v1965
        %1985 = vmatprep.subr.mxu0 0.0
        %1986 = vmatpush1.msra.mxu0 %v1966
        %1987 = vmatprep.subr.mxu0 0.0
        %1988 = vmatpush1.msra.mxu0 %v1967
        %1989 = vmatprep.subr.mxu0 0.0
        %1990 = vmatpush1.msra.mxu0 %v1968
        %1991 = vmatprep.subr.mxu0 0.0
        %1992 = vmatpush1.msra.mxu0 %v1969
        %1993 = vmatprep.subr.mxu0 0.0
        %1994 = vmatpush1.msra.mxu0 %v1970
        %1995 = vmatprep.subr.mxu0 0.0
        %1996 = vmatpush1.msra.mxu0 %v1971
        %1997 = vmatprep.subr.mxu0 0.0
        %1998 = vmatpush1.msra.mxu0 %v1972
        %1999 = vmatprep.subr.mxu0 0.0
        %2000 = vmatpush1.msra.mxu0 %v1973
        %2001 = vmatprep.subr.mxu0 0.0
        %2002 = vmatpush1.msra.mxu0 %v1974
        %2003 = vmatprep.subr.mxu0 0.0
        %2004 = vmatpush1.msra.mxu0 %v1975
        %2005 = vmatprep.subr.mxu0 0.0
        %2006 = vmatpush1.msra.mxu0 %v1976
        %2007 = vmatprep.subr.mxu0 0.0
        %2008 = vmatpush1.msra.mxu0 %v1977
        %2009 = vmatprep.subr.mxu0 0.0
        %2010 = vmatpush1.msra.mxu0 %v1978
        %2011 = vmatprep.subr.mxu0 0.0
        %2012 = vmatpush1.msra.mxu0 %v1979
        %2013 = vmatprep.subr.mxu0 0.0
        %2014 = vmatpush1.msra.mxu0 0.0
        %2015 = vmatprep.subr.mxu0 0.0
        %2016 = vmatpush1.msra.mxu0 0.0
        %2017 = vmatprep.subr.mxu0 0.0
        %2018 = vmatpush1.msra.mxu0 0.0
        %2019 = vmatprep.subr.mxu0 0.0
        %2020 = vmatpush1.msra.mxu0 0.0
        %2021 = vmatprep.subr.mxu0 0.0
        %2022 = vmatpush1.msra.mxu0 0.0
        %2023 = vmatprep.subr.mxu0 0.0
        %2024 = vmatpush1.msra.mxu0 0.0
        %2025 = vmatprep.subr.mxu0 0.0
        %2026 = vmatpush1.msra.mxu0 0.0
        %2027 = vmatprep.subr.mxu0 0.0
        %2028 = vmatpush1.msra.mxu0 0.0
        %2029 = vmatprep.subr.mxu0 0.0
        %2030 = vmatpush1.msra.mxu0 0.0
        %2031 = vmatprep.subr.mxu0 0.0
        %2032 = vmatpush1.msra.mxu0 0.0
        %2033 = vmatprep.subr.mxu0 0.0
        %2034 = vmatpush1.msra.mxu0 0.0
        %2035 = vmatprep.subr.mxu0 0.0
        %2036 = vmatpush1.msra.mxu0 0.0
        %2037 = vmatprep.subr.mxu0 0.0
        %2038 = vmatpush1.msra.mxu0 0.0
        %2039 = vmatprep.subr.mxu0 0.0
        %2040 = vmatpush1.msra.mxu0 0.0
        %2041 = vmatprep.subr.mxu0 0.0
        %2042 = vmatpush1.msra.mxu0 0.0
        %2043 = vmatprep.subr.mxu0 0.0
        %2044 = vmatpush1.msra.mxu0 0.0
        %2045 = vmatprep.mubr.f32.mxu0 0.0
        %2046 = vmatmul.mubr.f32.gmra.mrb[0].mxu0 %v1963
        %v2047 = vpop.f32.mrb[0].mxu0
        %v2048 = vadd.f32 %v1980, %v2047
        %v2049 = vpop.f32.mrb[0].mxu0
        %2050 = vdwg.mxu0
        %v2051 = vld [vmem:[%s727] sm:$0x3]
        %v2052 = vld [vmem:[%s9] sm:$0xff]
        %v2053 = vld [vmem:[%s9 + $0x8] sm:$0xff]
        %v2054 = vld [vmem:[%s9 + $0x10] sm:$0xff]
        %v2055 = vld [vmem:[%s9 + $0x18] sm:$0xff]
        %v2056 = vld [vmem:[%s9 + $0x20] sm:$0xff]
        %v2057 = vld [vmem:[%s9 + $0x28] sm:$0xff]
        %v2058 = vld [vmem:[%s9 + $0x30] sm:$0xff]
        %v2059 = vld [vmem:[%s9 + $0x38] sm:$0xff]
        %v2060 = vld [vmem:[%s9 + $0x40] sm:$0xff]
        %v2061 = vld [vmem:[%s9 + $0x48] sm:$0xff]
        %v2062 = vld [vmem:[%s9 + $0x50] sm:$0xff]
        %v2063 = vld [vmem:[%s9 + $0x58] sm:$0xff]
        %v2064 = vld [vmem:[%s9 + $0x60] sm:$0xff]
        %v2065 = vld [vmem:[%s9 + $0x68] sm:$0xff]
        %v2066 = vld [vmem:[%s9 + $0x70] sm:$0xff]
        %v2067 = vld [vmem:[%s9 + $0x78] sm:$0xff]
        %v2068 = vld [vmem:[%s9 + $0x80] sm:$0xff]
        %v2069 = vld [vmem:[%s9 + $0x88] sm:$0xff]
        %v2070 = vld [vmem:[%s9 + $0x90] sm:$0xff]
        %v2071 = vld [vmem:[%s9 + $0x98] sm:$0xff]
        %v2072 = vld [vmem:[%s9 + $0xa0] sm:$0xff]
        %v2073 = vld [vmem:[%s9 + $0xa8] sm:$0xff]
        %v2074 = vld [vmem:[%s9 + $0xb0] sm:$0xff]
        %v2075 = vld [vmem:[%s9 + $0xb8] sm:$0xff]
        %v2076 = vld [vmem:[%s9 + $0xc0] sm:$0xff]
        %v2077 = vld [vmem:[%s9 + $0xc8] sm:$0xff]
        %v2078 = vld [vmem:[%s9 + $0xd0] sm:$0xff]
        %v2079 = vld [vmem:[%s9 + $0xd8] sm:$0xff]
        %v2080 = vld [vmem:[%s9 + $0xe0] sm:$0xff]
        %v2081 = vld [vmem:[%s9 + $0xe8] sm:$0xff]
        %v2082 = vld [vmem:[%s9 + $0xf0] sm:$0xff]
        %v2083 = vld [vmem:[%s9 + $0xf8] sm:$0xff]
        %v2084 = vld [vmem:[%s10] sm:$0x1]
        %v2086 = vlaneseq
        %v2087 = vshrl.u32 %v2086, 7
        %v2088 = vsub.s32 0, %v2087
        %v2089 = vrot.slane %v2051, %v2088
        %v2090 = vlaneseq
        %v2091 = vshrl.u32 %v2090, 7
        %v2092 = vsub.s32 1, %v2091
        %v2093 = vrot.slane %v2051, %v2092
        %2096 = vmatprep.subr.mxu0 0.0
        %2097 = vmatpush1.msra.mxu0 %v2052
        %2098 = vmatprep.subr.mxu0 0.0
        %2099 = vmatpush1.msra.mxu0 %v2053
        %2100 = vmatprep.subr.mxu0 0.0
        %2101 = vmatpush1.msra.mxu0 %v2054
        %2102 = vmatprep.subr.mxu0 0.0
        %2103 = vmatpush1.msra.mxu0 %v2055
        %2104 = vmatprep.subr.mxu0 0.0
        %2105 = vmatpush1.msra.mxu0 %v2056
        %2106 = vmatprep.subr.mxu0 0.0
        %2107 = vmatpush1.msra.mxu0 %v2057
        %2108 = vmatprep.subr.mxu0 0.0
        %2109 = vmatpush1.msra.mxu0 %v2058
        %2110 = vmatprep.subr.mxu0 0.0
        %2111 = vmatpush1.msra.mxu0 %v2059
        %2112 = vmatprep.subr.mxu0 0.0
        %2113 = vmatpush1.msra.mxu0 %v2060
        %2114 = vmatprep.subr.mxu0 0.0
        %2115 = vmatpush1.msra.mxu0 %v2061
        %2116 = vmatprep.subr.mxu0 0.0
        %2117 = vmatpush1.msra.mxu0 %v2062
        %2118 = vmatprep.subr.mxu0 0.0
        %2119 = vmatpush1.msra.mxu0 %v2063
        %2120 = vmatprep.subr.mxu0 0.0
        %2121 = vmatpush1.msra.mxu0 %v2064
        %2122 = vmatprep.subr.mxu0 0.0
        %2123 = vmatpush1.msra.mxu0 %v2065
        %2124 = vmatprep.subr.mxu0 0.0
        %2125 = vmatpush1.msra.mxu0 %v2066
        %2126 = vmatprep.subr.mxu0 0.0
        %2127 = vmatpush1.msra.mxu0 %v2067
        %2128 = vmatprep.subr.mxu0 0.0
        %2129 = vmatpush1.msra.mxu0 %v2068
        %2130 = vmatprep.subr.mxu0 0.0
        %2131 = vmatpush1.msra.mxu0 %v2069
        %2132 = vmatprep.subr.mxu0 0.0
        %2133 = vmatpush1.msra.mxu0 %v2070
        %2134 = vmatprep.subr.mxu0 0.0
        %2135 = vmatpush1.msra.mxu0 %v2071
        %2136 = vmatprep.subr.mxu0 0.0
        %2137 = vmatpush1.msra.mxu0 %v2072
        %2138 = vmatprep.subr.mxu0 0.0
        %2139 = vmatpush1.msra.mxu0 %v2073
        %2140 = vmatprep.subr.mxu0 0.0
        %2141 = vmatpush1.msra.mxu0 %v2074
        %2142 = vmatprep.subr.mxu0 0.0
        %2143 = vmatpush1.msra.mxu0 %v2075
        %2144 = vmatprep.subr.mxu0 0.0
        %2145 = vmatpush1.msra.mxu0 %v2076
        %2146 = vmatprep.subr.mxu0 0.0
        %2147 = vmatpush1.msra.mxu0 %v2077
        %2148 = vmatprep.subr.mxu0 0.0
        %2149 = vmatpush1.msra.mxu0 %v2078
        %2150 = vmatprep.subr.mxu0 0.0
        %2151 = vmatpush1.msra.mxu0 %v2079
        %2152 = vmatprep.subr.mxu0 0.0
        %2153 = vmatpush1.msra.mxu0 %v2080
        %2154 = vmatprep.subr.mxu0 0.0
        %2155 = vmatpush1.msra.mxu0 %v2081
        %2156 = vmatprep.subr.mxu0 0.0
        %2157 = vmatpush1.msra.mxu0 %v2082
        %2158 = vmatprep.subr.mxu0 0.0
        %2159 = vmatpush1.msra.mxu0 %v2083
        %2160 = vmatprep.mubr.f32.mxu0 %v2093
        %2161 = vmatmul.mubr.f32.gmra.mrb[0].mxu0 %v2089
        %v2162 = vpop.f32.mrb[0].mxu0
        %v2163 = vadd.f32 %v2084, %v2162
        %v2164 = vpop.f32.mrb[0].mxu0
        %2165 = vdwg.mxu0
        %v2166 = vmax.f32 %v2163, 0.0
        %v2167 = vld [vmem:[%s11] sm:$0xff]
        %v2168 = vld [vmem:[%s11 + $0x8] sm:$0xff]
        %v2169 = vld [vmem:[%s11 + $0x10] sm:$0xff]
        %v2170 = vld [vmem:[%s11 + $0x18] sm:$0xff]
        %v2171 = vld [vmem:[%s11 + $0x20] sm:$0xff]
        %v2172 = vld [vmem:[%s11 + $0x28] sm:$0xff]
        %v2173 = vld [vmem:[%s11 + $0x30] sm:$0xff]
        %v2174 = vld [vmem:[%s11 + $0x38] sm:$0xff]
        %v2175 = vld [vmem:[%s723] sm:$0x1]
        %v2176 = vld [vmem:[%s12] sm:$0xff]
        %v2177 = vld [vmem:[%s12 + $0x8] sm:$0xff]
        %v2178 = vld [vmem:[%s12 + $0x10] sm:$0xff]
        %v2179 = vld [vmem:[%s12 + $0x18] sm:$0xff]
        %v2180 = vld [vmem:[%s12 + $0x20] sm:$0xff]
        %v2181 = vld [vmem:[%s12 + $0x28] sm:$0xff]
        %v2182 = vld [vmem:[%s12 + $0x30] sm:$0xff]
        %v2183 = vld [vmem:[%s12 + $0x38] sm:$0xff]
        %vm2184 = vcmask 523264
        %v2186 = vsel %vm2184, %v2175, 0
        %2188 = vmatprep.subr.mxu0 0.0
        %2189 = vmatpush1.msra.mxu0 %v2176
        %2190 = vmatprep.subr.mxu0 0.0
        %2191 = vmatpush1.msra.mxu0 %v2177
        %2192 = vmatprep.subr.mxu0 0.0
        %2193 = vmatpush1.msra.mxu0 %v2178
        %2194 = vmatprep.subr.mxu0 0.0
        %2195 = vmatpush1.msra.mxu0 %v2179
        %2196 = vmatprep.subr.mxu0 0.0
        %2197 = vmatpush1.msra.mxu0 %v2180
        %2198 = vmatprep.subr.mxu0 0.0
        %2199 = vmatpush1.msra.mxu0 %v2181
        %2200 = vmatprep.subr.mxu0 0.0
        %2201 = vmatpush1.msra.mxu0 %v2182
        %2202 = vmatprep.subr.mxu0 0.0
        %2203 = vmatpush1.msra.mxu0 %v2183
        %2204 = vmatprep.subr.mxu0 0.0
        %2205 = vmatpush1.msra.mxu0 0.0
        %2206 = vmatprep.subr.mxu0 0.0
        %2207 = vmatpush1.msra.mxu0 0.0
        %2208 = vmatprep.subr.mxu0 0.0
        %2209 = vmatpush1.msra.mxu0 0.0
        %2210 = vmatprep.subr.mxu0 0.0
        %2211 = vmatpush1.msra.mxu0 0.0
        %2212 = vmatprep.subr.mxu0 0.0
        %2213 = vmatpush1.msra.mxu0 0.0
        %2214 = vmatprep.subr.mxu0 0.0
        %2215 = vmatpush1.msra.mxu0 0.0
        %2216 = vmatprep.subr.mxu0 0.0
        %2217 = vmatpush1.msra.mxu0 0.0
        %2218 = vmatprep.subr.mxu0 0.0
        %2219 = vmatpush1.msra.mxu0 0.0
        %2220 = vmatprep.subr.mxu0 0.0
        %2221 = vmatpush1.msra.mxu0 0.0
        %2222 = vmatprep.subr.mxu0 0.0
        %2223 = vmatpush1.msra.mxu0 0.0
        %2224 = vmatprep.subr.mxu0 0.0
        %2225 = vmatpush1.msra.mxu0 0.0
        %2226 = vmatprep.subr.mxu0 0.0
        %2227 = vmatpush1.msra.mxu0 0.0
        %2228 = vmatprep.subr.mxu0 0.0
        %2229 = vmatpush1.msra.mxu0 0.0
        %2230 = vmatprep.subr.mxu0 0.0
        %2231 = vmatpush1.msra.mxu0 0.0
        %2232 = vmatprep.subr.mxu0 0.0
        %2233 = vmatpush1.msra.mxu0 0.0
        %2234 = vmatprep.subr.mxu0 0.0
        %2235 = vmatpush1.msra.mxu0 0.0
        %2236 = vmatprep.subr.mxu0 0.0
        %2237 = vmatpush1.msra.mxu0 0.0
        %2238 = vmatprep.subr.mxu0 0.0
        %2239 = vmatpush1.msra.mxu0 0.0
        %2240 = vmatprep.subr.mxu0 0.0
        %2241 = vmatpush1.msra.mxu0 0.0
        %2242 = vmatprep.subr.mxu0 0.0
        %2243 = vmatpush1.msra.mxu0 0.0
        %2244 = vmatprep.subr.mxu0 0.0
        %2245 = vmatpush1.msra.mxu0 0.0
        %2246 = vmatprep.subr.mxu0 0.0
        %2247 = vmatpush1.msra.mxu0 0.0
        %2248 = vmatprep.subr.mxu0 0.0
        %2249 = vmatpush1.msra.mxu0 0.0
        %2250 = vmatprep.subr.mxu0 0.0
        %2251 = vmatpush1.msra.mxu0 0.0
        %2252 = vmatprep.mubr.f32.mxu0 0.0
        %2253 = vmatmul.mubr.f32.gmra.mrb[0].mxu0 %v2186
        %v2254 = vpop.f32.mrb[0].mxu0
        %v2255 = vadd.f32 0.0, %v2254
        %v2256 = vpop.f32.mrb[0].mxu0
        %2257 = vdwg.mxu0
        %v2259 = vsel %vm2184, %v2166, 0
        %2261 = vmatprep.subr.mxu0 0.0
        %2262 = vmatpush1.msra.mxu0 %v2167
        %2263 = vmatprep.subr.mxu0 0.0
        %2264 = vmatpush1.msra.mxu0 %v2168
        %2265 = vmatprep.subr.mxu0 0.0
        %2266 = vmatpush1.msra.mxu0 %v2169
        %2267 = vmatprep.subr.mxu0 0.0
        %2268 = vmatpush1.msra.mxu0 %v2170
        %2269 = vmatprep.subr.mxu0 0.0
        %2270 = vmatpush1.msra.mxu0 %v2171
        %2271 = vmatprep.subr.mxu0 0.0
        %2272 = vmatpush1.msra.mxu0 %v2172
        %2273 = vmatprep.subr.mxu0 0.0
        %2274 = vmatpush1.msra.mxu0 %v2173
        %2275 = vmatprep.subr.mxu0 0.0
        %2276 = vmatpush1.msra.mxu0 %v2174
        %2277 = vmatprep.subr.mxu0 0.0
        %2278 = vmatpush1.msra.mxu0 0.0
        %2279 = vmatprep.subr.mxu0 0.0
        %2280 = vmatpush1.msra.mxu0 0.0
        %2281 = vmatprep.subr.mxu0 0.0
        %2282 = vmatpush1.msra.mxu0 0.0
        %2283 = vmatprep.subr.mxu0 0.0
        %2284 = vmatpush1.msra.mxu0 0.0
        %2285 = vmatprep.subr.mxu0 0.0
        %2286 = vmatpush1.msra.mxu0 0.0
        %2287 = vmatprep.subr.mxu0 0.0
        %2288 = vmatpush1.msra.mxu0 0.0
        %2289 = vmatprep.subr.mxu0 0.0
        %2290 = vmatpush1.msra.mxu0 0.0
        %2291 = vmatprep.subr.mxu0 0.0
        %2292 = vmatpush1.msra.mxu0 0.0
        %2293 = vmatprep.subr.mxu0 0.0
        %2294 = vmatpush1.msra.mxu0 0.0
        %2295 = vmatprep.subr.mxu0 0.0
        %2296 = vmatpush1.msra.mxu0 0.0
        %2297 = vmatprep.subr.mxu0 0.0
        %2298 = vmatpush1.msra.mxu0 0.0
        %2299 = vmatprep.subr.mxu0 0.0
        %2300 = vmatpush1.msra.mxu0 0.0
        %2301 = vmatprep.subr.mxu0 0.0
        %2302 = vmatpush1.msra.mxu0 0.0
        %2303 = vmatprep.subr.mxu0 0.0
        %2304 = vmatpush1.msra.mxu0 0.0
        %2305 = vmatprep.subr.mxu0 0.0
        %2306 = vmatpush1.msra.mxu0 0.0
        %2307 = vmatprep.subr.mxu0 0.0
        %2308 = vmatpush1.msra.mxu0 0.0
        %2309 = vmatprep.subr.mxu0 0.0
        %2310 = vmatpush1.msra.mxu0 0.0
        %2311 = vmatprep.subr.mxu0 0.0
        %2312 = vmatpush1.msra.mxu0 0.0
        %2313 = vmatprep.subr.mxu0 0.0
        %2314 = vmatpush1.msra.mxu0 0.0
        %2315 = vmatprep.subr.mxu0 0.0
        %2316 = vmatpush1.msra.mxu0 0.0
        %2317 = vmatprep.subr.mxu0 0.0
        %2318 = vmatpush1.msra.mxu0 0.0
        %2319 = vmatprep.subr.mxu0 0.0
        %2320 = vmatpush1.msra.mxu0 0.0
        %2321 = vmatprep.subr.mxu0 0.0
        %2322 = vmatpush1.msra.mxu0 0.0
        %2323 = vmatprep.subr.mxu0 0.0
        %2324 = vmatpush1.msra.mxu0 0.0
        %2325 = vmatprep.mubr.f32.mxu0 0.0
        %2326 = vmatmul.mubr.f32.gmra.mrb[0].mxu0 %v2259
        %v2327 = vpop.f32.mrb[0].mxu0
        %v2328 = vadd.f32 %v2255, %v2327
        %v2329 = vpop.f32.mrb[0].mxu0
        %2330 = vdwg.mxu0
        %v2331 = vld [vmem:[%s13] sm:$0x1]
        %v2332 = vadd.f32 %v2328, %v2331
        %v2333 = vmax.f32 %v2332, 0.0
        %v2334 = vld [vmem:[%s14] sm:$0xff]
        %v2335 = vld [vmem:[%s14 + $0x8] sm:$0xff]
        %v2336 = vld [vmem:[%s720] sm:$0x1]
        %v2337 = vld [vmem:[%s15] sm:$0xff]
        %v2338 = vld [vmem:[%s15 + $0x8] sm:$0xff]
        %vm2339 = vcmask 130048
        %v2341 = vsel %vm2339, %v2336, 0
        %2343 = vmatprep.subr.mxu0 0.0
        %2344 = vmatpush1.msra.mxu0 %v2337
        %2345 = vmatprep.subr.mxu0 0.0
        %2346 = vmatpush1.msra.mxu0 %v2338
        %2347 = vmatprep.subr.mxu0 0.0
        %2348 = vmatpush1.msra.mxu0 0.0
        %2349 = vmatprep.subr.mxu0 0.0
        %2350 = vmatpush1.msra.mxu0 0.0
        %2351 = vmatprep.subr.mxu0 0.0
        %2352 = vmatpush1.msra.mxu0 0.0
        %2353 = vmatprep.subr.mxu0 0.0
        %2354 = vmatpush1.msra.mxu0 0.0
        %2355 = vmatprep.subr.mxu0 0.0
        %2356 = vmatpush1.msra.mxu0 0.0
        %2357 = vmatprep.subr.mxu0 0.0
        %2358 = vmatpush1.msra.mxu0 0.0
        %2359 = vmatprep.subr.mxu0 0.0
        %2360 = vmatpush1.msra.mxu0 0.0
        %2361 = vmatprep.subr.mxu0 0.0
        %2362 = vmatpush1.msra.mxu0 0.0
        %2363 = vmatprep.subr.mxu0 0.0
        %2364 = vmatpush1.msra.mxu0 0.0
        %2365 = vmatprep.subr.mxu0 0.0
        %2366 = vmatpush1.msra.mxu0 0.0
        %2367 = vmatprep.subr.mxu0 0.0
        %2368 = vmatpush1.msra.mxu0 0.0
        %2369 = vmatprep.subr.mxu0 0.0
        %2370 = vmatpush1.msra.mxu0 0.0
        %2371 = vmatprep.subr.mxu0 0.0
        %2372 = vmatpush1.msra.mxu0 0.0
        %2373 = vmatprep.subr.mxu0 0.0
        %2374 = vmatpush1.msra.mxu0 0.0
        %2375 = vmatprep.subr.mxu0 0.0
        %2376 = vmatpush1.msra.mxu0 0.0
        %2377 = vmatprep.subr.mxu0 0.0
        %2378 = vmatpush1.msra.mxu0 0.0
        %2379 = vmatprep.subr.mxu0 0.0
        %2380 = vmatpush1.msra.mxu0 0.0
        %2381 = vmatprep.subr.mxu0 0.0
        %2382 = vmatpush1.msra.mxu0 0.0
        %2383 = vmatprep.subr.mxu0 0.0
        %2384 = vmatpush1.msra.mxu0 0.0
        %2385 = vmatprep.subr.mxu0 0.0
        %2386 = vmatpush1.msra.mxu0 0.0
        %2387 = vmatprep.subr.mxu0 0.0
        %2388 = vmatpush1.msra.mxu0 0.0
        %2389 = vmatprep.subr.mxu0 0.0
        %2390 = vmatpush1.msra.mxu0 0.0
        %2391 = vmatprep.subr.mxu0 0.0
        %2392 = vmatpush1.msra.mxu0 0.0
        %2393 = vmatprep.subr.mxu0 0.0
        %2394 = vmatpush1.msra.mxu0 0.0
        %2395 = vmatprep.subr.mxu0 0.0
        %2396 = vmatpush1.msra.mxu0 0.0
        %2397 = vmatprep.subr.mxu0 0.0
        %2398 = vmatpush1.msra.mxu0 0.0
        %2399 = vmatprep.subr.mxu0 0.0
        %2400 = vmatpush1.msra.mxu0 0.0
        %2401 = vmatprep.subr.mxu0 0.0
        %2402 = vmatpush1.msra.mxu0 0.0
        %2403 = vmatprep.subr.mxu0 0.0
        %2404 = vmatpush1.msra.mxu0 0.0
        %2405 = vmatprep.subr.mxu0 0.0
        %2406 = vmatpush1.msra.mxu0 0.0
        %2407 = vmatprep.mubr.f32.mxu0 0.0
        %2408 = vmatmul.mubr.f32.gmra.mrb[0].mxu0 %v2341
        %v2409 = vpop.f32.mrb[0].mxu0
        %v2410 = vadd.f32 0.0, %v2409
        %v2411 = vpop.f32.mrb[0].mxu0
        %2412 = vdwg.mxu0
        %v2414 = vsel %vm2339, %v2333, 0
        %2416 = vmatprep.subr.mxu0 0.0
        %2417 = vmatpush1.msra.mxu0 %v2334
        %2418 = vmatprep.subr.mxu0 0.0
        %2419 = vmatpush1.msra.mxu0 %v2335
        %2420 = vmatprep.subr.mxu0 0.0
        %2421 = vmatpush1.msra.mxu0 0.0
        %2422 = vmatprep.subr.mxu0 0.0
        %2423 = vmatpush1.msra.mxu0 0.0
        %2424 = vmatprep.subr.mxu0 0.0
        %2425 = vmatpush1.msra.mxu0 0.0
        %2426 = vmatprep.subr.mxu0 0.0
        %2427 = vmatpush1.msra.mxu0 0.0
        %2428 = vmatprep.subr.mxu0 0.0
        %2429 = vmatpush1.msra.mxu0 0.0
        %2430 = vmatprep.subr.mxu0 0.0
        %2431 = vmatpush1.msra.mxu0 0.0
        %2432 = vmatprep.subr.mxu0 0.0
        %2433 = vmatpush1.msra.mxu0 0.0
        %2434 = vmatprep.subr.mxu0 0.0
        %2435 = vmatpush1.msra.mxu0 0.0
        %2436 = vmatprep.subr.mxu0 0.0
        %2437 = vmatpush1.msra.mxu0 0.0
        %2438 = vmatprep.subr.mxu0 0.0
        %2439 = vmatpush1.msra.mxu0 0.0
        %2440 = vmatprep.subr.mxu0 0.0
        %2441 = vmatpush1.msra.mxu0 0.0
        %2442 = vmatprep.subr.mxu0 0.0
        %2443 = vmatpush1.msra.mxu0 0.0
        %2444 = vmatprep.subr.mxu0 0.0
        %2445 = vmatpush1.msra.mxu0 0.0
        %2446 = vmatprep.subr.mxu0 0.0
        %2447 = vmatpush1.msra.mxu0 0.0
        %2448 = vmatprep.subr.mxu0 0.0
        %2449 = vmatpush1.msra.mxu0 0.0
        %2450 = vmatprep.subr.mxu0 0.0
        %2451 = vmatpush1.msra.mxu0 0.0
        %2452 = vmatprep.subr.mxu0 0.0
        %2453 = vmatpush1.msra.mxu0 0.0
        %2454 = vmatprep.subr.mxu0 0.0
        %2455 = vmatpush1.msra.mxu0 0.0
        %2456 = vmatprep.subr.mxu0 0.0
        %2457 = vmatpush1.msra.mxu0 0.0
        %2458 = vmatprep.subr.mxu0 0.0
        %2459 = vmatpush1.msra.mxu0 0.0
        %2460 = vmatprep.subr.mxu0 0.0
        %2461 = vmatpush1.msra.mxu0 0.0
        %2462 = vmatprep.subr.mxu0 0.0
        %2463 = vmatpush1.msra.mxu0 0.0
        %2464 = vmatprep.subr.mxu0 0.0
        %2465 = vmatpush1.msra.mxu0 0.0
        %2466 = vmatprep.subr.mxu0 0.0
        %2467 = vmatpush1.msra.mxu0 0.0
        %2468 = vmatprep.subr.mxu0 0.0
        %2469 = vmatpush1.msra.mxu0 0.0
        %2470 = vmatprep.subr.mxu0 0.0
        %2471 = vmatpush1.msra.mxu0 0.0
        %2472 = vmatprep.subr.mxu0 0.0
        %2473 = vmatpush1.msra.mxu0 0.0
        %2474 = vmatprep.subr.mxu0 0.0
        %2475 = vmatpush1.msra.mxu0 0.0
        %2476 = vmatprep.subr.mxu0 0.0
        %2477 = vmatpush1.msra.mxu0 0.0
        %2478 = vmatprep.subr.mxu0 0.0
        %2479 = vmatpush1.msra.mxu0 0.0
        %2480 = vmatprep.mubr.f32.mxu0 0.0
        %2481 = vmatmul.mubr.f32.gmra.mrb[0].mxu0 %v2414
        %v2482 = vpop.f32.mrb[0].mxu0
        %v2483 = vadd.f32 %v2410, %v2482
        %v2484 = vpop.f32.mrb[0].mxu0
        %2485 = vdwg.mxu0
        %v2486 = vld [vmem:[%s16] sm:$0x1]
        %v2487 = vadd.f32 %v2483, %v2486
        %v2488 = vmax.f32 %v2487, 0.0
        %v2489 = vld [vmem:[%s17] sm:$0xff]
        %v2490 = vld [vmem:[%s18] sm:$0xf]
        %vm2491 = vcmask 31744
        %v2493 = vsel %vm2491, %v2488, 0
        %vm2495 = vcmask 1043456
        %v2497 = vsel %vm2495, %v2490, 0
        %2499 = vmatprep.subr.mxu0 0.0
        %2500 = vmatpush1.msra.mxu0 %v2497
        %2501 = vmatprep.subr.mxu0 0.0
        %2502 = vmatpush1.msra.mxu0 0.0
        %2503 = vmatprep.subr.mxu0 0.0
        %2504 = vmatpush1.msra.mxu0 0.0
        %2505 = vmatprep.subr.mxu0 0.0
        %2506 = vmatpush1.msra.mxu0 0.0
        %2507 = vmatprep.subr.mxu0 0.0
        %2508 = vmatpush1.msra.mxu0 0.0
        %2509 = vmatprep.subr.mxu0 0.0
        %2510 = vmatpush1.msra.mxu0 0.0
        %2511 = vmatprep.subr.mxu0 0.0
        %2512 = vmatpush1.msra.mxu0 0.0
        %2513 = vmatprep.subr.mxu0 0.0
        %2514 = vmatpush1.msra.mxu0 0.0
        %2515 = vmatprep.subr.mxu0 0.0
        %2516 = vmatpush1.msra.mxu0 0.0
        %2517 = vmatprep.subr.mxu0 0.0
        %2518 = vmatpush1.msra.mxu0 0.0
        %2519 = vmatprep.subr.mxu0 0.0
        %2520 = vmatpush1.msra.mxu0 0.0
        %2521 = vmatprep.subr.mxu0 0.0
        %2522 = vmatpush1.msra.mxu0 0.0
        %2523 = vmatprep.subr.mxu0 0.0
        %2524 = vmatpush1.msra.mxu0 0.0
        %2525 = vmatprep.subr.mxu0 0.0
        %2526 = vmatpush1.msra.mxu0 0.0
        %2527 = vmatprep.subr.mxu0 0.0
        %2528 = vmatpush1.msra.mxu0 0.0
        %2529 = vmatprep.subr.mxu0 0.0
        %2530 = vmatpush1.msra.mxu0 0.0
        %2531 = vmatprep.subr.mxu0 0.0
        %2532 = vmatpush1.msra.mxu0 0.0
        %2533 = vmatprep.subr.mxu0 0.0
        %2534 = vmatpush1.msra.mxu0 0.0
        %2535 = vmatprep.subr.mxu0 0.0
        %2536 = vmatpush1.msra.mxu0 0.0
        %2537 = vmatprep.subr.mxu0 0.0
        %2538 = vmatpush1.msra.mxu0 0.0
        %2539 = vmatprep.subr.mxu0 0.0
        %2540 = vmatpush1.msra.mxu0 0.0
        %2541 = vmatprep.subr.mxu0 0.0
        %2542 = vmatpush1.msra.mxu0 0.0
        %2543 = vmatprep.subr.mxu0 0.0
        %2544 = vmatpush1.msra.mxu0 0.0
        %2545 = vmatprep.subr.mxu0 0.0
        %2546 = vmatpush1.msra.mxu0 0.0
        %2547 = vmatprep.subr.mxu0 0.0
        %2548 = vmatpush1.msra.mxu0 0.0
        %2549 = vmatprep.subr.mxu0 0.0
        %2550 = vmatpush1.msra.mxu0 0.0
        %2551 = vmatprep.subr.mxu0 0.0
        %2552 = vmatpush1.msra.mxu0 0.0
        %2553 = vmatprep.subr.mxu0 0.0
        %2554 = vmatpush1.msra.mxu0 0.0
        %2555 = vmatprep.subr.mxu0 0.0
        %2556 = vmatpush1.msra.mxu0 0.0
        %2557 = vmatprep.subr.mxu0 0.0
        %2558 = vmatpush1.msra.mxu0 0.0
        %2559 = vmatprep.subr.mxu0 0.0
        %2560 = vmatpush1.msra.mxu0 0.0
        %2561 = vmatprep.subr.mxu0 0.0
        %2562 = vmatpush1.msra.mxu0 0.0
        %2563 = vmatprep.mubr.f32.mxu0 0.0
        %2564 = vmatmul.mubr.f32.gmra.mrb[0].mxu0 %v2493
        %v2565 = vpop.f32.mrb[0].mxu0
        %v2566 = vadd.f32 0.0, %v2565
        %v2567 = vpop.f32.mrb[0].mxu0
        %2568 = vdwg.mxu0
        %vm2569 = vcmask 64512
        %v2571 = vsel %vm2569, %v2048, 0
        %2573 = vmatprep.subr.mxu0 0.0
        %2574 = vmatpush1.msra.mxu0 %v2489
        %2575 = vmatprep.subr.mxu0 0.0
        %2576 = vmatpush1.msra.mxu0 0.0
        %2577 = vmatprep.subr.mxu0 0.0
        %2578 = vmatpush1.msra.mxu0 0.0
        %2579 = vmatprep.subr.mxu0 0.0
        %2580 = vmatpush1.msra.mxu0 0.0
        %2581 = vmatprep.subr.mxu0 0.0
        %2582 = vmatpush1.msra.mxu0 0.0
        %2583 = vmatprep.subr.mxu0 0.0
        %2584 = vmatpush1.msra.mxu0 0.0
        %2585 = vmatprep.subr.mxu0 0.0
        %2586 = vmatpush1.msra.mxu0 0.0
        %2587 = vmatprep.subr.mxu0 0.0
        %2588 = vmatpush1.msra.mxu0 0.0
        %2589 = vmatprep.subr.mxu0 0.0
        %2590 = vmatpush1.msra.mxu0 0.0
        %2591 = vmatprep.subr.mxu0 0.0
        %2592 = vmatpush1.msra.mxu0 0.0
        %2593 = vmatprep.subr.mxu0 0.0
        %2594 = vmatpush1.msra.mxu0 0.0
        %2595 = vmatprep.subr.mxu0 0.0
        %2596 = vmatpush1.msra.mxu0 0.0
        %2597 = vmatprep.subr.mxu0 0.0
        %2598 = vmatpush1.msra.mxu0 0.0
        %2599 = vmatprep.subr.mxu0 0.0
        %2600 = vmatpush1.msra.mxu0 0.0
        %2601 = vmatprep.subr.mxu0 0.0
        %2602 = vmatpush1.msra.mxu0 0.0
        %2603 = vmatprep.subr.mxu0 0.0
        %2604 = vmatpush1.msra.mxu0 0.0
        %2605 = vmatprep.subr.mxu0 0.0
        %2606 = vmatpush1.msra.mxu0 0.0
        %2607 = vmatprep.subr.mxu0 0.0
        %2608 = vmatpush1.msra.mxu0 0.0
        %2609 = vmatprep.subr.mxu0 0.0
        %2610 = vmatpush1.msra.mxu0 0.0
        %2611 = vmatprep.subr.mxu0 0.0
        %2612 = vmatpush1.msra.mxu0 0.0
        %2613 = vmatprep.subr.mxu0 0.0
        %2614 = vmatpush1.msra.mxu0 0.0
        %2615 = vmatprep.subr.mxu0 0.0
        %2616 = vmatpush1.msra.mxu0 0.0
        %2617 = vmatprep.subr.mxu0 0.0
        %2618 = vmatpush1.msra.mxu0 0.0
        %2619 = vmatprep.subr.mxu0 0.0
        %2620 = vmatpush1.msra.mxu0 0.0
        %2621 = vmatprep.subr.mxu0 0.0
        %2622 = vmatpush1.msra.mxu0 0.0
        %2623 = vmatprep.subr.mxu0 0.0
        %2624 = vmatpush1.msra.mxu0 0.0
        %2625 = vmatprep.subr.mxu0 0.0
        %2626 = vmatpush1.msra.mxu0 0.0
        %2627 = vmatprep.subr.mxu0 0.0
        %2628 = vmatpush1.msra.mxu0 0.0
        %2629 = vmatprep.subr.mxu0 0.0
        %2630 = vmatpush1.msra.mxu0 0.0
        %2631 = vmatprep.subr.mxu0 0.0
        %2632 = vmatpush1.msra.mxu0 0.0
        %2633 = vmatprep.subr.mxu0 0.0
        %2634 = vmatpush1.msra.mxu0 0.0
        %2635 = vmatprep.subr.mxu0 0.0
        %2636 = vmatpush1.msra.mxu0 0.0
        %2637 = vmatprep.mubr.f32.mxu0 0.0
        %2638 = vmatmul.mubr.f32.gmra.mrb[0].mxu0 %v2571
        %v2639 = vpop.f32.mrb[0].mxu0
        %v2640 = vadd.f32 %v2566, %v2639
        %v2641 = vpop.f32.mrb[0].mxu0
        %2642 = vdwg.mxu0
        %v2643 = vld [vmem:[%s717] sm:$0x1]
        %v2644 = vld [vmem:[%s19] sm:$0xf]
        %v2646 = vsel %vm2491, %v2643, 0
        %v2649 = vsel %vm2495, %v2644, 0
        %2651 = vmatprep.subr.mxu0 0.0
        %2652 = vmatpush1.msra.mxu0 %v2649
        %2653 = vmatprep.subr.mxu0 0.0
        %2654 = vmatpush1.msra.mxu0 0.0
        %2655 = vmatprep.subr.mxu0 0.0
        %2656 = vmatpush1.msra.mxu0 0.0
        %2657 = vmatprep.subr.mxu0 0.0
        %2658 = vmatpush1.msra.mxu0 0.0
        %2659 = vmatprep.subr.mxu0 0.0
        %2660 = vmatpush1.msra.mxu0 0.0
        %2661 = vmatprep.subr.mxu0 0.0
        %2662 = vmatpush1.msra.mxu0 0.0
        %2663 = vmatprep.subr.mxu0 0.0
        %2664 = vmatpush1.msra.mxu0 0.0
        %2665 = vmatprep.subr.mxu0 0.0
        %2666 = vmatpush1.msra.mxu0 0.0
        %2667 = vmatprep.subr.mxu0 0.0
        %2668 = vmatpush1.msra.mxu0 0.0
        %2669 = vmatprep.subr.mxu0 0.0
        %2670 = vmatpush1.msra.mxu0 0.0
        %2671 = vmatprep.subr.mxu0 0.0
        %2672 = vmatpush1.msra.mxu0 0.0
        %2673 = vmatprep.subr.mxu0 0.0
        %2674 = vmatpush1.msra.mxu0 0.0
        %2675 = vmatprep.subr.mxu0 0.0
        %2676 = vmatpush1.msra.mxu0 0.0
        %2677 = vmatprep.subr.mxu0 0.0
        %2678 = vmatpush1.msra.mxu0 0.0
        %2679 = vmatprep.subr.mxu0 0.0
        %2680 = vmatpush1.msra.mxu0 0.0
        %2681 = vmatprep.subr.mxu0 0.0
        %2682 = vmatpush1.msra.mxu0 0.0
        %2683 = vmatprep.subr.mxu0 0.0
        %2684 = vmatpush1.msra.mxu0 0.0
        %2685 = vmatprep.subr.mxu0 0.0
        %2686 = vmatpush1.msra.mxu0 0.0
        %2687 = vmatprep.subr.mxu0 0.0
        %2688 = vmatpush1.msra.mxu0 0.0
        %2689 = vmatprep.subr.mxu0 0.0
        %2690 = vmatpush1.msra.mxu0 0.0
        %2691 = vmatprep.subr.mxu0 0.0
        %2692 = vmatpush1.msra.mxu0 0.0
        %2693 = vmatprep.subr.mxu0 0.0
        %2694 = vmatpush1.msra.mxu0 0.0
        %2695 = vmatprep.subr.mxu0 0.0
        %2696 = vmatpush1.msra.mxu0 0.0
        %2697 = vmatprep.subr.mxu0 0.0
        %2698 = vmatpush1.msra.mxu0 0.0
        %2699 = vmatprep.subr.mxu0 0.0
        %2700 = vmatpush1.msra.mxu0 0.0
        %2701 = vmatprep.subr.mxu0 0.0
        %2702 = vmatpush1.msra.mxu0 0.0
        %2703 = vmatprep.subr.mxu0 0.0
        %2704 = vmatpush1.msra.mxu0 0.0
        %2705 = vmatprep.subr.mxu0 0.0
        %2706 = vmatpush1.msra.mxu0 0.0
        %2707 = vmatprep.subr.mxu0 0.0
        %2708 = vmatpush1.msra.mxu0 0.0
        %2709 = vmatprep.subr.mxu0 0.0
        %2710 = vmatpush1.msra.mxu0 0.0
        %2711 = vmatprep.subr.mxu0 0.0
        %2712 = vmatpush1.msra.mxu0 0.0
        %2713 = vmatprep.subr.mxu0 0.0
        %2714 = vmatpush1.msra.mxu0 0.0
        %2715 = vmatprep.mubr.f32.mxu0 0.0
        %2716 = vmatmul.mubr.f32.gmra.mrb[0].mxu0 %v2646
        %v2717 = vpop.f32.mrb[0].mxu0
        %v2718 = vadd.f32 0.0, %v2717
        %v2719 = vpop.f32.mrb[0].mxu0
        %2720 = vdwg.mxu0
        %v2721 = vadd.f32 %v2640, %v2718
        %v2722 = vld [vmem:[%s20] sm:$0x1]
        %v2723 = vadd.f32 %v2721, %v2722
        %vm2724 = vcmask 8192
        %2725 = vst.msk [vmem:[%s709] sm:$0x1] %vm2724, %v2723
        %s2726 = sand.u32 %s510, 1
        %s2727 = scalar_lea.sflag [#allocation5], %s2726
        %s2728 = sand.u32 %s510, 1
        %s2729 = scalar_lea.vmem [#allocation6], %s2728
        // Predicated region
        $region109: #{tpu_custom_call.1} parent=103 // pred_check
          %p2730 = pneg %p520
        $region110: #{tpu_custom_call.1} parent=103 // pred_check_branch
          %2732 = sbr.rel (%p2730) target = $region112
        $region111: #{tpu_custom_call.1} parent=103 // pred_region
          %s2734 = ssub.s32 16, 16
          %2735 = vsyncadd %s2727, %s2734
          %s2736 = smul.addr %s36, 16
          %s2737 = scalar_lea.hbm %s21, %s2736
          %s2739 = sshll.u32 %s2729, 4
          %s2740 = int_to_ptr.vmem [resolvable:$true] %s2739
          %2742 = dma.vmem_to_hbm [thread:$0]  %s2740, 16, %s2737, %s2727
        $region112: #{tpu_custom_call.1} parent=103 // pred_fallthru
          _
      $region104: #{tpu_custom_call.1} parent=5 // pred_fallthru
        _
      %p2743 = scmp.le.s32.totalorder 2, %s31
      // Predicated region
      $region113: #{tpu_custom_call.1} parent=5 // pred_check
        %p2744 = pneg %p2743
      $region114: #{tpu_custom_call.1} parent=5 // pred_check_branch
        %2746 = sbr.rel (%p2744) target = $region116
      $region115: #{tpu_custom_call.1} parent=5 // pred_region
        %s2747 = ssub.s32 %s31, 2
        // Predicated region
        $region117: #{tpu_custom_call.1} parent=115 // pred_check
          %p2748 = pneg %p526
        $region118: #{tpu_custom_call.1} parent=115 // pred_check_branch
          %2750 = sbr.rel (%p2748) target = $region120
        $region119: #{tpu_custom_call.1} parent=115 // pred_region
          %s2751 = sand.u32 %s511, 1
          %s2752 = scalar_lea.sflag [#allocation5], %s2751
          %s2753 = sand.u32 %s511, 1
          %s2754 = scalar_lea.vmem [#allocation6], %s2753
          %2755 = dma.done %s2752, 16
        $region120: #{tpu_custom_call.1} parent=115 // pred_fallthru
          _
      $region116: #{tpu_custom_call.1} parent=5 // pred_fallthru
        _
    $region6: #{tpu_custom_call.1} parent=1 // loop_footer
      %s35 = sadd.s32 1, %s31
    $region7: #{tpu_custom_call.1} parent=1 // loop_footer_branch
      %30 = sbr.rel target = $region3
    $region8: #{tpu_custom_call.1} parent=1 // loop_exit
      _
    %2756 = vsyncpa [#allocation4], 1
    %s2757 = scalar_lea.sflag [#allocation4], 1
    %2758 = vsyncpa %s2757, 1
    %2759 = vsyncpa [#allocation5], 1
    %s2760 = scalar_lea.sflag [#allocation5], 1
    %2761 = vsyncpa %s2760, 1

</llo_original>
